<compile_context>
chip_gen: v7x
topology: tpu7x:2x2x1
jax: 0.10.0
libtpu: 0.0.40
codegen_flags: <defaults>
</compile_context>

<pallas_src>
import math
import functools

import jax
import jax.numpy as jnp
from jax.experimental import pallas as pl
from jax.experimental.pallas import tpu as pltpu


NEG_BIG = -1e9  # finite additive key mask (avoids NaN rows for fully-masked keys)


def _layernorm_f32(x, gamma, beta, eps):
    mu = jnp.mean(x, axis=-1, keepdims=True)
    var = jnp.mean(jnp.square(x - mu), axis=-1, keepdims=True)
    return (x - mu) * jax.lax.rsqrt(var + eps) * gamma + beta


# ----------------------------- Pallas kernel --------------------------------

def layout_encoder_kernel(h_ref, rel_ref,
                          wqkv_ref, wo_ref, wi_ref, w2_ref,
                          bqkv_ref, vd_ref, vi_ref,
                          out_ref, hid_ref, *, num_heads, eps):
    """One (batch b, layer l) grid step.

    hid_ref is an f32 VMEM scratch holding the residual stream for the current
    batch block: initialized from h_ref at l == 0, rewritten each layer, and
    cast/stored to out_ref only at l == L-1.  All weight refs hold the FULL
    L-stack (loaded once per call); layer l is selected by dynamic indexing.
    """
    l = pl.program_id(1)
    n_layers = pl.num_programs(1)

    @pl.when(l == 0)
    def _():
        hid_ref[...] = h_ref[...]

    h32 = hid_ref[0]                       # (S, D) f32 residual stream
    S, D = h32.shape
    dh = D // num_heads

    h_bf = h32.astype(jnp.bfloat16)

    # ---------------- attention ----------------
    # Fused QKV projection: one MXU matmul, K=D, N=3D (1/sqrt(dh) folded into Wq/bq).
    qkv = jnp.dot(h_bf, wqkv_ref[l], preferred_element_type=jnp.float32)
    qkv = qkv + bqkv_ref[l]                # (S, 3D) f32
    qkv_bf = qkv.astype(jnp.bfloat16)

    def heads(base):                       # lane-aligned 128-wide slices -> (Hn, S, dh)
        return jnp.stack(
            [qkv_bf[:, base + h * dh: base + (h + 1) * dh] for h in range(num_heads)],
            axis=0)

    q = heads(0)
    k = heads(D)
    v = heads(2 * D)

    s = jnp.einsum('hqd,hkd->hqk', q, k,
                   preferred_element_type=jnp.float32)            # (Hn, S, S) f32
    # rel already contains the additive -1e9 key-mask bias (folded in the wrapper), f32.
    s = s + rel_ref[0]

    m = jnp.max(s, axis=-1, keepdims=True)
    p = jnp.exp(s - m)
    p = p / jnp.sum(p, axis=-1, keepdims=True)                    # exact softmax (f32)

    ctx = jnp.einsum('hqk,hkd->hqd', p.astype(jnp.bfloat16), v,
                     preferred_element_type=jnp.float32)          # (Hn, S, dh)

    # Lane-concat of heads -> (S, D); head reduction then happens inside the MXU
    # contraction against the original (D, D) out-projection weight.
    ctx2d = jnp.concatenate(
        [ctx[h].astype(jnp.bfloat16) for h in range(num_heads)], axis=-1)

    vd = vd_ref[l]                         # (6, D) f32 packed per-layer vectors
    bo, g1, be1 = vd[0:1], vd[1:2], vd[2:3]
    b2, g2, be2 = vd[3:4], vd[4:5], vd[5:6]

    attn = jnp.dot(ctx2d, wo_ref[l], preferred_element_type=jnp.float32) + bo
    x1 = _layernorm_f32(attn + h32, g1, be1, eps)                 # (S, D) f32

    # ---------------- feed-forward ----------------
    inter = jnp.dot(x1.astype(jnp.bfloat16), wi_ref[l],
                    preferred_element_type=jnp.float32) + vi_ref[l]
    inter = jnp.maximum(inter, 0.0)
    ffn = jnp.dot(inter.astype(jnp.bfloat16), w2_ref[l],
                  preferred_element_type=jnp.float32) + b2
    x2 = _layernorm_f32(ffn + x1, g2, be2, eps)

    hid_ref[0] = x2                        # keep residual stream in f32 scratch

    @pl.when(l == n_layers - 1)
    def _():
        out_ref[0] = x2.astype(out_ref.dtype)


def fused_layout_encoder(hidden_f32, rel_bias_f32, stacked, *, num_heads, eps):
    B, S, D = hidden_f32.shape
    Hn = num_heads
    L = stacked['wqkv'].shape[0]

    weights = [stacked['wqkv'], stacked['wo'], stacked['wi'], stacked['w2'],
               stacked['bqkv'], stacked['vd'], stacked['vi']]

    def resident_spec(arr):
        # Full-stack block with a constant index map -> DMA'd once per call,
        # never re-fetched across the (B, L) grid.
        nd = arr.ndim
        return pl.BlockSpec(tuple(arr.shape), lambda b, l, _nd=nd: (0,) * _nd)

    in_specs = [
        pl.BlockSpec((1, S, D), lambda b, l: (b, 0, 0)),           # hidden (read at l==0)
        pl.BlockSpec((1, Hn, S, S), lambda b, l: (b, 0, 0, 0)),    # rel_2d + mask bias (f32)
    ] + [resident_spec(w) for w in weights]

    out_spec = pl.BlockSpec((1, S, D), lambda b, l: (b, 0, 0))     # written at l==L-1 only

    # VMEM budget: double-buffered streamed blocks + resident weight stacks (also
    # double-buffered by the pipeline) + f32 scratch + headroom for f32 temporaries.
    streamed = (S * D * 4) + (Hn * S * S * 4) + (S * D * 4)        # hidden + rel + out blocks
    resident = sum(int(w.size) * w.dtype.itemsize for w in weights)
    scratch = S * D * 4
    vmem = 2 * (streamed + resident) + scratch + (8 << 20)
    vmem_limit = int(min(max(vmem, 32 << 20), 48 << 20))           # <= 48 MiB (v7x headroom)

    kernel = functools.partial(layout_encoder_kernel, num_heads=num_heads, eps=eps)
    out = pl.pallas_call(
        kernel,
        out_shape=jax.ShapeDtypeStruct((B, S, D), jnp.float32),
        grid_spec=pltpu.PrefetchScalarGridSpec(
            num_scalar_prefetch=0,
            grid=(B, L),
            in_specs=in_specs,
            out_specs=out_spec,
            scratch_shapes=[pltpu.VMEM((1, S, D), jnp.float32)],   # f32 residual stream
        ),
        compiler_params=pltpu.CompilerParams(
            dimension_semantics=("parallel", "arbitrary"),
            vmem_limit_bytes=vmem_limit,
        ),
    )(hidden_f32, rel_bias_f32, *weights)
    return out


# ------------------------------ JAX glue -------------------------------------

def relative_position_bucket(rel, num_buckets=32, max_distance=128):
    # bidirectional=True path of the reference
    num_buckets = num_buckets // 2
    ret = (rel > 0).astype(jnp.int32) * num_buckets
    n = jnp.abs(rel)
    max_exact = num_buckets // 2
    is_small = n < max_exact
    nf = jnp.maximum(n.astype(jnp.float32), 1.0)   # avoid log(0); branch unused when small
    val_if_large = max_exact + (
        jnp.log(nf / max_exact) / math.log(max_distance / max_exact)
        * (num_buckets - max_exact)).astype(jnp.int32)
    val_if_large = jnp.minimum(val_if_large, num_buckets - 1)
    return ret + jnp.where(is_small, n, val_if_large)


def calc_rel_2d_bias(bbox, rel_x_w, rel_y_w, *, num_buckets, max_rel):
    # one_hot + Linear(bias=False) == gather of weight columns.
    x = bbox[:, :, 0]
    y = bbox[:, :, 3]
    rel_x_mat = x[:, None, :] - x[:, :, None]
    rel_y_mat = y[:, None, :] - y[:, :, None]
    bx = relative_position_bucket(rel_x_mat, num_buckets, max_rel)
    by = relative_position_bucket(rel_y_mat, num_buckets, max_rel)
    bias_x = jnp.take(rel_x_w.T, bx, axis=0)        # (B, S, S, Hn)
    bias_y = jnp.take(rel_y_w.T, by, axis=0)
    return jnp.transpose(bias_x + bias_y, (0, 3, 1, 2)).astype(jnp.float32)  # (B,Hn,S,S)


def pack_layer_params(layers, *, num_heads):
    """Stack per-layer weights with a leading L axis (fused QKV, scale folded into Wq/bq)."""
    D = layers[0]['wq'].shape[0]
    I = layers[0]['wi'].shape[1]
    dh = D // num_heads
    scale = 1.0 / math.sqrt(dh)

    wqkv = jnp.stack([jnp.concatenate([lp['wq'] * scale, lp['wk'], lp['wv']], axis=1)
                      for lp in layers]).astype(jnp.bfloat16)                 # (L, D, 3D)
    bqkv = jnp.stack([jnp.concatenate([lp['bq'] * scale, lp['bk'], lp['bv']])[None, :]
                      for lp in layers]).astype(jnp.float32)                  # (L, 1, 3D)
    wo = jnp.stack([lp['wo'] for lp in layers]).astype(jnp.bfloat16)          # (L, D, D)
    wi = jnp.stack([lp['wi'] for lp in layers]).astype(jnp.bfloat16)          # (L, D, I)
    w2 = jnp.stack([lp['w2'] for lp in layers]).astype(jnp.bfloat16)          # (L, I, D)
    vd = jnp.stack([
        jnp.stack([lp['bo'], lp['g1'], lp['be1'], lp['b2'], lp['g2'], lp['be2']])
        for lp in layers]).astype(jnp.float32)                                # (L, 6, D)
    vi = jnp.stack([lp['bi'][None, :] for lp in layers]).astype(jnp.float32)  # (L, 1, I)

    return dict(wqkv=wqkv, wo=wo, wi=wi, w2=w2, bqkv=bqkv, vd=vd, vi=vi)


def layout_encoder_forward(params, hidden_states, attention_mask, bbox, *, config):
    """attention_mask: nonzero == masked key (masked_fill convention), shape (B, S)."""
    Hn = config['num_heads']
    rel = calc_rel_2d_bias(bbox, params['rel_x_w'], params['rel_y_w'],
                           num_buckets=config['buckets'], max_rel=config['max_rel'])
    mask_bias = jnp.where(attention_mask > 0, NEG_BIG, 0.0).astype(jnp.float32)
    rel = (rel + mask_bias[:, None, None, :]).astype(jnp.float32)  # (B, Hn, S, S) f32

    stacked = pack_layer_params(params['layers'], num_heads=Hn)    # one-time host prep
    out = fused_layout_encoder(hidden_states.astype(jnp.float32), rel, stacked,
                               num_heads=Hn, eps=config['eps'])
    return (out,)


# --------------------------- deterministic params ----------------------------

def init_params(key, *, hidden, heads, inter, layers, buckets, std=0.02):
    # 12 random tensors per layer + 2 rel-bias tables (fixes prior StopIteration).
    keys = jax.random.split(key, 2 + layers * 12)
    it = iter(keys)

    def nrm(shape):
        return jax.random.normal(next(it), shape, jnp.float32) * std

    layer_params = []
    for _ in range(layers):
        layer_params.append({
            'wq': nrm((hidden, hidden)), 'bq': nrm((hidden,)),
            'wk': nrm((hidden, hidden)), 'bk': nrm((hidden,)),
            'wv': nrm((hidden, hidden)), 'bv': nrm((hidden,)),
            'wo': nrm((hidden, hidden)), 'bo': nrm((hidden,)),
            'g1': jnp.ones((hidden,), jnp.float32),
            'be1': jnp.zeros((hidden,), jnp.float32),
            'wi': nrm((hidden, inter)), 'bi': nrm((inter,)),
            'w2': nrm((inter, hidden)), 'b2': nrm((hidden,)),
            'g2': jnp.ones((hidden,), jnp.float32),
            'be2': jnp.zeros((hidden,), jnp.float32),
        })
    return {'layers': layer_params,
            'rel_x_w': nrm((heads, buckets)),
            'rel_y_w': nrm((heads, buckets))}


# --------------------------------- main ---------------------------------------

if __name__ == "__main__":
    # Small config; dh = hidden/heads = 128 keeps per-head width lane-aligned
    # (the kernel itself is general in num_heads / dh).
    HIDDEN, HEADS, INTER, LAYERS = 256, 2, 512, 2
    BUCKETS, MAX_REL = 128, 256
    B, S = 2, 128

    key = jax.random.PRNGKey(0)
    kp, khid, kxl, kyt, kw, kh = jax.random.split(key, 6)
    params = init_params(kp, hidden=HIDDEN, heads=HEADS, inter=INTER,
                         layers=LAYERS, buckets=BUCKETS)

    hidden_states = jax.random.normal(khid, (B, S, HIDDEN), jnp.float32) * 0.02

    # bbox = (l, t, r, d); only columns 0 and 3 feed the rel-2d bias.
    xl = jax.random.randint(kxl, (B, S), 0, 400)
    yt = jax.random.randint(kyt, (B, S), 0, 800)
    ww = jax.random.randint(kw, (B, S), 0, 100)
    hh = jax.random.randint(kh, (B, S), 0, 100)
    bbox = jnp.stack([xl, yt, xl + ww, yt + hh], axis=-1).astype(jnp.int32)

    # key mask (masked_fill convention: nonzero == masked); mask tail of batch 1
    valid_len = jnp.array([S, S - 9], jnp.int32)
    attention_mask = (jnp.arange(S)[None, :] >= valid_len[:, None]).astype(jnp.float32)

    cfg = {'num_heads': HEADS, 'eps': 1e-6, 'buckets': BUCKETS, 'max_rel': MAX_REL}
    (out,) = layout_encoder_forward(params, hidden_states, attention_mask, bbox,
                                    config=cfg)
    out = jax.block_until_ready(out)
    assert out.shape == (B, S, HIDDEN) and out.dtype == jnp.float32
    assert bool(jnp.all(jnp.isfinite(out)))
    print("KERNEL_OK")
</pallas_src>

<mosaic_0001>
module attributes {stable_mosaic.version = 11 : i64} {
  func.func @layout_encoder_kernel(%arg0: i32, %arg1: i32, %arg2: memref<1x128x256xf32, #tpu.memory_space<vmem>>, %arg3: memref<1x2x128x128xf32, #tpu.memory_space<vmem>>, %arg4: memref<2x256x768xbf16, #tpu.memory_space<vmem>>, %arg5: memref<2x256x256xbf16, #tpu.memory_space<vmem>>, %arg6: memref<2x256x512xbf16, #tpu.memory_space<vmem>>, %arg7: memref<2x512x256xbf16, #tpu.memory_space<vmem>>, %arg8: memref<2x1x768xf32, #tpu.memory_space<vmem>>, %arg9: memref<2x6x256xf32, #tpu.memory_space<vmem>>, %arg10: memref<2x1x512xf32, #tpu.memory_space<vmem>>, %arg11: memref<1x128x256xf32, #tpu.memory_space<vmem>>, %arg12: memref<1x128x256xf32, #tpu.memory_space<vmem>>) attributes {dimension_semantics = [#tpu.dimension_semantics<parallel>, #tpu.dimension_semantics<arbitrary>], iteration_bounds = array<i64: 2, 2>, scalar_prefetch = 0 : i64, scratch_operands = 1 : i64, tpu.core_type = #tpu.core_type<tc>, window_params = [{transform_indices = @transform_0, window_bounds = array<i64: 1, 128, 256>}, {transform_indices = @transform_1, window_bounds = array<i64: 1, 2, 128, 128>}, {pipeline_mode = #tpu.pipeline_mode<synchronous>, transform_indices = @transform_2, window_bounds = array<i64: 2, 256, 768>}, {pipeline_mode = #tpu.pipeline_mode<synchronous>, transform_indices = @transform_3, window_bounds = array<i64: 2, 256, 256>}, {pipeline_mode = #tpu.pipeline_mode<synchronous>, transform_indices = @transform_4, window_bounds = array<i64: 2, 256, 512>}, {pipeline_mode = #tpu.pipeline_mode<synchronous>, transform_indices = @transform_5, window_bounds = array<i64: 2, 512, 256>}, {pipeline_mode = #tpu.pipeline_mode<synchronous>, transform_indices = @transform_6, window_bounds = array<i64: 2, 1, 768>}, {pipeline_mode = #tpu.pipeline_mode<synchronous>, transform_indices = @transform_7, window_bounds = array<i64: 2, 6, 256>}, {pipeline_mode = #tpu.pipeline_mode<synchronous>, transform_indices = @transform_8, window_bounds = array<i64: 2, 1, 512>}, {transform_indices = @transform_9, window_bounds = array<i64: 1, 128, 256>}]} {
    %c0_i32 = arith.constant 0 : i32
    %0 = arith.cmpi eq, %arg1, %c0_i32 : i32
    %1 = arith.extui %0 : i1 to i32
    %c0_i32_0 = arith.constant 0 : i32
    %2 = arith.cmpi ne, %1, %c0_i32_0 : i32
    scf.if %2 {
      %c0_43 = arith.constant 0 : index
      %c0_44 = arith.constant 0 : index
      %c0_45 = arith.constant 0 : index
      %139 = vector.load %arg2[%c0_43, %c0_44, %c0_45] : memref<1x128x256xf32, #tpu.memory_space<vmem>>, vector<1x128x256xf32>
      %c0_46 = arith.constant 0 : index
      %c0_47 = arith.constant 0 : index
      %c0_48 = arith.constant 0 : index
      %140 = vector.load %arg12[%c0_46, %c0_47, %c0_48] : memref<1x128x256xf32, #tpu.memory_space<vmem>>, vector<1x128x256xf32>
      tpu.vector_store %arg12[%c0_46, %c0_47, %c0_48], %139 {strides = array<i32>} : memref<1x128x256xf32, #tpu.memory_space<vmem>>, vector<1x128x256xf32>,
    } else {
    }
    %c0 = arith.constant 0 : index
    %c0_1 = arith.constant 0 : index
    %c0_2 = arith.constant 0 : index
    %3 = vector.load %arg12[%c0, %c0_1, %c0_2] : memref<1x128x256xf32, #tpu.memory_space<vmem>>, vector<1x128x256xf32>
    %4 = vector.shape_cast %3 : vector<1x128x256xf32> to vector<128x256xf32>
    %5 = arith.truncf %4 : vector<128x256xf32> to vector<128x256xbf16>
    %6 = arith.index_cast %arg1 : i32 to index
    %c0_3 = arith.constant 0 : index
    %c0_4 = arith.constant 0 : index
    %7 = vector.load %arg4[%6, %c0_3, %c0_4] : memref<2x256x768xbf16, #tpu.memory_space<vmem>>, vector<1x256x768xbf16>
    %8 = vector.shape_cast %7 : vector<1x256x768xbf16> to vector<256x768xbf16>
    %cst = arith.constant dense<0.000000e+00> : vector<128x768xf32>
    %9 = tpu.matmul %5, %8, %cst {dimension_numbers = #tpu.dot_dimension_numbers<[1], [0], [0], [1], [0, 0, 1, 1], [], []>} : vector<128x256xbf16>, vector<256x768xbf16>, vector<128x768xf32> -> vector<128x768xf32>
    %10 = arith.index_cast %arg1 : i32 to index
    %c0_5 = arith.constant 0 : index
    %c0_6 = arith.constant 0 : index
    %11 = vector.load %arg8[%10, %c0_5, %c0_6] : memref<2x1x768xf32, #tpu.memory_space<vmem>>, vector<1x1x768xf32>
    %12 = vector.shape_cast %11 : vector<1x1x768xf32> to vector<1x768xf32>
    %13 = vector.broadcast %12 : vector<1x768xf32> to vector<128x768xf32>
    %14 = arith.addf %9, %13 : vector<128x768xf32>
    %15 = arith.truncf %14 : vector<128x768xf32> to vector<128x768xbf16>
    %16 = vector.extract_strided_slice %15 {offsets = [0, 0], sizes = [128, 128], strides = [1, 1]} : vector<128x768xbf16> to vector<128x128xbf16>
    %17 = vector.extract_strided_slice %15 {offsets = [0, 128], sizes = [128, 128], strides = [1, 1]} : vector<128x768xbf16> to vector<128x128xbf16>
    %18 = vector.shape_cast %16 : vector<128x128xbf16> to vector<1x128x128xbf16>
    %19 = vector.shape_cast %17 : vector<128x128xbf16> to vector<1x128x128xbf16>
    %20 = tpu.concatenate %18, %19 in 0 : vector<1x128x128xbf16>, vector<1x128x128xbf16> -> vector<2x128x128xbf16>
    %21 = vector.extract_strided_slice %15 {offsets = [0, 256], sizes = [128, 128], strides = [1, 1]} : vector<128x768xbf16> to vector<128x128xbf16>
    %22 = vector.extract_strided_slice %15 {offsets = [0, 384], sizes = [128, 128], strides = [1, 1]} : vector<128x768xbf16> to vector<128x128xbf16>
    %23 = vector.shape_cast %21 : vector<128x128xbf16> to vector<1x128x128xbf16>
    %24 = vector.shape_cast %22 : vector<128x128xbf16> to vector<1x128x128xbf16>
    %25 = tpu.concatenate %23, %24 in 0 : vector<1x128x128xbf16>, vector<1x128x128xbf16> -> vector<2x128x128xbf16>
    %26 = vector.extract_strided_slice %15 {offsets = [0, 512], sizes = [128, 128], strides = [1, 1]} : vector<128x768xbf16> to vector<128x128xbf16>
    %27 = vector.extract_strided_slice %15 {offsets = [0, 640], sizes = [128, 128], strides = [1, 1]} : vector<128x768xbf16> to vector<128x128xbf16>
    %28 = vector.shape_cast %26 : vector<128x128xbf16> to vector<1x128x128xbf16>
    %29 = vector.shape_cast %27 : vector<128x128xbf16> to vector<1x128x128xbf16>
    %30 = tpu.concatenate %28, %29 in 0 : vector<1x128x128xbf16>, vector<1x128x128xbf16> -> vector<2x128x128xbf16>
    "tpu.trace_start"() <{level = 10 : i32, message = "hqd,hkd->hqk"}> : () -> ()
    %cst_7 = arith.constant dense<0.000000e+00> : vector<2x128x128xf32>
    %31 = tpu.matmul %20, %25, %cst_7 {dimension_numbers = #tpu.dot_dimension_numbers<[2], [2], [1], [1], [0, 0, 0, 1, 1, 1], [0], [0]>} : vector<2x128x128xbf16>, vector<2x128x128xbf16>, vector<2x128x128xf32> -> vector<2x128x128xf32>
    "tpu.trace_stop"() : () -> ()
    %c0_8 = arith.constant 0 : index
    %c0_9 = arith.constant 0 : index
    %c0_10 = arith.constant 0 : index
    %c0_11 = arith.constant 0 : index
    %32 = vector.load %arg3[%c0_8, %c0_9, %c0_10, %c0_11] : memref<1x2x128x128xf32, #tpu.memory_space<vmem>>, vector<1x2x128x128xf32>
    %33 = vector.shape_cast %32 : vector<1x2x128x128xf32> to vector<2x128x128xf32>
    %34 = arith.addf %31, %33 : vector<2x128x128xf32>
    %cst_12 = arith.constant dense<0xFF800000> : vector<2x128xf32>
    %35 = vector.multi_reduction <maximumf>, %34, %cst_12 [2] : vector<2x128x128xf32> to vector<2x128xf32>
    %36 = vector.shape_cast %35 : vector<2x128xf32> to vector<2x128x1xf32>
    %37 = vector.broadcast %36 : vector<2x128x1xf32> to vector<2x128x128xf32>
    %38 = arith.subf %34, %37 : vector<2x128x128xf32>
    %39 = math.exp %38 : vector<2x128x128xf32>
    %cst_13 = arith.constant dense<0.000000e+00> : vector<2x128xf32>
    %40 = vector.multi_reduction <add>, %39, %cst_13 [2] : vector<2x128x128xf32> to vector<2x128xf32>
    %41 = vector.shape_cast %40 : vector<2x128xf32> to vector<2x128x1xf32>
    %42 = vector.broadcast %41 : vector<2x128x1xf32> to vector<2x128x128xf32>
    %43 = arith.divf %39, %42 : vector<2x128x128xf32>
    %44 = arith.truncf %43 : vector<2x128x128xf32> to vector<2x128x128xbf16>
    "tpu.trace_start"() <{level = 10 : i32, message = "hqk,hkd->hqd"}> : () -> ()
    %cst_14 = arith.constant dense<0.000000e+00> : vector<2x128x128xf32>
    %45 = tpu.matmul %44, %30, %cst_14 {dimension_numbers = #tpu.dot_dimension_numbers<[2], [1], [1], [2], [0, 0, 0, 1, 1, 2], [0], [0]>} : vector<2x128x128xbf16>, vector<2x128x128xbf16>, vector<2x128x128xf32> -> vector<2x128x128xf32>
    "tpu.trace_stop"() : () -> ()
    %46 = vector.extract_strided_slice %45 {offsets = [0, 0, 0], sizes = [1, 128, 128], strides = [1, 1, 1]} : vector<2x128x128xf32> to vector<1x128x128xf32>
    %47 = vector.shape_cast %46 : vector<1x128x128xf32> to vector<128x128xf32>
    %48 = arith.truncf %47 : vector<128x128xf32> to vector<128x128xbf16>
    %49 = vector.extract_strided_slice %45 {offsets = [1, 0, 0], sizes = [1, 128, 128], strides = [1, 1, 1]} : vector<2x128x128xf32> to vector<1x128x128xf32>
    %50 = vector.shape_cast %49 : vector<1x128x128xf32> to vector<128x128xf32>
    %51 = arith.truncf %50 : vector<128x128xf32> to vector<128x128xbf16>
    %52 = tpu.concatenate %48, %51 in 1 : vector<128x128xbf16>, vector<128x128xbf16> -> vector<128x256xbf16>
    %53 = arith.index_cast %arg1 : i32 to index
    %c0_15 = arith.constant 0 : index
    %c0_16 = arith.constant 0 : index
    %54 = vector.load %arg9[%53, %c0_15, %c0_16] : memref<2x6x256xf32, #tpu.memory_space<vmem>>, vector<1x6x256xf32>
    %55 = vector.shape_cast %54 : vector<1x6x256xf32> to vector<6x256xf32>
    %56 = vector.extract_strided_slice %55 {offsets = [0, 0], sizes = [1, 256], strides = [1, 1]} : vector<6x256xf32> to vector<1x256xf32>
    %57 = vector.extract_strided_slice %55 {offsets = [1, 0], sizes = [1, 256], strides = [1, 1]} : vector<6x256xf32> to vector<1x256xf32>
    %58 = vector.extract_strided_slice %55 {offsets = [2, 0], sizes = [1, 256], strides = [1, 1]} : vector<6x256xf32> to vector<1x256xf32>
    %59 = vector.extract_strided_slice %55 {offsets = [3, 0], sizes = [1, 256], strides = [1, 1]} : vector<6x256xf32> to vector<1x256xf32>
    %60 = vector.extract_strided_slice %55 {offsets = [4, 0], sizes = [1, 256], strides = [1, 1]} : vector<6x256xf32> to vector<1x256xf32>
    %61 = vector.extract_strided_slice %55 {offsets = [5, 0], sizes = [1, 256], strides = [1, 1]} : vector<6x256xf32> to vector<1x256xf32>
    %62 = arith.index_cast %arg1 : i32 to index
    %c0_17 = arith.constant 0 : index
    %c0_18 = arith.constant 0 : index
    %63 = vector.load %arg5[%62, %c0_17, %c0_18] : memref<2x256x256xbf16, #tpu.memory_space<vmem>>, vector<1x256x256xbf16>
    %64 = vector.shape_cast %63 : vector<1x256x256xbf16> to vector<256x256xbf16>
    %cst_19 = arith.constant dense<0.000000e+00> : vector<128x256xf32>
    %65 = tpu.matmul %52, %64, %cst_19 {dimension_numbers = #tpu.dot_dimension_numbers<[1], [0], [0], [1], [0, 0, 1, 1], [], []>} : vector<128x256xbf16>, vector<256x256xbf16>, vector<128x256xf32> -> vector<128x256xf32>
    %66 = vector.broadcast %56 : vector<1x256xf32> to vector<128x256xf32>
    %67 = arith.addf %65, %66 : vector<128x256xf32>
    %68 = arith.addf %67, %4 : vector<128x256xf32>
    %cst_20 = arith.constant dense<0.000000e+00> : vector<128xf32>
    %69 = vector.multi_reduction <add>, %68, %cst_20 [1] : vector<128x256xf32> to vector<128xf32>
    %70 = vector.shape_cast %69 : vector<128xf32> to vector<128x1xf32>
    %cst_21 = arith.constant 2.560000e+02 : f32
    %71 = vector.broadcast %cst_21 : f32 to vector<128x1xf32>
    %72 = arith.divf %70, %71 : vector<128x1xf32>
    %73 = vector.broadcast %72 : vector<128x1xf32> to vector<128x256xf32>
    %74 = arith.subf %68, %73 : vector<128x256xf32>
    %75 = arith.mulf %74, %74 : vector<128x256xf32>
    %cst_22 = arith.constant dense<0.000000e+00> : vector<128xf32>
    %76 = vector.multi_reduction <add>, %75, %cst_22 [1] : vector<128x256xf32> to vector<128xf32>
    %77 = vector.shape_cast %76 : vector<128xf32> to vector<128x1xf32>
    %cst_23 = arith.constant 2.560000e+02 : f32
    %78 = vector.broadcast %cst_23 : f32 to vector<128x1xf32>
    %79 = arith.divf %77, %78 : vector<128x1xf32>
    %80 = vector.broadcast %72 : vector<128x1xf32> to vector<128x256xf32>
    %81 = arith.subf %68, %80 : vector<128x256xf32>
    %cst_24 = arith.constant 9.99999997E-7 : f32
    %82 = vector.broadcast %cst_24 : f32 to vector<128x1xf32>
    %83 = arith.addf %79, %82 : vector<128x1xf32>
    %84 = math.rsqrt %83 : vector<128x1xf32>
    %85 = vector.broadcast %84 : vector<128x1xf32> to vector<128x256xf32>
    %86 = arith.mulf %81, %85 : vector<128x256xf32>
    %87 = vector.broadcast %57 : vector<1x256xf32> to vector<128x256xf32>
    %88 = arith.mulf %86, %87 : vector<128x256xf32>
    %89 = vector.broadcast %58 : vector<1x256xf32> to vector<128x256xf32>
    %90 = arith.addf %88, %89 : vector<128x256xf32>
    %91 = arith.truncf %90 : vector<128x256xf32> to vector<128x256xbf16>
    %92 = arith.index_cast %arg1 : i32 to index
    %c0_25 = arith.constant 0 : index
    %c0_26 = arith.constant 0 : index
    %93 = vector.load %arg6[%92, %c0_25, %c0_26] : memref<2x256x512xbf16, #tpu.memory_space<vmem>>, vector<1x256x512xbf16>
    %94 = vector.shape_cast %93 : vector<1x256x512xbf16> to vector<256x512xbf16>
    %cst_27 = arith.constant dense<0.000000e+00> : vector<128x512xf32>
    %95 = tpu.matmul %91, %94, %cst_27 {dimension_numbers = #tpu.dot_dimension_numbers<[1], [0], [0], [1], [0, 0, 1, 1], [], []>} : vector<128x256xbf16>, vector<256x512xbf16>, vector<128x512xf32> -> vector<128x512xf32>
    %96 = arith.index_cast %arg1 : i32 to index
    %c0_28 = arith.constant 0 : index
    %c0_29 = arith.constant 0 : index
    %97 = vector.load %arg10[%96, %c0_28, %c0_29] : memref<2x1x512xf32, #tpu.memory_space<vmem>>, vector<1x1x512xf32>
    %98 = vector.shape_cast %97 : vector<1x1x512xf32> to vector<1x512xf32>
    %99 = vector.broadcast %98 : vector<1x512xf32> to vector<128x512xf32>
    %100 = arith.addf %95, %99 : vector<128x512xf32>
    %cst_30 = arith.constant 0.000000e+00 : f32
    %101 = vector.broadcast %cst_30 : f32 to vector<128x512xf32>
    %102 = arith.maximumf %100, %101 : vector<128x512xf32>
    %103 = arith.truncf %102 : vector<128x512xf32> to vector<128x512xbf16>
    %104 = arith.index_cast %arg1 : i32 to index
    %c0_31 = arith.constant 0 : index
    %c0_32 = arith.constant 0 : index
    %105 = vector.load %arg7[%104, %c0_31, %c0_32] : memref<2x512x256xbf16, #tpu.memory_space<vmem>>, vector<1x512x256xbf16>
    %106 = vector.shape_cast %105 : vector<1x512x256xbf16> to vector<512x256xbf16>
    %cst_33 = arith.constant dense<0.000000e+00> : vector<128x256xf32>
    %107 = tpu.matmul %103, %106, %cst_33 {dimension_numbers = #tpu.dot_dimension_numbers<[1], [0], [0], [1], [0, 0, 1, 1], [], []>} : vector<128x512xbf16>, vector<512x256xbf16>, vector<128x256xf32> -> vector<128x256xf32>
    %108 = vector.broadcast %59 : vector<1x256xf32> to vector<128x256xf32>
    %109 = arith.addf %107, %108 : vector<128x256xf32>
    %110 = arith.addf %109, %90 : vector<128x256xf32>
    %cst_34 = arith.constant dense<0.000000e+00> : vector<128xf32>
    %111 = vector.multi_reduction <add>, %110, %cst_34 [1] : vector<128x256xf32> to vector<128xf32>
    %112 = vector.shape_cast %111 : vector<128xf32> to vector<128x1xf32>
    %cst_35 = arith.constant 2.560000e+02 : f32
    %113 = vector.broadcast %cst_35 : f32 to vector<128x1xf32>
    %114 = arith.divf %112, %113 : vector<128x1xf32>
    %115 = vector.broadcast %114 : vector<128x1xf32> to vector<128x256xf32>
    %116 = arith.subf %110, %115 : vector<128x256xf32>
    %117 = arith.mulf %116, %116 : vector<128x256xf32>
    %cst_36 = arith.constant dense<0.000000e+00> : vector<128xf32>
    %118 = vector.multi_reduction <add>, %117, %cst_36 [1] : vector<128x256xf32> to vector<128xf32>
    %119 = vector.shape_cast %118 : vector<128xf32> to vector<128x1xf32>
    %cst_37 = arith.constant 2.560000e+02 : f32
    %120 = vector.broadcast %cst_37 : f32 to vector<128x1xf32>
    %121 = arith.divf %119, %120 : vector<128x1xf32>
    %122 = vector.broadcast %114 : vector<128x1xf32> to vector<128x256xf32>
    %123 = arith.subf %110, %122 : vector<128x256xf32>
    %cst_38 = arith.constant 9.99999997E-7 : f32
    %124 = vector.broadcast %cst_38 : f32 to vector<128x1xf32>
    %125 = arith.addf %121, %124 : vector<128x1xf32>
    %126 = math.rsqrt %125 : vector<128x1xf32>
    %127 = vector.broadcast %126 : vector<128x1xf32> to vector<128x256xf32>
    %128 = arith.mulf %123, %127 : vector<128x256xf32>
    %129 = vector.broadcast %60 : vector<1x256xf32> to vector<128x256xf32>
    %130 = arith.mulf %128, %129 : vector<128x256xf32>
    %131 = vector.broadcast %61 : vector<1x256xf32> to vector<128x256xf32>
    %132 = arith.addf %130, %131 : vector<128x256xf32>
    %c0_39 = arith.constant 0 : index
    %c0_40 = arith.constant 0 : index
    %c0_41 = arith.constant 0 : index
    %133 = vector.load %arg12[%c0_39, %c0_40, %c0_41] : memref<1x128x256xf32, #tpu.memory_space<vmem>>, vector<1x128x256xf32>
    %134 = vector.shape_cast %133 : vector<1x128x256xf32> to vector<128x256xf32>
    %135 = vector.shape_cast %132 : vector<128x256xf32> to vector<1x128x256xf32>
    tpu.vector_store %arg12[%c0_39, %c0_40, %c0_41], %135 {strides = array<i32>} : memref<1x128x256xf32, #tpu.memory_space<vmem>>, vector<1x128x256xf32>,
    %c1_i32 = arith.constant 1 : i32
    %136 = arith.cmpi eq, %arg1, %c1_i32 : i32
    %137 = arith.extui %136 : i1 to i32
    %c0_i32_42 = arith.constant 0 : i32
    %138 = arith.cmpi ne, %137, %c0_i32_42 : i32
    scf.if %138 {
      %c0_43 = arith.constant 0 : index
      %c0_44 = arith.constant 0 : index
      %c0_45 = arith.constant 0 : index
      %139 = vector.load %arg11[%c0_43, %c0_44, %c0_45] : memref<1x128x256xf32, #tpu.memory_space<vmem>>, vector<1x128x256xf32>
      %140 = vector.shape_cast %139 : vector<1x128x256xf32> to vector<128x256xf32>
      %141 = vector.shape_cast %132 : vector<128x256xf32> to vector<1x128x256xf32>
      tpu.vector_store %arg11[%c0_43, %c0_44, %c0_45], %141 {strides = array<i32>} : memref<1x128x256xf32, #tpu.memory_space<vmem>>, vector<1x128x256xf32>,
    } else {
    }
    return
  }
  func.func @transform_0(%arg0: i32, %arg1: i32) -> (i32, i32, i32) {
    %c0_i32 = arith.constant 0 : i32
    %c0_i32_0 = arith.constant 0 : i32
    %c0_i32_1 = arith.constant 0 : i32
    return %arg0, %c0_i32, %c0_i32_0 : i32, i32, i32
  }
  func.func @transform_1(%arg0: i32, %arg1: i32) -> (i32, i32, i32, i32) {
    %c0_i32 = arith.constant 0 : i32
    %c0_i32_0 = arith.constant 0 : i32
    %c0_i32_1 = arith.constant 0 : i32
    %c0_i32_2 = arith.constant 0 : i32
    return %arg0, %c0_i32, %c0_i32_0, %c0_i32_1 : i32, i32, i32, i32
  }
  func.func @transform_2(%arg0: i32, %arg1: i32) -> (i32, i32, i32) {
    %c0_i32 = arith.constant 0 : i32
    %c0_i32_0 = arith.constant 0 : i32
    %c0_i32_1 = arith.constant 0 : i32
    %c0_i32_2 = arith.constant 0 : i32
    return %c0_i32, %c0_i32_0, %c0_i32_1 : i32, i32, i32
  }
  func.func @transform_3(%arg0: i32, %arg1: i32) -> (i32, i32, i32) {
    %c0_i32 = arith.constant 0 : i32
    %c0_i32_0 = arith.constant 0 : i32
    %c0_i32_1 = arith.constant 0 : i32
    %c0_i32_2 = arith.constant 0 : i32
    return %c0_i32, %c0_i32_0, %c0_i32_1 : i32, i32, i32
  }
  func.func @transform_4(%arg0: i32, %arg1: i32) -> (i32, i32, i32) {
    %c0_i32 = arith.constant 0 : i32
    %c0_i32_0 = arith.constant 0 : i32
    %c0_i32_1 = arith.constant 0 : i32
    %c0_i32_2 = arith.constant 0 : i32
    return %c0_i32, %c0_i32_0, %c0_i32_1 : i32, i32, i32
  }
  func.func @transform_5(%arg0: i32, %arg1: i32) -> (i32, i32, i32) {
    %c0_i32 = arith.constant 0 : i32
    %c0_i32_0 = arith.constant 0 : i32
    %c0_i32_1 = arith.constant 0 : i32
    %c0_i32_2 = arith.constant 0 : i32
    return %c0_i32, %c0_i32_0, %c0_i32_1 : i32, i32, i32
  }
  func.func @transform_6(%arg0: i32, %arg1: i32) -> (i32, i32, i32) {
    %c0_i32 = arith.constant 0 : i32
    %c0_i32_0 = arith.constant 0 : i32
    %c0_i32_1 = arith.constant 0 : i32
    %c0_i32_2 = arith.constant 0 : i32
    return %c0_i32, %c0_i32_0, %c0_i32_1 : i32, i32, i32
  }
  func.func @transform_7(%arg0: i32, %arg1: i32) -> (i32, i32, i32) {
    %c0_i32 = arith.constant 0 : i32
    %c0_i32_0 = arith.constant 0 : i32
    %c0_i32_1 = arith.constant 0 : i32
    %c0_i32_2 = arith.constant 0 : i32
    return %c0_i32, %c0_i32_0, %c0_i32_1 : i32, i32, i32
  }
  func.func @transform_8(%arg0: i32, %arg1: i32) -> (i32, i32, i32) {
    %c0_i32 = arith.constant 0 : i32
    %c0_i32_0 = arith.constant 0 : i32
    %c0_i32_1 = arith.constant 0 : i32
    %c0_i32_2 = arith.constant 0 : i32
    return %c0_i32, %c0_i32_0, %c0_i32_1 : i32, i32, i32
  }
  func.func @transform_9(%arg0: i32, %arg1: i32) -> (i32, i32, i32) {
    %c0_i32 = arith.constant 0 : i32
    %c0_i32_0 = arith.constant 0 : i32
    %c0_i32_1 = arith.constant 0 : i32
    return %arg0, %c0_i32, %c0_i32_0 : i32, i32, i32
  }
}

</mosaic_0001>

<llo_original>
// kernel: tpu_custom_call.1
$region0: #{tpu_custom_call.1}
  #allocation0 [shape = 'u32[]', space=smem, size = 0x4, offset = 0x4, fixed_abs, tag = 'smem constant byte address 0x4 - core index']
  #allocation1 [shape = 'u32[144,128]{1,0:T(1,128)}', space=vmem, size = 0x12000, scoped, tag = 'internal scratch']
  #allocation2 [shape = 'f32[1,128,256]{2,1,0:T(8,128)}', space=vmem, size = 0x20000, scoped, tag = 'scratch operand']
  %s0 = inlined_call_operand.hbm [shape: f32[2,128,256], index: 0, kind: input, shape index: {}]
  %s1 = inlined_call_operand.hbm [shape: f32[2,2,128,128], index: 1, kind: input, shape index: {}]
  %s2 = inlined_call_operand.hbm [shape: bf16[2,256,768], index: 2, kind: input, shape index: {}]
  %s3 = inlined_call_operand.hbm [shape: bf16[2,256,256], index: 3, kind: input, shape index: {}]
  %s4 = inlined_call_operand.hbm [shape: bf16[2,256,512], index: 4, kind: input, shape index: {}]
  %s5 = inlined_call_operand.hbm [shape: bf16[2,512,256], index: 5, kind: input, shape index: {}]
  %s6 = inlined_call_operand.vmem [shape: f32[2,1,768], index: 6, kind: input, shape index: {}]
  %s7 = inlined_call_operand.vmem [shape: f32[2,6,256], index: 7, kind: input, shape index: {}]
  %s8 = inlined_call_operand.vmem [shape: f32[2,1,512], index: 8, kind: input, shape index: {}]
  %s9 = inlined_call_operand.hbm [shape: f32[2,128,256], index: 9, kind: output, shape index: {}]
  %s10 = sld [smem:[#allocation0]]
  $region101: #{tpu_custom_call.1} parent=0
    _
  %s12 = ssub.s32 1, %s10
  %s13 = scalar_select 0, %s12, %s10
  $region1: #{tpu_custom_call.1} parent=0
    #allocation3 [shape = 'u8[262144]{0}', space=vmem, size = 0x40000, scoped, tag = 'input window, operand 0']
    #allocation4 [shape = 's32[2]{0}', space=sflag, size = 0x8, scoped, tag = 'scoped memory for tpu_custom_call.1']
    #allocation5 [shape = 's32[2]{0}', space=sflag, size = 0x8, scoped, tag = 'scoped memory for tpu_custom_call.1']
    #allocation6 [shape = 'u8[262144]{0}', space=vmem, size = 0x40000, scoped, tag = 'input window, operand 1']
    #allocation7 [shape = 's32[2]{0}', space=sflag, size = 0x8, scoped, tag = 'scoped memory for tpu_custom_call.1']
    #allocation8 [shape = 'u8[786432]{0}', space=vmem, size = 0xc0000, scoped, tag = 'input window, operand 2, single buffered']
    #allocation9 [shape = 'u8[262144]{0}', space=vmem, size = 0x40000, scoped, tag = 'input window, operand 3, single buffered']
    #allocation10 [shape = 's32[1]{0}', space=sflag, size = 0x4, scoped, tag = 'scoped memory for tpu_custom_call.1']
    #allocation11 [shape = 'u8[524288]{0}', space=vmem, size = 0x80000, scoped, tag = 'input window, operand 4, single buffered']
    #allocation12 [shape = 'u8[524288]{0}', space=vmem, size = 0x80000, scoped, tag = 'input window, operand 5, single buffered']
    #allocation13 [shape = 's32[1]{0}', space=sflag, size = 0x4, scoped, tag = 'scoped memory for tpu_custom_call.1']
    #allocation14 [shape = 'u8[262144]{0}', space=vmem, size = 0x40000, scoped, tag = 'output window, operand 0']
    %14 = vsyncpa [#allocation4], 0
    %s15 = scalar_lea.sflag [#allocation4], 1
    %16 = vsyncpa %s15, 0
    %17 = vsyncpa [#allocation7], 0
    %s18 = scalar_lea.sflag [#allocation7], 1
    %19 = vsyncpa %s18, 0
    %20 = vsyncpa [#allocation10], 0
    %21 = vsyncpa [#allocation13], 0
    %22 = vsyncpa [#allocation5], 0
    %s23 = scalar_lea.sflag [#allocation5], 1
    %24 = vsyncpa %s23, 0
    loop: start=0, step=1, limit=6
    $region2: #{tpu_custom_call.1} parent=1 // loop_pre_header
      _
    $region3: #{tpu_custom_call.1} parent=1 // loop_header
      %s26 = sphi 0, %s30
      %p27 = scmp.ge.s32.totalorder %s26, 6
      %s33 = sphi 0, %s45
      %s34 = sphi 0, %s41
      %s35 = sphi 0, %s33
      %s36 = sphi 0, %s34
      %s37 = sphi 0, %s35
      %s38 = sphi 0, %s36
      %s48 = sphi 0, %s50
      %s51 = sphi 0, %s48
      %s52 = sphi 0, %s51
      %s68 = sphi 0, %s52
      %s74 = sphi 0, %s76
      %s77 = sphi 0, %s74
      %s78 = sphi 0, %s77
      %s94 = sphi 0, %s78
      %s98 = sphi 0, %s98
      %s100 = sphi 0, %s98
      %s101 = sphi 0, %s100
      %s115 = sphi 0, %s101
      %s119 = sphi 0, %s119
      %s121 = sphi 0, %s119
      %s122 = sphi 0, %s121
      %s136 = sphi 0, %s122
      %s140 = sphi 0, %s140
      %s142 = sphi 0, %s140
      %s143 = sphi 0, %s142
      %s157 = sphi 0, %s143
      %s161 = sphi 0, %s161
      %s163 = sphi 0, %s161
      %s164 = sphi 0, %s163
      %s178 = sphi 0, %s164
      %s182 = sphi 0, %s182
      %s184 = sphi 0, %s182
      %s185 = sphi 0, %s184
      %s199 = sphi 0, %s185
      %s203 = sphi 0, %s203
      %s205 = sphi 0, %s203
      %s206 = sphi 0, %s205
      %s220 = sphi 0, %s206
      %s224 = sphi 0, %s224
      %s226 = sphi 0, %s224
      %s227 = sphi 0, %s226
      %s241 = sphi 0, %s227
      %s247 = sphi 0, %s249
      %s250 = sphi 0, %s247
      %s251 = sphi 0, %s250
      %s267 = sphi 0, %s251
    $region4: #{tpu_custom_call.1} parent=1 // loop_header_branch
      %29 = sbr.rel (%p27) target = $region8
    $region5: #{tpu_custom_call.1} parent=1 // loop_body
      %s31 = ssub.s32 %s26, 1
      %s32 = ssub.s32 %s26, 2
      %s39 = sadd.s32 1, %s34
      %p40 = scmp.ge.s32.totalorder %s39, 2
      %s41 = scalar_select %p40, 0, %s39
      %s42 = sadd.s32 1, %s33
      %s43 = scalar_select %p40, %s42, %s33
      %p44 = scmp.ge.s32.totalorder %s43, 2
      %s45 = scalar_select %p44, 0, %s43
      %s46 = ssub.s32 %s33, %s45
      %p47 = scmp.eq.s32.totalorder %s46, 0
      %s49 = sadd.s32 %s48, 1
      %s50 = scalar_select %p47, %s48, %s49
      %p53 = pneg %p47
      %p54 = scmp.eq.s32.totalorder %s26, 3
      %p55 = por %p53, %p54
      %p56 = scmp.ne.s32.totalorder %s48, %s51
      %p57 = scmp.eq.s32.totalorder %s26, 0
      %p58 = por %p56, %p57
      %p59 = scmp.ne.s32.totalorder %s48, %s51
      %p60 = scmp.eq.s32.totalorder %s31, 3
      %p61 = por %p59, %p60
      %p62 = scmp.ne.s32.totalorder %s51, %s52
      %p63 = scmp.eq.s32.totalorder %s31, 0
      %p64 = por %p62, %p63
      %p65 = scmp.ne.s32.totalorder %s51, %s52
      %p66 = scmp.eq.s32.totalorder %s32, 3
      %p67 = por %p65, %p66
      %p69 = scmp.ne.s32.totalorder %s52, %s68
      %p70 = scmp.eq.s32.totalorder %s32, 0
      %p71 = por %p69, %p70
      %s72 = ssub.s32 %s33, %s45
      %p73 = scmp.eq.s32.totalorder %s72, 0
      %s75 = sadd.s32 %s74, 1
      %s76 = scalar_select %p73, %s74, %s75
      %p79 = pneg %p73
      %p80 = scmp.eq.s32.totalorder %s26, 3
      %p81 = por %p79, %p80
      %p82 = scmp.ne.s32.totalorder %s74, %s77
      %p83 = scmp.eq.s32.totalorder %s26, 0
      %p84 = por %p82, %p83
      %p85 = scmp.ne.s32.totalorder %s74, %s77
      %p86 = scmp.eq.s32.totalorder %s31, 3
      %p87 = por %p85, %p86
      %p88 = scmp.ne.s32.totalorder %s77, %s78
      %p89 = scmp.eq.s32.totalorder %s31, 0
      %p90 = por %p88, %p89
      %p91 = scmp.ne.s32.totalorder %s77, %s78
      %p92 = scmp.eq.s32.totalorder %s32, 3
      %p93 = por %p91, %p92
      %p95 = scmp.ne.s32.totalorder %s78, %s94
      %p96 = scmp.eq.s32.totalorder %s32, 0
      %p97 = por %p95, %p96
      %s99 = sadd.s32 %s98, 1
      %p102 = scmp.eq.s32.totalorder %s26, 3
      %p103 = scmp.ne.s32.totalorder %s98, %s100
      %p104 = scmp.eq.s32.totalorder %s26, 0
      %p105 = por %p103, %p104
      %p106 = scmp.ne.s32.totalorder %s98, %s100
      %p107 = scmp.eq.s32.totalorder %s31, 3
      %p108 = por %p106, %p107
      %p109 = scmp.ne.s32.totalorder %s100, %s101
      %p110 = scmp.eq.s32.totalorder %s31, 0
      %p111 = por %p109, %p110
      %p112 = scmp.ne.s32.totalorder %s100, %s101
      %p113 = scmp.eq.s32.totalorder %s32, 3
      %p114 = por %p112, %p113
      %p116 = scmp.ne.s32.totalorder %s101, %s115
      %p117 = scmp.eq.s32.totalorder %s32, 0
      %p118 = por %p116, %p117
      %s120 = sadd.s32 %s119, 1
      %p123 = scmp.eq.s32.totalorder %s26, 3
      %p124 = scmp.ne.s32.totalorder %s119, %s121
      %p125 = scmp.eq.s32.totalorder %s26, 0
      %p126 = por %p124, %p125
      %p127 = scmp.ne.s32.totalorder %s119, %s121
      %p128 = scmp.eq.s32.totalorder %s31, 3
      %p129 = por %p127, %p128
      %p130 = scmp.ne.s32.totalorder %s121, %s122
      %p131 = scmp.eq.s32.totalorder %s31, 0
      %p132 = por %p130, %p131
      %p133 = scmp.ne.s32.totalorder %s121, %s122
      %p134 = scmp.eq.s32.totalorder %s32, 3
      %p135 = por %p133, %p134
      %p137 = scmp.ne.s32.totalorder %s122, %s136
      %p138 = scmp.eq.s32.totalorder %s32, 0
      %p139 = por %p137, %p138
      %s141 = sadd.s32 %s140, 1
      %p144 = scmp.eq.s32.totalorder %s26, 3
      %p145 = scmp.ne.s32.totalorder %s140, %s142
      %p146 = scmp.eq.s32.totalorder %s26, 0
      %p147 = por %p145, %p146
      %p148 = scmp.ne.s32.totalorder %s140, %s142
      %p149 = scmp.eq.s32.totalorder %s31, 3
      %p150 = por %p148, %p149
      %p151 = scmp.ne.s32.totalorder %s142, %s143
      %p152 = scmp.eq.s32.totalorder %s31, 0
      %p153 = por %p151, %p152
      %p154 = scmp.ne.s32.totalorder %s142, %s143
      %p155 = scmp.eq.s32.totalorder %s32, 3
      %p156 = por %p154, %p155
      %p158 = scmp.ne.s32.totalorder %s143, %s157
      %p159 = scmp.eq.s32.totalorder %s32, 0
      %p160 = por %p158, %p159
      %s162 = sadd.s32 %s161, 1
      %p165 = scmp.eq.s32.totalorder %s26, 3
      %p166 = scmp.ne.s32.totalorder %s161, %s163
      %p167 = scmp.eq.s32.totalorder %s26, 0
      %p168 = por %p166, %p167
      %p169 = scmp.ne.s32.totalorder %s161, %s163
      %p170 = scmp.eq.s32.totalorder %s31, 3
      %p171 = por %p169, %p170
      %p172 = scmp.ne.s32.totalorder %s163, %s164
      %p173 = scmp.eq.s32.totalorder %s31, 0
      %p174 = por %p172, %p173
      %p175 = scmp.ne.s32.totalorder %s163, %s164
      %p176 = scmp.eq.s32.totalorder %s32, 3
      %p177 = por %p175, %p176
      %p179 = scmp.ne.s32.totalorder %s164, %s178
      %p180 = scmp.eq.s32.totalorder %s32, 0
      %p181 = por %p179, %p180
      %s183 = sadd.s32 %s182, 1
      %p186 = scmp.eq.s32.totalorder %s26, 3
      %p187 = scmp.ne.s32.totalorder %s182, %s184
      %p188 = scmp.eq.s32.totalorder %s26, 0
      %p189 = por %p187, %p188
      %p190 = scmp.ne.s32.totalorder %s182, %s184
      %p191 = scmp.eq.s32.totalorder %s31, 3
      %p192 = por %p190, %p191
      %p193 = scmp.ne.s32.totalorder %s184, %s185
      %p194 = scmp.eq.s32.totalorder %s31, 0
      %p195 = por %p193, %p194
      %p196 = scmp.ne.s32.totalorder %s184, %s185
      %p197 = scmp.eq.s32.totalorder %s32, 3
      %p198 = por %p196, %p197
      %p200 = scmp.ne.s32.totalorder %s185, %s199
      %p201 = scmp.eq.s32.totalorder %s32, 0
      %p202 = por %p200, %p201
      %s204 = sadd.s32 %s203, 1
      %p207 = scmp.eq.s32.totalorder %s26, 3
      %p208 = scmp.ne.s32.totalorder %s203, %s205
      %p209 = scmp.eq.s32.totalorder %s26, 0
      %p210 = por %p208, %p209
      %p211 = scmp.ne.s32.totalorder %s203, %s205
      %p212 = scmp.eq.s32.totalorder %s31, 3
      %p213 = por %p211, %p212
      %p214 = scmp.ne.s32.totalorder %s205, %s206
      %p215 = scmp.eq.s32.totalorder %s31, 0
      %p216 = por %p214, %p215
      %p217 = scmp.ne.s32.totalorder %s205, %s206
      %p218 = scmp.eq.s32.totalorder %s32, 3
      %p219 = por %p217, %p218
      %p221 = scmp.ne.s32.totalorder %s206, %s220
      %p222 = scmp.eq.s32.totalorder %s32, 0
      %p223 = por %p221, %p222
      %s225 = sadd.s32 %s224, 1
      %p228 = scmp.eq.s32.totalorder %s26, 3
      %p229 = scmp.ne.s32.totalorder %s224, %s226
      %p230 = scmp.eq.s32.totalorder %s26, 0
      %p231 = por %p229, %p230
      %p232 = scmp.ne.s32.totalorder %s224, %s226
      %p233 = scmp.eq.s32.totalorder %s31, 3
      %p234 = por %p232, %p233
      %p235 = scmp.ne.s32.totalorder %s226, %s227
      %p236 = scmp.eq.s32.totalorder %s31, 0
      %p237 = por %p235, %p236
      %p238 = scmp.ne.s32.totalorder %s226, %s227
      %p239 = scmp.eq.s32.totalorder %s32, 3
      %p240 = por %p238, %p239
      %p242 = scmp.ne.s32.totalorder %s227, %s241
      %p243 = scmp.eq.s32.totalorder %s32, 0
      %p244 = por %p242, %p243
      %s245 = ssub.s32 %s33, %s45
      %p246 = scmp.eq.s32.totalorder %s245, 0
      %s248 = sadd.s32 %s247, 1
      %s249 = scalar_select %p246, %s247, %s248
      %p252 = pneg %p246
      %p253 = scmp.eq.s32.totalorder %s26, 3
      %p254 = por %p252, %p253
      %p255 = scmp.ne.s32.totalorder %s247, %s250
      %p256 = scmp.eq.s32.totalorder %s26, 0
      %p257 = por %p255, %p256
      %p258 = scmp.ne.s32.totalorder %s247, %s250
      %p259 = scmp.eq.s32.totalorder %s31, 3
      %p260 = por %p258, %p259
      %p261 = scmp.ne.s32.totalorder %s250, %s251
      %p262 = scmp.eq.s32.totalorder %s31, 0
      %p263 = por %p261, %p262
      %p264 = scmp.ne.s32.totalorder %s250, %s251
      %p265 = scmp.eq.s32.totalorder %s32, 3
      %p266 = por %p264, %p265
      %p268 = scmp.ne.s32.totalorder %s251, %s267
      %p269 = scmp.eq.s32.totalorder %s32, 0
      %p270 = por %p268, %p269
      %p271 = scmp.le.s32.totalorder 1, %s26
      %p272 = scmp.lt.s32.totalorder %s26, 5
      %p273 = pnand %p271, %p272
      %p274 = pneg %p273
      // Predicated region
      $region9: #{tpu_custom_call.1} parent=5 // pred_check
        _
      $region10: #{tpu_custom_call.1} parent=5 // pred_check_branch
        %276 = sbr.rel (%p273) target = $region12
      $region11: #{tpu_custom_call.1} parent=5 // pred_region
        %s277 = ssub.s32 %s26, 1
        // Predicated region
        $region13: #{tpu_custom_call.1} parent=11 // pred_check
          %p278 = pneg %p111
        $region14: #{tpu_custom_call.1} parent=11 // pred_check_branch
          %280 = sbr.rel (%p278) target = $region16
        $region15: #{tpu_custom_call.1} parent=11 // pred_region
          %s282 = ssub.s32 24576, 24576
          %283 = vsyncadd [#allocation7], %s282
          %s284 = sshll.u32 [#allocation8], 4
          %s285 = int_to_ptr.vmem [resolvable:$true] %s284
          %290 = dma.hbm_to_vmem [thread:$0]  %s2, 24576, %s285, [#allocation7], 384, 384, 24
        $region16: #{tpu_custom_call.1} parent=11 // pred_fallthru
          _
        // Predicated region
        $region17: #{tpu_custom_call.1} parent=11 // pred_check
          %p291 = pneg %p132
        $region18: #{tpu_custom_call.1} parent=11 // pred_check_branch
          %293 = sbr.rel (%p291) target = $region20
        $region19: #{tpu_custom_call.1} parent=11 // pred_region
          %s295 = ssub.s32 8192, 8192
          %296 = vsyncadd [#allocation10], %s295
          %s297 = sshll.u32 [#allocation9], 4
          %s298 = int_to_ptr.vmem [resolvable:$true] %s297
          %303 = dma.hbm_to_vmem [thread:$0]  %s3, 8192, %s298, [#allocation10], 128, 128, 8
        $region20: #{tpu_custom_call.1} parent=11 // pred_fallthru
          _
        // Predicated region
        $region21: #{tpu_custom_call.1} parent=11 // pred_check
          %p304 = pneg %p153
        $region22: #{tpu_custom_call.1} parent=11 // pred_check_branch
          %306 = sbr.rel (%p304) target = $region24
        $region23: #{tpu_custom_call.1} parent=11 // pred_region
          %s308 = ssub.s32 16384, 16384
          %309 = vsyncadd [#allocation10], %s308
          %s310 = sshll.u32 [#allocation11], 4
          %s311 = int_to_ptr.vmem [resolvable:$true] %s310
          %316 = dma.hbm_to_vmem [thread:$0]  %s4, 16384, %s311, [#allocation10], 256, 256, 16
        $region24: #{tpu_custom_call.1} parent=11 // pred_fallthru
          _
        // Predicated region
        $region25: #{tpu_custom_call.1} parent=11 // pred_check
          %p317 = pneg %p174
        $region26: #{tpu_custom_call.1} parent=11 // pred_check_branch
          %319 = sbr.rel (%p317) target = $region28
        $region27: #{tpu_custom_call.1} parent=11 // pred_region
          %s321 = ssub.s32 16384, 16384
          %322 = vsyncadd [#allocation13], %s321
          %s323 = sshll.u32 [#allocation12], 4
          %s324 = int_to_ptr.vmem [resolvable:$true] %s323
          %329 = dma.hbm_to_vmem [thread:$0]  %s5, 16384, %s324, [#allocation13], 128, 128, 8
        $region28: #{tpu_custom_call.1} parent=11 // pred_fallthru
          _
        // Predicated region
        $region29: #{tpu_custom_call.1} parent=11 // pred_check
          %p330 = pneg %p195
        $region30: #{tpu_custom_call.1} parent=11 // pred_check_branch
          %332 = sbr.rel (%p330) target = $region32
        $region31: #{tpu_custom_call.1} parent=11 // pred_region
          _
        $region32: #{tpu_custom_call.1} parent=11 // pred_fallthru
          _
        // Predicated region
        $region33: #{tpu_custom_call.1} parent=11 // pred_check
          %p333 = pneg %p216
        $region34: #{tpu_custom_call.1} parent=11 // pred_check_branch
          %335 = sbr.rel (%p333) target = $region36
        $region35: #{tpu_custom_call.1} parent=11 // pred_region
          _
        $region36: #{tpu_custom_call.1} parent=11 // pred_fallthru
          _
        // Predicated region
        $region37: #{tpu_custom_call.1} parent=11 // pred_check
          %p336 = pneg %p237
        $region38: #{tpu_custom_call.1} parent=11 // pred_check_branch
          %338 = sbr.rel (%p336) target = $region40
        $region39: #{tpu_custom_call.1} parent=11 // pred_region
          _
        $region40: #{tpu_custom_call.1} parent=11 // pred_fallthru
          _
      $region12: #{tpu_custom_call.1} parent=5 // pred_fallthru
        _
      %p339 = scmp.lt.s32.totalorder %s26, 4
      // Predicated region
      $region41: #{tpu_custom_call.1} parent=5 // pred_check
        %p340 = pneg %p339
      $region42: #{tpu_custom_call.1} parent=5 // pred_check_branch
        %342 = sbr.rel (%p340) target = $region44
      $region43: #{tpu_custom_call.1} parent=5 // pred_region
        // Predicated region
        $region45: #{tpu_custom_call.1} parent=43 // pred_check
          %p343 = pneg %p58
        $region46: #{tpu_custom_call.1} parent=43 // pred_check_branch
          %345 = sbr.rel (%p343) target = $region48
        $region47: #{tpu_custom_call.1} parent=43 // pred_region
          %s346 = sand.u32 %s48, 1
          %s347 = scalar_lea.sflag [#allocation4], %s346
          %s348 = sand.u32 %s48, 1
          %s349 = smul.addr %s348, 256
          %s350 = scalar_lea.vmem [#allocation3], %s349
          %s352 = ssub.s32 4096, 4096
          %353 = vsyncadd %s347, %s352
          %s354 = smul.addr %s33, 32
          %s355 = smul.addr %s354, 128
          %s356 = scalar_lea.hbm %s0, %s355
          %s357 = sshll.u32 %s350, 4
          %s358 = int_to_ptr.vmem [resolvable:$true] %s357
          %363 = dma.hbm_to_vmem [thread:$0]  %s356, 4096, %s358, %s347, 256, 256, 16
        $region48: #{tpu_custom_call.1} parent=43 // pred_fallthru
          _
        // Predicated region
        $region49: #{tpu_custom_call.1} parent=43 // pred_check
          %p364 = pneg %p84
        $region50: #{tpu_custom_call.1} parent=43 // pred_check_branch
          %366 = sbr.rel (%p364) target = $region52
        $region51: #{tpu_custom_call.1} parent=43 // pred_region
          %s367 = sand.u32 %s26, 1
          %s368 = scalar_lea.sflag [#allocation7], %s367
          %s369 = sand.u32 %s74, 1
          %s370 = smul.addr %s369, 256
          %s371 = scalar_lea.vmem [#allocation6], %s370
          %s373 = ssub.s32 4096, 4096
          %374 = vsyncadd %s368, %s373
          %s375 = smul.addr %s33, 32
          %s376 = smul.addr %s375, 128
          %s377 = scalar_lea.hbm %s1, %s376
          %s378 = sshll.u32 %s371, 4
          %s379 = int_to_ptr.vmem [resolvable:$true] %s378
          %384 = dma.hbm_to_vmem [thread:$0]  %s377, 4096, %s379, %s368, 128, 128, 8
        $region52: #{tpu_custom_call.1} parent=43 // pred_fallthru
          _
      $region44: #{tpu_custom_call.1} parent=5 // pred_fallthru
        _
      %p385 = scmp.le.s32.totalorder 1, %s26
      %p386 = scmp.lt.s32.totalorder %s26, 5
      %p387 = pnand %p385, %p386
      %p388 = pneg %p387
      // Predicated region
      $region53: #{tpu_custom_call.1} parent=5 // pred_check
        _
      $region54: #{tpu_custom_call.1} parent=5 // pred_check_branch
        %390 = sbr.rel (%p387) target = $region56
      $region55: #{tpu_custom_call.1} parent=5 // pred_region
        %s391 = ssub.s32 %s26, 1
        %s392 = sand.u32 %s51, 1
        %s393 = scalar_lea.sflag [#allocation4], %s392
        %s394 = sand.u32 %s51, 1
        %s395 = smul.addr %s394, 256
        %s396 = scalar_lea.vmem [#allocation3], %s395
        // Predicated region
        $region57: #{tpu_custom_call.1} parent=55 // pred_check
          %p397 = pneg %p64
        $region58: #{tpu_custom_call.1} parent=55 // pred_check_branch
          %399 = sbr.rel (%p397) target = $region60
        $region59: #{tpu_custom_call.1} parent=55 // pred_region
          %400 = dma.done %s393, 4096
        $region60: #{tpu_custom_call.1} parent=55 // pred_fallthru
          _
        %s401 = sand.u32 %s31, 1
        %s402 = scalar_lea.sflag [#allocation7], %s401
        %s403 = sand.u32 %s77, 1
        %s404 = smul.addr %s403, 256
        %s405 = scalar_lea.vmem [#allocation6], %s404
        // Predicated region
        $region61: #{tpu_custom_call.1} parent=55 // pred_check
          %p406 = pneg %p90
        $region62: #{tpu_custom_call.1} parent=55 // pred_check_branch
          %408 = sbr.rel (%p406) target = $region64
        $region63: #{tpu_custom_call.1} parent=55 // pred_region
          %409 = dma.done %s402, 4096
        $region64: #{tpu_custom_call.1} parent=55 // pred_fallthru
          _
        // Predicated region
        $region65: #{tpu_custom_call.1} parent=55 // pred_check
          %p410 = pneg %p111
        $region66: #{tpu_custom_call.1} parent=55 // pred_check_branch
          %412 = sbr.rel (%p410) target = $region68
        $region67: #{tpu_custom_call.1} parent=55 // pred_region
          %413 = dma.done [#allocation7], 24576
        $region68: #{tpu_custom_call.1} parent=55 // pred_fallthru
          _
        // Predicated region
        $region69: #{tpu_custom_call.1} parent=55 // pred_check
          %p414 = pneg %p132
        $region70: #{tpu_custom_call.1} parent=55 // pred_check_branch
          %416 = sbr.rel (%p414) target = $region72
        $region71: #{tpu_custom_call.1} parent=55 // pred_region
          %417 = dma.done [#allocation10], 8192
        $region72: #{tpu_custom_call.1} parent=55 // pred_fallthru
          _
        // Predicated region
        $region73: #{tpu_custom_call.1} parent=55 // pred_check
          %p418 = pneg %p153
        $region74: #{tpu_custom_call.1} parent=55 // pred_check_branch
          %420 = sbr.rel (%p418) target = $region76
        $region75: #{tpu_custom_call.1} parent=55 // pred_region
          %421 = dma.done [#allocation10], 16384
        $region76: #{tpu_custom_call.1} parent=55 // pred_fallthru
          _
        // Predicated region
        $region77: #{tpu_custom_call.1} parent=55 // pred_check
          %p422 = pneg %p174
        $region78: #{tpu_custom_call.1} parent=55 // pred_check_branch
          %424 = sbr.rel (%p422) target = $region80
        $region79: #{tpu_custom_call.1} parent=55 // pred_region
          %425 = dma.done [#allocation13], 16384
        $region80: #{tpu_custom_call.1} parent=55 // pred_fallthru
          _
        %s426 = sand.u32 %s51, 1
        %s427 = scalar_lea.sflag [#allocation4], %s426
        %s428 = sand.u32 %s51, 1
        %s429 = smul.addr %s428, 256
        %s430 = scalar_lea.vmem [#allocation3], %s429
        %p431 = pneg %p64
        %p432 = pneg %p61
        %s433 = sand.u32 %s31, 1
        %s434 = scalar_lea.sflag [#allocation7], %s433
        %s435 = sand.u32 %s77, 1
        %s436 = smul.addr %s435, 256
        %s437 = scalar_lea.vmem [#allocation6], %s436
        %p438 = pneg %p90
        %p439 = pneg %p87
        %p440 = pneg %p111
        %p441 = pneg %p108
        %p442 = pneg %p132
        %p443 = pneg %p129
        %p444 = pneg %p153
        %p445 = pneg %p150
        %p446 = pneg %p174
        %p447 = pneg %p171
        %p448 = pneg %p195
        %p449 = pneg %p192
        %p450 = pneg %p216
        %p451 = pneg %p213
        %p452 = pneg %p237
        %p453 = pneg %p234
        %p454 = pneg %p263
        %p455 = pneg %p260
        %s456 = sand.u32 %s250, 1
        %s457 = scalar_lea.sflag [#allocation5], %s456
        %s458 = sand.u32 %s250, 1
        %s459 = smul.addr %s458, 256
        %s460 = scalar_lea.vmem [#allocation14], %s459
        %p462 = scmp.eq.s32.totalorder %s36, 0
        // Predicated region
        $region81: #{tpu_custom_call.1} parent=55 // pred_check
          %p463 = pneg %p462
        $region82: #{tpu_custom_call.1} parent=55 // pred_check_branch
          %465 = sbr.rel (%p463) target = $region84
        $region83: #{tpu_custom_call.1} parent=55 // pred_region
          %v466 = vld [vmem:[%s396] sm:$0xff]
          %v467 = vld [vmem:[%s396 + $0x8] sm:$0xff]
          %v468 = vld [vmem:[%s396 + $0x10] sm:$0xff]
          %v469 = vld [vmem:[%s396 + $0x18] sm:$0xff]
          %v470 = vld [vmem:[%s396 + $0x20] sm:$0xff]
          %v471 = vld [vmem:[%s396 + $0x28] sm:$0xff]
          %v472 = vld [vmem:[%s396 + $0x30] sm:$0xff]
          %v473 = vld [vmem:[%s396 + $0x38] sm:$0xff]
          %v474 = vld [vmem:[%s396 + $0x40] sm:$0xff]
          %v475 = vld [vmem:[%s396 + $0x48] sm:$0xff]
          %v476 = vld [vmem:[%s396 + $0x50] sm:$0xff]
          %v477 = vld [vmem:[%s396 + $0x58] sm:$0xff]
          %v478 = vld [vmem:[%s396 + $0x60] sm:$0xff]
          %v479 = vld [vmem:[%s396 + $0x68] sm:$0xff]
          %v480 = vld [vmem:[%s396 + $0x70] sm:$0xff]
          %v481 = vld [vmem:[%s396 + $0x78] sm:$0xff]
          %v482 = vld [vmem:[%s396 + $0x80] sm:$0xff]
          %v483 = vld [vmem:[%s396 + $0x88] sm:$0xff]
          %v484 = vld [vmem:[%s396 + $0x90] sm:$0xff]
          %v485 = vld [vmem:[%s396 + $0x98] sm:$0xff]
          %v486 = vld [vmem:[%s396 + $0xa0] sm:$0xff]
          %v487 = vld [vmem:[%s396 + $0xa8] sm:$0xff]
          %v488 = vld [vmem:[%s396 + $0xb0] sm:$0xff]
          %v489 = vld [vmem:[%s396 + $0xb8] sm:$0xff]
          %v490 = vld [vmem:[%s396 + $0xc0] sm:$0xff]
          %v491 = vld [vmem:[%s396 + $0xc8] sm:$0xff]
          %v492 = vld [vmem:[%s396 + $0xd0] sm:$0xff]
          %v493 = vld [vmem:[%s396 + $0xd8] sm:$0xff]
          %v494 = vld [vmem:[%s396 + $0xe0] sm:$0xff]
          %v495 = vld [vmem:[%s396 + $0xe8] sm:$0xff]
          %v496 = vld [vmem:[%s396 + $0xf0] sm:$0xff]
          %v497 = vld [vmem:[%s396 + $0xf8] sm:$0xff]
          %498 = vst [vmem:[#allocation2] sm:$0xff] %v466
          %499 = vst [vmem:[#allocation2 + $0x8] sm:$0xff] %v467
          %500 = vst [vmem:[#allocation2 + $0x10] sm:$0xff] %v468
          %501 = vst [vmem:[#allocation2 + $0x18] sm:$0xff] %v469
          %502 = vst [vmem:[#allocation2 + $0x20] sm:$0xff] %v470
          %503 = vst [vmem:[#allocation2 + $0x28] sm:$0xff] %v471
          %504 = vst [vmem:[#allocation2 + $0x30] sm:$0xff] %v472
          %505 = vst [vmem:[#allocation2 + $0x38] sm:$0xff] %v473
          %506 = vst [vmem:[#allocation2 + $0x40] sm:$0xff] %v474
          %507 = vst [vmem:[#allocation2 + $0x48] sm:$0xff] %v475
          %508 = vst [vmem:[#allocation2 + $0x50] sm:$0xff] %v476
          %509 = vst [vmem:[#allocation2 + $0x58] sm:$0xff] %v477
          %510 = vst [vmem:[#allocation2 + $0x60] sm:$0xff] %v478
          %511 = vst [vmem:[#allocation2 + $0x68] sm:$0xff] %v479
          %512 = vst [vmem:[#allocation2 + $0x70] sm:$0xff] %v480
          %513 = vst [vmem:[#allocation2 + $0x78] sm:$0xff] %v481
          %514 = vst [vmem:[#allocation2 + $0x80] sm:$0xff] %v482
          %515 = vst [vmem:[#allocation2 + $0x88] sm:$0xff] %v483
          %516 = vst [vmem:[#allocation2 + $0x90] sm:$0xff] %v484
          %517 = vst [vmem:[#allocation2 + $0x98] sm:$0xff] %v485
          %518 = vst [vmem:[#allocation2 + $0xa0] sm:$0xff] %v486
          %519 = vst [vmem:[#allocation2 + $0xa8] sm:$0xff] %v487
          %520 = vst [vmem:[#allocation2 + $0xb0] sm:$0xff] %v488
          %521 = vst [vmem:[#allocation2 + $0xb8] sm:$0xff] %v489
          %522 = vst [vmem:[#allocation2 + $0xc0] sm:$0xff] %v490
          %523 = vst [vmem:[#allocation2 + $0xc8] sm:$0xff] %v491
          %524 = vst [vmem:[#allocation2 + $0xd0] sm:$0xff] %v492
          %525 = vst [vmem:[#allocation2 + $0xd8] sm:$0xff] %v493
          %526 = vst [vmem:[#allocation2 + $0xe0] sm:$0xff] %v494
          %527 = vst [vmem:[#allocation2 + $0xe8] sm:$0xff] %v495
          %528 = vst [vmem:[#allocation2 + $0xf0] sm:$0xff] %v496
          %529 = vst [vmem:[#allocation2 + $0xf8] sm:$0xff] %v497
        $region84: #{tpu_custom_call.1} parent=55 // pred_fallthru
          _
        %v530 = vld [vmem:[#allocation2] sm:$0xff]
        %v531 = vld [vmem:[#allocation2 + $0x8] sm:$0xff]
        %v532 = vld [vmem:[#allocation2 + $0x10] sm:$0xff]
        %v533 = vld [vmem:[#allocation2 + $0x18] sm:$0xff]
        %v534 = vld [vmem:[#allocation2 + $0x20] sm:$0xff]
        %v535 = vld [vmem:[#allocation2 + $0x28] sm:$0xff]
        %v536 = vld [vmem:[#allocation2 + $0x30] sm:$0xff]
        %v537 = vld [vmem:[#allocation2 + $0x38] sm:$0xff]
        %v538 = vld [vmem:[#allocation2 + $0x40] sm:$0xff]
        %v539 = vld [vmem:[#allocation2 + $0x48] sm:$0xff]
        %v540 = vld [vmem:[#allocation2 + $0x50] sm:$0xff]
        %v541 = vld [vmem:[#allocation2 + $0x58] sm:$0xff]
        %v542 = vld [vmem:[#allocation2 + $0x60] sm:$0xff]
        %v543 = vld [vmem:[#allocation2 + $0x68] sm:$0xff]
        %v544 = vld [vmem:[#allocation2 + $0x70] sm:$0xff]
        %v545 = vld [vmem:[#allocation2 + $0x78] sm:$0xff]
        %v546 = vld [vmem:[#allocation2 + $0x80] sm:$0xff]
        %v547 = vld [vmem:[#allocation2 + $0x88] sm:$0xff]
        %v548 = vld [vmem:[#allocation2 + $0x90] sm:$0xff]
        %v549 = vld [vmem:[#allocation2 + $0x98] sm:$0xff]
        %v550 = vld [vmem:[#allocation2 + $0xa0] sm:$0xff]
        %v551 = vld [vmem:[#allocation2 + $0xa8] sm:$0xff]
        %v552 = vld [vmem:[#allocation2 + $0xb0] sm:$0xff]
        %v553 = vld [vmem:[#allocation2 + $0xb8] sm:$0xff]
        %v554 = vld [vmem:[#allocation2 + $0xc0] sm:$0xff]
        %v555 = vld [vmem:[#allocation2 + $0xc8] sm:$0xff]
        %v556 = vld [vmem:[#allocation2 + $0xd0] sm:$0xff]
        %v557 = vld [vmem:[#allocation2 + $0xd8] sm:$0xff]
        %v558 = vld [vmem:[#allocation2 + $0xe0] sm:$0xff]
        %v559 = vld [vmem:[#allocation2 + $0xe8] sm:$0xff]
        %v560 = vld [vmem:[#allocation2 + $0xf0] sm:$0xff]
        %v561 = vld [vmem:[#allocation2 + $0xf8] sm:$0xff]
        %v562 = vpack.c.bf16 %v532, %v530
        %v563 = vpack.c.bf16 %v533, %v531
        %v564 = vpack.c.bf16 %v536, %v534
        %v565 = vpack.c.bf16 %v537, %v535
        %v566 = vpack.c.bf16 %v540, %v538
        %v567 = vpack.c.bf16 %v541, %v539
        %v568 = vpack.c.bf16 %v544, %v542
        %v569 = vpack.c.bf16 %v545, %v543
        %v570 = vpack.c.bf16 %v548, %v546
        %v571 = vpack.c.bf16 %v549, %v547
        %v572 = vpack.c.bf16 %v552, %v550
        %v573 = vpack.c.bf16 %v553, %v551
        %v574 = vpack.c.bf16 %v556, %v554
        %v575 = vpack.c.bf16 %v557, %v555
        %v576 = vpack.c.bf16 %v560, %v558
        %v577 = vpack.c.bf16 %v561, %v559
        %s578 = smul.u32 %s36, 192
        %s579 = smul.addr %s578, 4
        %s580 = scalar_lea.vmem [#allocation8], %s579
        %v581 = vld [vmem:[%s580] sm:$0xff]
        %v582 = vld [vmem:[%s580 + $0x8] sm:$0xff]
        %v583 = vld [vmem:[%s580 + $0x10] sm:$0xff]
        %v584 = vld [vmem:[%s580 + $0x18] sm:$0xff]
        %v585 = vld [vmem:[%s580 + $0x20] sm:$0xff]
        %v586 = vld [vmem:[%s580 + $0x28] sm:$0xff]
        %v587 = vld [vmem:[%s580 + $0x30] sm:$0xff]
        %v588 = vld [vmem:[%s580 + $0x38] sm:$0xff]
        %v589 = vld [vmem:[%s580 + $0x40] sm:$0xff]
        %v590 = vld [vmem:[%s580 + $0x48] sm:$0xff]
        %v591 = vld [vmem:[%s580 + $0x50] sm:$0xff]
        %v592 = vld [vmem:[%s580 + $0x58] sm:$0xff]
        %v593 = vld [vmem:[%s580 + $0x60] sm:$0xff]
        %v594 = vld [vmem:[%s580 + $0x68] sm:$0xff]
        %v595 = vld [vmem:[%s580 + $0x70] sm:$0xff]
        %v596 = vld [vmem:[%s580 + $0x78] sm:$0xff]
        %v597 = vld [vmem:[%s580 + $0x80] sm:$0xff]
        %v598 = vld [vmem:[%s580 + $0x88] sm:$0xff]
        %v599 = vld [vmem:[%s580 + $0x90] sm:$0xff]
        %v600 = vld [vmem:[%s580 + $0x98] sm:$0xff]
        %v601 = vld [vmem:[%s580 + $0xa0] sm:$0xff]
        %v602 = vld [vmem:[%s580 + $0xa8] sm:$0xff]
        %v603 = vld [vmem:[%s580 + $0xb0] sm:$0xff]
        %v604 = vld [vmem:[%s580 + $0xb8] sm:$0xff]
        %v605 = vld [vmem:[%s580 + $0xc0] sm:$0xff]
        %v606 = vld [vmem:[%s580 + $0xc8] sm:$0xff]
        %v607 = vld [vmem:[%s580 + $0xd0] sm:$0xff]
        %v608 = vld [vmem:[%s580 + $0xd8] sm:$0xff]
        %v609 = vld [vmem:[%s580 + $0xe0] sm:$0xff]
        %v610 = vld [vmem:[%s580 + $0xe8] sm:$0xff]
        %v611 = vld [vmem:[%s580 + $0xf0] sm:$0xff]
        %v612 = vld [vmem:[%s580 + $0xf8] sm:$0xff]
        %v613 = vld [vmem:[%s580 + $0x100] sm:$0xff]
        %v614 = vld [vmem:[%s580 + $0x108] sm:$0xff]
        %v615 = vld [vmem:[%s580 + $0x110] sm:$0xff]
        %v616 = vld [vmem:[%s580 + $0x118] sm:$0xff]
        %v617 = vld [vmem:[%s580 + $0x120] sm:$0xff]
        %v618 = vld [vmem:[%s580 + $0x128] sm:$0xff]
        %v619 = vld [vmem:[%s580 + $0x130] sm:$0xff]
        %v620 = vld [vmem:[%s580 + $0x138] sm:$0xff]
        %v621 = vld [vmem:[%s580 + $0x140] sm:$0xff]
        %v622 = vld [vmem:[%s580 + $0x148] sm:$0xff]
        %v623 = vld [vmem:[%s580 + $0x150] sm:$0xff]
        %v624 = vld [vmem:[%s580 + $0x158] sm:$0xff]
        %v625 = vld [vmem:[%s580 + $0x160] sm:$0xff]
        %v626 = vld [vmem:[%s580 + $0x168] sm:$0xff]
        %v627 = vld [vmem:[%s580 + $0x170] sm:$0xff]
        %v628 = vld [vmem:[%s580 + $0x178] sm:$0xff]
        %v629 = vld [vmem:[%s580 + $0x180] sm:$0xff]
        %v630 = vld [vmem:[%s580 + $0x188] sm:$0xff]
        %v631 = vld [vmem:[%s580 + $0x190] sm:$0xff]
        %v632 = vld [vmem:[%s580 + $0x198] sm:$0xff]
        %v633 = vld [vmem:[%s580 + $0x1a0] sm:$0xff]
        %v634 = vld [vmem:[%s580 + $0x1a8] sm:$0xff]
        %v635 = vld [vmem:[%s580 + $0x1b0] sm:$0xff]
        %v636 = vld [vmem:[%s580 + $0x1b8] sm:$0xff]
        %v637 = vld [vmem:[%s580 + $0x1c0] sm:$0xff]
        %v638 = vld [vmem:[%s580 + $0x1c8] sm:$0xff]
        %v639 = vld [vmem:[%s580 + $0x1d0] sm:$0xff]
        %v640 = vld [vmem:[%s580 + $0x1d8] sm:$0xff]
        %v641 = vld [vmem:[%s580 + $0x1e0] sm:$0xff]
        %v642 = vld [vmem:[%s580 + $0x1e8] sm:$0xff]
        %v643 = vld [vmem:[%s580 + $0x1f0] sm:$0xff]
        %v644 = vld [vmem:[%s580 + $0x1f8] sm:$0xff]
        %v645 = vld [vmem:[%s580 + $0x200] sm:$0xff]
        %v646 = vld [vmem:[%s580 + $0x208] sm:$0xff]
        %v647 = vld [vmem:[%s580 + $0x210] sm:$0xff]
        %v648 = vld [vmem:[%s580 + $0x218] sm:$0xff]
        %v649 = vld [vmem:[%s580 + $0x220] sm:$0xff]
        %v650 = vld [vmem:[%s580 + $0x228] sm:$0xff]
        %v651 = vld [vmem:[%s580 + $0x230] sm:$0xff]
        %v652 = vld [vmem:[%s580 + $0x238] sm:$0xff]
        %v653 = vld [vmem:[%s580 + $0x240] sm:$0xff]
        %v654 = vld [vmem:[%s580 + $0x248] sm:$0xff]
        %v655 = vld [vmem:[%s580 + $0x250] sm:$0xff]
        %v656 = vld [vmem:[%s580 + $0x258] sm:$0xff]
        %v657 = vld [vmem:[%s580 + $0x260] sm:$0xff]
        %v658 = vld [vmem:[%s580 + $0x268] sm:$0xff]
        %v659 = vld [vmem:[%s580 + $0x270] sm:$0xff]
        %v660 = vld [vmem:[%s580 + $0x278] sm:$0xff]
        %v661 = vld [vmem:[%s580 + $0x280] sm:$0xff]
        %v662 = vld [vmem:[%s580 + $0x288] sm:$0xff]
        %v663 = vld [vmem:[%s580 + $0x290] sm:$0xff]
        %v664 = vld [vmem:[%s580 + $0x298] sm:$0xff]
        %v665 = vld [vmem:[%s580 + $0x2a0] sm:$0xff]
        %v666 = vld [vmem:[%s580 + $0x2a8] sm:$0xff]
        %v667 = vld [vmem:[%s580 + $0x2b0] sm:$0xff]
        %v668 = vld [vmem:[%s580 + $0x2b8] sm:$0xff]
        %v669 = vld [vmem:[%s580 + $0x2c0] sm:$0xff]
        %v670 = vld [vmem:[%s580 + $0x2c8] sm:$0xff]
        %v671 = vld [vmem:[%s580 + $0x2d0] sm:$0xff]
        %v672 = vld [vmem:[%s580 + $0x2d8] sm:$0xff]
        %v673 = vld [vmem:[%s580 + $0x2e0] sm:$0xff]
        %v674 = vld [vmem:[%s580 + $0x2e8] sm:$0xff]
        %v675 = vld [vmem:[%s580 + $0x2f0] sm:$0xff]
        %v676 = vld [vmem:[%s580 + $0x2f8] sm:$0xff]
        %s677 = smul.u32 %s36, 6
        %s678 = scalar_lea.vmem %s6, %s677
        %v679 = vld [vmem:[%s678] sm:$0x3f]
        %v681 = vlaneseq
        %v682 = vshrl.u32 %v681, 7
        %v683 = vsub.s32 0, %v682
        %v684 = vrot.slane %v679, %v683
        %v685 = vlaneseq
        %v686 = vshrl.u32 %v685, 7
        %v687 = vsub.s32 1, %v686
        %v688 = vrot.slane %v679, %v687
        %v689 = vlaneseq
        %v690 = vshrl.u32 %v689, 7
        %v691 = vsub.s32 2, %v690
        %v692 = vrot.slane %v679, %v691
        %v693 = vlaneseq
        %v694 = vshrl.u32 %v693, 7
        %v695 = vsub.s32 3, %v694
        %v696 = vrot.slane %v679, %v695
        %v697 = vlaneseq
        %v698 = vshrl.u32 %v697, 7
        %v699 = vsub.s32 4, %v698
        %v700 = vrot.slane %v679, %v699
        %v701 = vlaneseq
        %v702 = vshrl.u32 %v701, 7
        %v703 = vsub.s32 5, %v702
        %v704 = vrot.slane %v679, %v703
        %v807 = vunpack.c.l.b16 %v581
        %v808 = vunpack.c.h.b16 %v581
        %v809 = vunpack.c.l.b16 %v582
        %v810 = vunpack.c.h.b16 %v582
        %v811 = vunpack.c.l.b16 %v583
        %v812 = vunpack.c.h.b16 %v583
        %v813 = vunpack.c.l.b16 %v584
        %v814 = vunpack.c.h.b16 %v584
        %v815 = vunpack.c.l.b16 %v585
        %v816 = vunpack.c.h.b16 %v585
        %v817 = vunpack.c.l.b16 %v586
        %v818 = vunpack.c.h.b16 %v586
        %v819 = vunpack.c.l.b16 %v587
        %v820 = vunpack.c.h.b16 %v587
        %v821 = vunpack.c.l.b16 %v588
        %v822 = vunpack.c.h.b16 %v588
        %v823 = vunpack.c.l.b16 %v589
        %v824 = vunpack.c.h.b16 %v589
        %v825 = vunpack.c.l.b16 %v590
        %v826 = vunpack.c.h.b16 %v590
        %v827 = vunpack.c.l.b16 %v591
        %v828 = vunpack.c.h.b16 %v591
        %v829 = vunpack.c.l.b16 %v592
        %v830 = vunpack.c.h.b16 %v592
        %v831 = vunpack.c.l.b16 %v593
        %v832 = vunpack.c.h.b16 %v593
        %v833 = vunpack.c.l.b16 %v594
        %v834 = vunpack.c.h.b16 %v594
        %v835 = vunpack.c.l.b16 %v595
        %v836 = vunpack.c.h.b16 %v595
        %v837 = vunpack.c.l.b16 %v596
        %v838 = vunpack.c.h.b16 %v596
        %v839 = vunpack.c.l.b16 %v597
        %v840 = vunpack.c.h.b16 %v597
        %v841 = vunpack.c.l.b16 %v598
        %v842 = vunpack.c.h.b16 %v598
        %v843 = vunpack.c.l.b16 %v599
        %v844 = vunpack.c.h.b16 %v599
        %v845 = vunpack.c.l.b16 %v600
        %v846 = vunpack.c.h.b16 %v600
        %v847 = vunpack.c.l.b16 %v601
        %v848 = vunpack.c.h.b16 %v601
        %v849 = vunpack.c.l.b16 %v602
        %v850 = vunpack.c.h.b16 %v602
        %v851 = vunpack.c.l.b16 %v603
        %v852 = vunpack.c.h.b16 %v603
        %v853 = vunpack.c.l.b16 %v604
        %v854 = vunpack.c.h.b16 %v604
        %v855 = vunpack.c.l.b16 %v605
        %v856 = vunpack.c.h.b16 %v605
        %v857 = vunpack.c.l.b16 %v606
        %v858 = vunpack.c.h.b16 %v606
        %v859 = vunpack.c.l.b16 %v607
        %v860 = vunpack.c.h.b16 %v607
        %v861 = vunpack.c.l.b16 %v608
        %v862 = vunpack.c.h.b16 %v608
        %v863 = vunpack.c.l.b16 %v609
        %v864 = vunpack.c.h.b16 %v609
        %v865 = vunpack.c.l.b16 %v610
        %v866 = vunpack.c.h.b16 %v610
        %v867 = vunpack.c.l.b16 %v611
        %v868 = vunpack.c.h.b16 %v611
        %v869 = vunpack.c.l.b16 %v612
        %v870 = vunpack.c.h.b16 %v612
        %v871 = vunpack.c.l.b16 %v613
        %v872 = vunpack.c.h.b16 %v613
        %v873 = vunpack.c.l.b16 %v614
        %v874 = vunpack.c.h.b16 %v614
        %v875 = vunpack.c.l.b16 %v615
        %v876 = vunpack.c.h.b16 %v615
        %v877 = vunpack.c.l.b16 %v616
        %v878 = vunpack.c.h.b16 %v616
        %v879 = vunpack.c.l.b16 %v617
        %v880 = vunpack.c.h.b16 %v617
        %v881 = vunpack.c.l.b16 %v618
        %v882 = vunpack.c.h.b16 %v618
        %v883 = vunpack.c.l.b16 %v619
        %v884 = vunpack.c.h.b16 %v619
        %v885 = vunpack.c.l.b16 %v620
        %v886 = vunpack.c.h.b16 %v620
        %v887 = vunpack.c.l.b16 %v621
        %v888 = vunpack.c.h.b16 %v621
        %v889 = vunpack.c.l.b16 %v622
        %v890 = vunpack.c.h.b16 %v622
        %v891 = vunpack.c.l.b16 %v623
        %v892 = vunpack.c.h.b16 %v623
        %v893 = vunpack.c.l.b16 %v624
        %v894 = vunpack.c.h.b16 %v624
        %v895 = vunpack.c.l.b16 %v625
        %v896 = vunpack.c.h.b16 %v625
        %v897 = vunpack.c.l.b16 %v626
        %v898 = vunpack.c.h.b16 %v626
        %v899 = vunpack.c.l.b16 %v627
        %v900 = vunpack.c.h.b16 %v627
        %v901 = vunpack.c.l.b16 %v628
        %v902 = vunpack.c.h.b16 %v628
        %v903 = vunpack.c.l.b16 %v629
        %v904 = vunpack.c.h.b16 %v629
        %v905 = vunpack.c.l.b16 %v630
        %v906 = vunpack.c.h.b16 %v630
        %v907 = vunpack.c.l.b16 %v631
        %v908 = vunpack.c.h.b16 %v631
        %v909 = vunpack.c.l.b16 %v632
        %v910 = vunpack.c.h.b16 %v632
        %v911 = vunpack.c.l.b16 %v633
        %v912 = vunpack.c.h.b16 %v633
        %v913 = vunpack.c.l.b16 %v634
        %v914 = vunpack.c.h.b16 %v634
        %v915 = vunpack.c.l.b16 %v635
        %v916 = vunpack.c.h.b16 %v635
        %v917 = vunpack.c.l.b16 %v636
        %v918 = vunpack.c.h.b16 %v636
        %v919 = vunpack.c.l.b16 %v637
        %v920 = vunpack.c.h.b16 %v637
        %v921 = vunpack.c.l.b16 %v638
        %v922 = vunpack.c.h.b16 %v638
        %v923 = vunpack.c.l.b16 %v639
        %v924 = vunpack.c.h.b16 %v639
        %v925 = vunpack.c.l.b16 %v640
        %v926 = vunpack.c.h.b16 %v640
        %v927 = vunpack.c.l.b16 %v641
        %v928 = vunpack.c.h.b16 %v641
        %v929 = vunpack.c.l.b16 %v642
        %v930 = vunpack.c.h.b16 %v642
        %v931 = vunpack.c.l.b16 %v643
        %v932 = vunpack.c.h.b16 %v643
        %v933 = vunpack.c.l.b16 %v644
        %v934 = vunpack.c.h.b16 %v644
        %v935 = vunpack.c.l.b16 %v645
        %v936 = vunpack.c.h.b16 %v645
        %v937 = vunpack.c.l.b16 %v646
        %v938 = vunpack.c.h.b16 %v646
        %v939 = vunpack.c.l.b16 %v647
        %v940 = vunpack.c.h.b16 %v647
        %v941 = vunpack.c.l.b16 %v648
        %v942 = vunpack.c.h.b16 %v648
        %v943 = vunpack.c.l.b16 %v649
        %v944 = vunpack.c.h.b16 %v649
        %v945 = vunpack.c.l.b16 %v650
        %v946 = vunpack.c.h.b16 %v650
        %v947 = vunpack.c.l.b16 %v651
        %v948 = vunpack.c.h.b16 %v651
        %v949 = vunpack.c.l.b16 %v652
        %v950 = vunpack.c.h.b16 %v652
        %v951 = vunpack.c.l.b16 %v653
        %v952 = vunpack.c.h.b16 %v653
        %v953 = vunpack.c.l.b16 %v654
        %v954 = vunpack.c.h.b16 %v654
        %v955 = vunpack.c.l.b16 %v655
        %v956 = vunpack.c.h.b16 %v655
        %v957 = vunpack.c.l.b16 %v656
        %v958 = vunpack.c.h.b16 %v656
        %v959 = vunpack.c.l.b16 %v657
        %v960 = vunpack.c.h.b16 %v657
        %v961 = vunpack.c.l.b16 %v658
        %v962 = vunpack.c.h.b16 %v658
        %v963 = vunpack.c.l.b16 %v659
        %v964 = vunpack.c.h.b16 %v659
        %v965 = vunpack.c.l.b16 %v660
        %v966 = vunpack.c.h.b16 %v660
        %v967 = vunpack.c.l.b16 %v661
        %v968 = vunpack.c.h.b16 %v661
        %v969 = vunpack.c.l.b16 %v662
        %v970 = vunpack.c.h.b16 %v662
        %v971 = vunpack.c.l.b16 %v663
        %v972 = vunpack.c.h.b16 %v663
        %v973 = vunpack.c.l.b16 %v664
        %v974 = vunpack.c.h.b16 %v664
        %v975 = vunpack.c.l.b16 %v665
        %v976 = vunpack.c.h.b16 %v665
        %v977 = vunpack.c.l.b16 %v666
        %v978 = vunpack.c.h.b16 %v666
        %v979 = vunpack.c.l.b16 %v667
        %v980 = vunpack.c.h.b16 %v667
        %v981 = vunpack.c.l.b16 %v668
        %v982 = vunpack.c.h.b16 %v668
        %v983 = vunpack.c.l.b16 %v669
        %v984 = vunpack.c.h.b16 %v669
        %v985 = vunpack.c.l.b16 %v670
        %v986 = vunpack.c.h.b16 %v670
        %v987 = vunpack.c.l.b16 %v671
        %v988 = vunpack.c.h.b16 %v671
        %v989 = vunpack.c.l.b16 %v672
        %v990 = vunpack.c.h.b16 %v672
        %v991 = vunpack.c.l.b16 %v673
        %v992 = vunpack.c.h.b16 %v673
        %v993 = vunpack.c.l.b16 %v674
        %v994 = vunpack.c.h.b16 %v674
        %v995 = vunpack.c.l.b16 %v675
        %v996 = vunpack.c.h.b16 %v675
        %v997 = vunpack.c.l.b16 %v676
        %v998 = vunpack.c.h.b16 %v676
        %v999 = vpack.c.b16 %v813, %v807
        %v1000 = vpack.c.b16 %v814, %v808
        %v1001 = vpack.c.b16 %v815, %v809
        %v1002 = vpack.c.b16 %v816, %v810
        %v1003 = vpack.c.b16 %v817, %v811
        %v1004 = vpack.c.b16 %v818, %v812
        %v1005 = vpack.c.b16 %v825, %v819
        %v1006 = vpack.c.b16 %v826, %v820
        %v1007 = vpack.c.b16 %v827, %v821
        %v1008 = vpack.c.b16 %v828, %v822
        %v1009 = vpack.c.b16 %v829, %v823
        %v1010 = vpack.c.b16 %v830, %v824
        %v1011 = vpack.c.b16 %v837, %v831
        %v1012 = vpack.c.b16 %v838, %v832
        %v1013 = vpack.c.b16 %v839, %v833
        %v1014 = vpack.c.b16 %v840, %v834
        %v1015 = vpack.c.b16 %v841, %v835
        %v1016 = vpack.c.b16 %v842, %v836
        %v1017 = vpack.c.b16 %v849, %v843
        %v1018 = vpack.c.b16 %v850, %v844
        %v1019 = vpack.c.b16 %v851, %v845
        %v1020 = vpack.c.b16 %v852, %v846
        %v1021 = vpack.c.b16 %v853, %v847
        %v1022 = vpack.c.b16 %v854, %v848
        %v1023 = vpack.c.b16 %v861, %v855
        %v1024 = vpack.c.b16 %v862, %v856
        %v1025 = vpack.c.b16 %v863, %v857
        %v1026 = vpack.c.b16 %v864, %v858
        %v1027 = vpack.c.b16 %v865, %v859
        %v1028 = vpack.c.b16 %v866, %v860
        %v1029 = vpack.c.b16 %v873, %v867
        %v1030 = vpack.c.b16 %v874, %v868
        %v1031 = vpack.c.b16 %v875, %v869
        %v1032 = vpack.c.b16 %v876, %v870
        %v1033 = vpack.c.b16 %v877, %v871
        %v1034 = vpack.c.b16 %v878, %v872
        %v1035 = vpack.c.b16 %v885, %v879
        %v1036 = vpack.c.b16 %v886, %v880
        %v1037 = vpack.c.b16 %v887, %v881
        %v1038 = vpack.c.b16 %v888, %v882
        %v1039 = vpack.c.b16 %v889, %v883
        %v1040 = vpack.c.b16 %v890, %v884
        %v1041 = vpack.c.b16 %v897, %v891
        %v1042 = vpack.c.b16 %v898, %v892
        %v1043 = vpack.c.b16 %v899, %v893
        %v1044 = vpack.c.b16 %v900, %v894
        %v1045 = vpack.c.b16 %v901, %v895
        %v1046 = vpack.c.b16 %v902, %v896
        %v1047 = vpack.c.b16 %v909, %v903
        %v1048 = vpack.c.b16 %v910, %v904
        %v1049 = vpack.c.b16 %v911, %v905
        %v1050 = vpack.c.b16 %v912, %v906
        %v1051 = vpack.c.b16 %v913, %v907
        %v1052 = vpack.c.b16 %v914, %v908
        %v1053 = vpack.c.b16 %v921, %v915
        %v1054 = vpack.c.b16 %v922, %v916
        %v1055 = vpack.c.b16 %v923, %v917
        %v1056 = vpack.c.b16 %v924, %v918
        %v1057 = vpack.c.b16 %v925, %v919
        %v1058 = vpack.c.b16 %v926, %v920
        %v1059 = vpack.c.b16 %v933, %v927
        %v1060 = vpack.c.b16 %v934, %v928
        %v1061 = vpack.c.b16 %v935, %v929
        %v1062 = vpack.c.b16 %v936, %v930
        %v1063 = vpack.c.b16 %v937, %v931
        %v1064 = vpack.c.b16 %v938, %v932
        %v1065 = vpack.c.b16 %v945, %v939
        %v1066 = vpack.c.b16 %v946, %v940
        %v1067 = vpack.c.b16 %v947, %v941
        %v1068 = vpack.c.b16 %v948, %v942
        %v1069 = vpack.c.b16 %v949, %v943
        %v1070 = vpack.c.b16 %v950, %v944
        %v1071 = vpack.c.b16 %v957, %v951
        %v1072 = vpack.c.b16 %v958, %v952
        %v1073 = vpack.c.b16 %v959, %v953
        %v1074 = vpack.c.b16 %v960, %v954
        %v1075 = vpack.c.b16 %v961, %v955
        %v1076 = vpack.c.b16 %v962, %v956
        %v1077 = vpack.c.b16 %v969, %v963
        %v1078 = vpack.c.b16 %v970, %v964
        %v1079 = vpack.c.b16 %v971, %v965
        %v1080 = vpack.c.b16 %v972, %v966
        %v1081 = vpack.c.b16 %v973, %v967
        %v1082 = vpack.c.b16 %v974, %v968
        %v1083 = vpack.c.b16 %v981, %v975
        %v1084 = vpack.c.b16 %v982, %v976
        %v1085 = vpack.c.b16 %v983, %v977
        %v1086 = vpack.c.b16 %v984, %v978
        %v1087 = vpack.c.b16 %v985, %v979
        %v1088 = vpack.c.b16 %v986, %v980
        %v1089 = vpack.c.b16 %v993, %v987
        %v1090 = vpack.c.b16 %v994, %v988
        %v1091 = vpack.c.b16 %v995, %v989
        %v1092 = vpack.c.b16 %v996, %v990
        %v1093 = vpack.c.b16 %v997, %v991
        %v1094 = vpack.c.b16 %v998, %v992
        %1191 = vmatprep.subr.bf16.mxu0 %v1000
        %1192 = vmatpush1.bf16.msra.mxu0 %v999
        %1193 = vmatprep.subr.bf16.mxu0 %v1006
        %1194 = vmatpush1.bf16.msra.mxu0 %v1005
        %1195 = vmatprep.subr.bf16.mxu0 %v1012
        %1196 = vmatpush1.bf16.msra.mxu0 %v1011
        %1197 = vmatprep.subr.bf16.mxu0 %v1018
        %1198 = vmatpush1.bf16.msra.mxu0 %v1017
        %1199 = vmatprep.subr.bf16.mxu0 %v1024
        %1200 = vmatpush1.bf16.msra.mxu0 %v1023
        %1201 = vmatprep.subr.bf16.mxu0 %v1030
        %1202 = vmatpush1.bf16.msra.mxu0 %v1029
        %1203 = vmatprep.subr.bf16.mxu0 %v1036
        %1204 = vmatpush1.bf16.msra.mxu0 %v1035
        %1205 = vmatprep.subr.bf16.mxu0 %v1042
        %1206 = vmatpush1.bf16.msra.mxu0 %v1041
        %1207 = vmatprep.subr.bf16.mxu0 %v1048
        %1208 = vmatpush1.bf16.msra.mxu0 %v1047
        %1209 = vmatprep.subr.bf16.mxu0 %v1054
        %1210 = vmatpush1.bf16.msra.mxu0 %v1053
        %1211 = vmatprep.subr.bf16.mxu0 %v1060
        %1212 = vmatpush1.bf16.msra.mxu0 %v1059
        %1213 = vmatprep.subr.bf16.mxu0 %v1066
        %1214 = vmatpush1.bf16.msra.mxu0 %v1065
        %1215 = vmatprep.subr.bf16.mxu0 %v1072
        %1216 = vmatpush1.bf16.msra.mxu0 %v1071
        %1217 = vmatprep.subr.bf16.mxu0 %v1078
        %1218 = vmatpush1.bf16.msra.mxu0 %v1077
        %1219 = vmatprep.subr.bf16.mxu0 %v1084
        %1220 = vmatpush1.bf16.msra.mxu0 %v1083
        %1221 = vmatprep.subr.bf16.mxu0 %v1090
        %1222 = vmatpush1.bf16.msra.mxu0 %v1089
        %1223 = vmatprep.mubr.bf16.mxu0 %v563
        %1224 = vmatmul.mubr.bf16.gmra.mrb[0].mxu0 %v562
        %v1225 = vpop.f32.mrb[0].mxu0
        %v1226 = vadd.f32 %v684, %v1225
        %v1227 = vpop.f32.mrb[0].mxu0
        %v1228 = vadd.f32 %v688, %v1227
        %v1229 = vpop.f32.mrb[0].mxu0
        %v1230 = vadd.f32 %v684, %v1229
        %v1231 = vpop.f32.mrb[0].mxu0
        %v1232 = vadd.f32 %v688, %v1231
        %1233 = vmatprep.mubr.bf16.mxu0 %v565
        %1234 = vmatmul.mubr.bf16.gmra.mrb[0].mxu0 %v564
        %v1235 = vpop.f32.mrb[0].mxu0
        %v1236 = vadd.f32 %v684, %v1235
        %v1237 = vpop.f32.mrb[0].mxu0
        %v1238 = vadd.f32 %v688, %v1237
        %v1239 = vpop.f32.mrb[0].mxu0
        %v1240 = vadd.f32 %v684, %v1239
        %v1241 = vpop.f32.mrb[0].mxu0
        %v1242 = vadd.f32 %v688, %v1241
        %1243 = vmatprep.mubr.bf16.mxu0 %v567
        %1244 = vmatmul.mubr.bf16.gmra.mrb[0].mxu0 %v566
        %v1245 = vpop.f32.mrb[0].mxu0
        %v1246 = vadd.f32 %v684, %v1245
        %v1247 = vpop.f32.mrb[0].mxu0
        %v1248 = vadd.f32 %v688, %v1247
        %v1249 = vpop.f32.mrb[0].mxu0
        %v1250 = vadd.f32 %v684, %v1249
        %v1251 = vpop.f32.mrb[0].mxu0
        %v1252 = vadd.f32 %v688, %v1251
        %1253 = vmatprep.mubr.bf16.mxu0 %v569
        %1254 = vmatmul.mubr.bf16.gmra.mrb[0].mxu0 %v568
        %v1255 = vpop.f32.mrb[0].mxu0
        %v1256 = vadd.f32 %v684, %v1255
        %v1257 = vpop.f32.mrb[0].mxu0
        %v1258 = vadd.f32 %v688, %v1257
        %v1259 = vpop.f32.mrb[0].mxu0
        %v1260 = vadd.f32 %v684, %v1259
        %v1261 = vpop.f32.mrb[0].mxu0
        %v1262 = vadd.f32 %v688, %v1261
        %1263 = vmatprep.mubr.bf16.mxu0 %v571
        %1264 = vmatmul.mubr.bf16.gmra.mrb[0].mxu0 %v570
        %v1265 = vpop.f32.mrb[0].mxu0
        %v1266 = vadd.f32 %v684, %v1265
        %v1267 = vpop.f32.mrb[0].mxu0
        %v1268 = vadd.f32 %v688, %v1267
        %v1269 = vpop.f32.mrb[0].mxu0
        %v1270 = vadd.f32 %v684, %v1269
        %v1271 = vpop.f32.mrb[0].mxu0
        %v1272 = vadd.f32 %v688, %v1271
        %1273 = vmatprep.mubr.bf16.mxu0 %v573
        %1274 = vmatmul.mubr.bf16.gmra.mrb[0].mxu0 %v572
        %v1275 = vpop.f32.mrb[0].mxu0
        %v1276 = vadd.f32 %v684, %v1275
        %v1277 = vpop.f32.mrb[0].mxu0
        %v1278 = vadd.f32 %v688, %v1277
        %v1279 = vpop.f32.mrb[0].mxu0
        %v1280 = vadd.f32 %v684, %v1279
        %v1281 = vpop.f32.mrb[0].mxu0
        %v1282 = vadd.f32 %v688, %v1281
        %1283 = vmatprep.mubr.bf16.mxu0 %v575
        %1284 = vmatmul.mubr.bf16.gmra.mrb[0].mxu0 %v574
        %v1285 = vpop.f32.mrb[0].mxu0
        %v1286 = vadd.f32 %v684, %v1285
        %v1287 = vpop.f32.mrb[0].mxu0
        %v1288 = vadd.f32 %v688, %v1287
        %v1289 = vpop.f32.mrb[0].mxu0
        %v1290 = vadd.f32 %v684, %v1289
        %v1291 = vpop.f32.mrb[0].mxu0
        %v1292 = vadd.f32 %v688, %v1291
        %1293 = vmatprep.mubr.bf16.mxu0 %v577
        %1294 = vmatmul.mubr.bf16.gmra.mrb[0].mxu0 %v576
        %v1295 = vpop.f32.mrb[0].mxu0
        %v1296 = vadd.f32 %v684, %v1295
        %v1297 = vpop.f32.mrb[0].mxu0
        %v1298 = vadd.f32 %v688, %v1297
        %v1299 = vpop.f32.mrb[0].mxu0
        %v1300 = vadd.f32 %v684, %v1299
        %v1301 = vpop.f32.mrb[0].mxu0
        %v1302 = vadd.f32 %v688, %v1301
        %1303 = vdwg.mxu0
        %1304 = vmatprep.subr.bf16.mxu0 %v1002
        %1305 = vmatpush1.bf16.msra.mxu0 %v1001
        %1306 = vmatprep.subr.bf16.mxu0 %v1008
        %1307 = vmatpush1.bf16.msra.mxu0 %v1007
        %1308 = vmatprep.subr.bf16.mxu0 %v1014
        %1309 = vmatpush1.bf16.msra.mxu0 %v1013
        %1310 = vmatprep.subr.bf16.mxu0 %v1020
        %1311 = vmatpush1.bf16.msra.mxu0 %v1019
        %1312 = vmatprep.subr.bf16.mxu0 %v1026
        %1313 = vmatpush1.bf16.msra.mxu0 %v1025
        %1314 = vmatprep.subr.bf16.mxu0 %v1032
        %1315 = vmatpush1.bf16.msra.mxu0 %v1031
        %1316 = vmatprep.subr.bf16.mxu0 %v1038
        %1317 = vmatpush1.bf16.msra.mxu0 %v1037
        %1318 = vmatprep.subr.bf16.mxu0 %v1044
        %1319 = vmatpush1.bf16.msra.mxu0 %v1043
        %1320 = vmatprep.subr.bf16.mxu0 %v1050
        %1321 = vmatpush1.bf16.msra.mxu0 %v1049
        %1322 = vmatprep.subr.bf16.mxu0 %v1056
        %1323 = vmatpush1.bf16.msra.mxu0 %v1055
        %1324 = vmatprep.subr.bf16.mxu0 %v1062
        %1325 = vmatpush1.bf16.msra.mxu0 %v1061
        %1326 = vmatprep.subr.bf16.mxu0 %v1068
        %1327 = vmatpush1.bf16.msra.mxu0 %v1067
        %1328 = vmatprep.subr.bf16.mxu0 %v1074
        %1329 = vmatpush1.bf16.msra.mxu0 %v1073
        %1330 = vmatprep.subr.bf16.mxu0 %v1080
        %1331 = vmatpush1.bf16.msra.mxu0 %v1079
        %1332 = vmatprep.subr.bf16.mxu0 %v1086
        %1333 = vmatpush1.bf16.msra.mxu0 %v1085
        %1334 = vmatprep.subr.bf16.mxu0 %v1092
        %1335 = vmatpush1.bf16.msra.mxu0 %v1091
        %1336 = vmatprep.mubr.bf16.mxu0 %v563
        %1337 = vmatmul.mubr.bf16.gmra.mrb[0].mxu0 %v562
        %v1338 = vpop.f32.mrb[0].mxu0
        %v1339 = vadd.f32 %v692, %v1338
        %v1340 = vpop.f32.mrb[0].mxu0
        %v1341 = vadd.f32 %v696, %v1340
        %v1342 = vpop.f32.mrb[0].mxu0
        %v1343 = vadd.f32 %v692, %v1342
        %v1344 = vpop.f32.mrb[0].mxu0
        %v1345 = vadd.f32 %v696, %v1344
        %1346 = vmatprep.mubr.bf16.mxu0 %v565
        %1347 = vmatmul.mubr.bf16.gmra.mrb[0].mxu0 %v564
        %v1348 = vpop.f32.mrb[0].mxu0
        %v1349 = vadd.f32 %v692, %v1348
        %v1350 = vpop.f32.mrb[0].mxu0
        %v1351 = vadd.f32 %v696, %v1350
        %v1352 = vpop.f32.mrb[0].mxu0
        %v1353 = vadd.f32 %v692, %v1352
        %v1354 = vpop.f32.mrb[0].mxu0
        %v1355 = vadd.f32 %v696, %v1354
        %1356 = vmatprep.mubr.bf16.mxu0 %v567
        %1357 = vmatmul.mubr.bf16.gmra.mrb[0].mxu0 %v566
        %v1358 = vpop.f32.mrb[0].mxu0
        %v1359 = vadd.f32 %v692, %v1358
        %v1360 = vpop.f32.mrb[0].mxu0
        %v1361 = vadd.f32 %v696, %v1360
        %v1362 = vpop.f32.mrb[0].mxu0
        %v1363 = vadd.f32 %v692, %v1362
        %v1364 = vpop.f32.mrb[0].mxu0
        %v1365 = vadd.f32 %v696, %v1364
        %1366 = vmatprep.mubr.bf16.mxu0 %v569
        %1367 = vmatmul.mubr.bf16.gmra.mrb[0].mxu0 %v568
        %v1368 = vpop.f32.mrb[0].mxu0
        %v1369 = vadd.f32 %v692, %v1368
        %v1370 = vpop.f32.mrb[0].mxu0
        %v1371 = vadd.f32 %v696, %v1370
        %v1372 = vpop.f32.mrb[0].mxu0
        %v1373 = vadd.f32 %v692, %v1372
        %v1374 = vpop.f32.mrb[0].mxu0
        %v1375 = vadd.f32 %v696, %v1374
        %1376 = vmatprep.mubr.bf16.mxu0 %v571
        %1377 = vmatmul.mubr.bf16.gmra.mrb[0].mxu0 %v570
        %v1378 = vpop.f32.mrb[0].mxu0
        %v1379 = vadd.f32 %v692, %v1378
        %v1380 = vpop.f32.mrb[0].mxu0
        %v1381 = vadd.f32 %v696, %v1380
        %v1382 = vpop.f32.mrb[0].mxu0
        %v1383 = vadd.f32 %v692, %v1382
        %v1384 = vpop.f32.mrb[0].mxu0
        %v1385 = vadd.f32 %v696, %v1384
        %1386 = vmatprep.mubr.bf16.mxu0 %v573
        %1387 = vmatmul.mubr.bf16.gmra.mrb[0].mxu0 %v572
        %v1388 = vpop.f32.mrb[0].mxu0
        %v1389 = vadd.f32 %v692, %v1388
        %v1390 = vpop.f32.mrb[0].mxu0
        %v1391 = vadd.f32 %v696, %v1390
        %v1392 = vpop.f32.mrb[0].mxu0
        %v1393 = vadd.f32 %v692, %v1392
        %v1394 = vpop.f32.mrb[0].mxu0
        %v1395 = vadd.f32 %v696, %v1394
        %1396 = vmatprep.mubr.bf16.mxu0 %v575
        %1397 = vmatmul.mubr.bf16.gmra.mrb[0].mxu0 %v574
        %v1398 = vpop.f32.mrb[0].mxu0
        %v1399 = vadd.f32 %v692, %v1398
        %v1400 = vpop.f32.mrb[0].mxu0
        %v1401 = vadd.f32 %v696, %v1400
        %v1402 = vpop.f32.mrb[0].mxu0
        %v1403 = vadd.f32 %v692, %v1402
        %v1404 = vpop.f32.mrb[0].mxu0
        %v1405 = vadd.f32 %v696, %v1404
        %1406 = vmatprep.mubr.bf16.mxu0 %v577
        %1407 = vmatmul.mubr.bf16.gmra.mrb[0].mxu0 %v576
        %v1408 = vpop.f32.mrb[0].mxu0
        %v1409 = vadd.f32 %v692, %v1408
        %v1410 = vpop.f32.mrb[0].mxu0
        %v1411 = vadd.f32 %v696, %v1410
        %v1412 = vpop.f32.mrb[0].mxu0
        %v1413 = vadd.f32 %v692, %v1412
        %v1414 = vpop.f32.mrb[0].mxu0
        %v1415 = vadd.f32 %v696, %v1414
        %1416 = vdwg.mxu0
        %1417 = vmatprep.subr.bf16.mxu0 %v1004
        %1418 = vmatpush1.bf16.msra.mxu0 %v1003
        %1419 = vmatprep.subr.bf16.mxu0 %v1010
        %1420 = vmatpush1.bf16.msra.mxu0 %v1009
        %1421 = vmatprep.subr.bf16.mxu0 %v1016
        %1422 = vmatpush1.bf16.msra.mxu0 %v1015
        %1423 = vmatprep.subr.bf16.mxu0 %v1022
        %1424 = vmatpush1.bf16.msra.mxu0 %v1021
        %1425 = vmatprep.subr.bf16.mxu0 %v1028
        %1426 = vmatpush1.bf16.msra.mxu0 %v1027
        %1427 = vmatprep.subr.bf16.mxu0 %v1034
        %1428 = vmatpush1.bf16.msra.mxu0 %v1033
        %1429 = vmatprep.subr.bf16.mxu0 %v1040
        %1430 = vmatpush1.bf16.msra.mxu0 %v1039
        %1431 = vmatprep.subr.bf16.mxu0 %v1046
        %1432 = vmatpush1.bf16.msra.mxu0 %v1045
        %1433 = vmatprep.subr.bf16.mxu0 %v1052
        %1434 = vmatpush1.bf16.msra.mxu0 %v1051
        %1435 = vmatprep.subr.bf16.mxu0 %v1058
        %1436 = vmatpush1.bf16.msra.mxu0 %v1057
        %1437 = vmatprep.subr.bf16.mxu0 %v1064
        %1438 = vmatpush1.bf16.msra.mxu0 %v1063
        %1439 = vmatprep.subr.bf16.mxu0 %v1070
        %1440 = vmatpush1.bf16.msra.mxu0 %v1069
        %1441 = vmatprep.subr.bf16.mxu0 %v1076
        %1442 = vmatpush1.bf16.msra.mxu0 %v1075
        %1443 = vmatprep.subr.bf16.mxu0 %v1082
        %1444 = vmatpush1.bf16.msra.mxu0 %v1081
        %1445 = vmatprep.subr.bf16.mxu0 %v1088
        %1446 = vmatpush1.bf16.msra.mxu0 %v1087
        %1447 = vmatprep.subr.bf16.mxu0 %v1094
        %1448 = vmatpush1.bf16.msra.mxu0 %v1093
        %1449 = vmatprep.mubr.bf16.mxu0 %v563
        %1450 = vmatmul.mubr.bf16.gmra.mrb[0].mxu0 %v562
        %v1451 = vpop.f32.mrb[0].mxu0
        %v1452 = vadd.f32 %v700, %v1451
        %v1453 = vpop.f32.mrb[0].mxu0
        %v1454 = vadd.f32 %v704, %v1453
        %v1455 = vpop.f32.mrb[0].mxu0
        %v1456 = vadd.f32 %v700, %v1455
        %v1457 = vpop.f32.mrb[0].mxu0
        %v1458 = vadd.f32 %v704, %v1457
        %1459 = vmatprep.mubr.bf16.mxu0 %v565
        %1460 = vmatmul.mubr.bf16.gmra.mrb[0].mxu0 %v564
        %v1461 = vpop.f32.mrb[0].mxu0
        %v1462 = vadd.f32 %v700, %v1461
        %v1463 = vpop.f32.mrb[0].mxu0
        %v1464 = vadd.f32 %v704, %v1463
        %v1465 = vpop.f32.mrb[0].mxu0
        %v1466 = vadd.f32 %v700, %v1465
        %v1467 = vpop.f32.mrb[0].mxu0
        %v1468 = vadd.f32 %v704, %v1467
        %1469 = vmatprep.mubr.bf16.mxu0 %v567
        %1470 = vmatmul.mubr.bf16.gmra.mrb[0].mxu0 %v566
        %v1471 = vpop.f32.mrb[0].mxu0
        %v1472 = vadd.f32 %v700, %v1471
        %v1473 = vpop.f32.mrb[0].mxu0
        %v1474 = vadd.f32 %v704, %v1473
        %v1475 = vpop.f32.mrb[0].mxu0
        %v1476 = vadd.f32 %v700, %v1475
        %v1477 = vpop.f32.mrb[0].mxu0
        %v1478 = vadd.f32 %v704, %v1477
        %1479 = vmatprep.mubr.bf16.mxu0 %v569
        %1480 = vmatmul.mubr.bf16.gmra.mrb[0].mxu0 %v568
        %v1481 = vpop.f32.mrb[0].mxu0
        %v1482 = vadd.f32 %v700, %v1481
        %v1483 = vpop.f32.mrb[0].mxu0
        %v1484 = vadd.f32 %v704, %v1483
        %v1485 = vpop.f32.mrb[0].mxu0
        %v1486 = vadd.f32 %v700, %v1485
        %v1487 = vpop.f32.mrb[0].mxu0
        %v1488 = vadd.f32 %v704, %v1487
        %1489 = vmatprep.mubr.bf16.mxu0 %v571
        %1490 = vmatmul.mubr.bf16.gmra.mrb[0].mxu0 %v570
        %v1491 = vpop.f32.mrb[0].mxu0
        %v1492 = vadd.f32 %v700, %v1491
        %v1493 = vpop.f32.mrb[0].mxu0
        %v1494 = vadd.f32 %v704, %v1493
        %v1495 = vpop.f32.mrb[0].mxu0
        %v1496 = vadd.f32 %v700, %v1495
        %v1497 = vpop.f32.mrb[0].mxu0
        %v1498 = vadd.f32 %v704, %v1497
        %1499 = vmatprep.mubr.bf16.mxu0 %v573
        %1500 = vmatmul.mubr.bf16.gmra.mrb[0].mxu0 %v572
        %v1501 = vpop.f32.mrb[0].mxu0
        %v1502 = vadd.f32 %v700, %v1501
        %v1503 = vpop.f32.mrb[0].mxu0
        %v1504 = vadd.f32 %v704, %v1503
        %v1505 = vpop.f32.mrb[0].mxu0
        %v1506 = vadd.f32 %v700, %v1505
        %v1507 = vpop.f32.mrb[0].mxu0
        %v1508 = vadd.f32 %v704, %v1507
        %1509 = vmatprep.mubr.bf16.mxu0 %v575
        %1510 = vmatmul.mubr.bf16.gmra.mrb[0].mxu0 %v574
        %v1511 = vpop.f32.mrb[0].mxu0
        %v1512 = vadd.f32 %v700, %v1511
        %v1513 = vpop.f32.mrb[0].mxu0
        %v1514 = vadd.f32 %v704, %v1513
        %v1515 = vpop.f32.mrb[0].mxu0
        %v1516 = vadd.f32 %v700, %v1515
        %v1517 = vpop.f32.mrb[0].mxu0
        %v1518 = vadd.f32 %v704, %v1517
        %1519 = vmatprep.mubr.bf16.mxu0 %v577
        %1520 = vmatmul.mubr.bf16.gmra.mrb[0].mxu0 %v576
        %v1521 = vpop.f32.mrb[0].mxu0
        %v1522 = vadd.f32 %v700, %v1521
        %v1523 = vpop.f32.mrb[0].mxu0
        %v1524 = vadd.f32 %v704, %v1523
        %v1525 = vpop.f32.mrb[0].mxu0
        %v1526 = vadd.f32 %v700, %v1525
        %v1527 = vpop.f32.mrb[0].mxu0
        %v1528 = vadd.f32 %v704, %v1527
        %1529 = vdwg.mxu0
        %v1530 = vpack.c.bf16 %v1230, %v1226
        %v1531 = vpack.c.bf16 %v1232, %v1228
        %v1532 = vpack.c.bf16 %v1343, %v1339
        %v1533 = vpack.c.bf16 %v1345, %v1341
        %v1534 = vpack.c.bf16 %v1456, %v1452
        %v1535 = vpack.c.bf16 %v1458, %v1454
        %v1536 = vpack.c.bf16 %v1240, %v1236
        %v1537 = vpack.c.bf16 %v1242, %v1238
        %v1538 = vpack.c.bf16 %v1353, %v1349
        %v1539 = vpack.c.bf16 %v1355, %v1351
        %v1540 = vpack.c.bf16 %v1466, %v1462
        %v1541 = vpack.c.bf16 %v1468, %v1464
        %v1542 = vpack.c.bf16 %v1250, %v1246
        %v1543 = vpack.c.bf16 %v1252, %v1248
        %v1544 = vpack.c.bf16 %v1363, %v1359
        %v1545 = vpack.c.bf16 %v1365, %v1361
        %v1546 = vpack.c.bf16 %v1476, %v1472
        %v1547 = vpack.c.bf16 %v1478, %v1474
        %v1548 = vpack.c.bf16 %v1260, %v1256
        %v1549 = vpack.c.bf16 %v1262, %v1258
        %v1550 = vpack.c.bf16 %v1373, %v1369
        %v1551 = vpack.c.bf16 %v1375, %v1371
        %v1552 = vpack.c.bf16 %v1486, %v1482
        %v1553 = vpack.c.bf16 %v1488, %v1484
        %v1554 = vpack.c.bf16 %v1270, %v1266
        %v1555 = vpack.c.bf16 %v1272, %v1268
        %v1556 = vpack.c.bf16 %v1383, %v1379
        %v1557 = vpack.c.bf16 %v1385, %v1381
        %v1558 = vpack.c.bf16 %v1496, %v1492
        %v1559 = vpack.c.bf16 %v1498, %v1494
        %v1560 = vpack.c.bf16 %v1280, %v1276
        %v1561 = vpack.c.bf16 %v1282, %v1278
        %v1562 = vpack.c.bf16 %v1393, %v1389
        %v1563 = vpack.c.bf16 %v1395, %v1391
        %v1564 = vpack.c.bf16 %v1506, %v1502
        %v1565 = vpack.c.bf16 %v1508, %v1504
        %v1566 = vpack.c.bf16 %v1290, %v1286
        %v1567 = vpack.c.bf16 %v1292, %v1288
        %v1568 = vpack.c.bf16 %v1403, %v1399
        %v1569 = vpack.c.bf16 %v1405, %v1401
        %v1570 = vpack.c.bf16 %v1516, %v1512
        %v1571 = vpack.c.bf16 %v1518, %v1514
        %v1572 = vpack.c.bf16 %v1300, %v1296
        %v1573 = vpack.c.bf16 %v1302, %v1298
        %v1574 = vpack.c.bf16 %v1413, %v1409
        %v1575 = vpack.c.bf16 %v1415, %v1411
        %v1576 = vpack.c.bf16 %v1526, %v1522
        %v1577 = vpack.c.bf16 %v1528, %v1524
        %v1578 = vld [vmem:[%s405] sm:$0xff]
        %v1579 = vld [vmem:[%s405 + $0x8] sm:$0xff]
        %v1580 = vld [vmem:[%s405 + $0x10] sm:$0xff]
        %v1581 = vld [vmem:[%s405 + $0x18] sm:$0xff]
        %v1582 = vld [vmem:[%s405 + $0x20] sm:$0xff]
        %v1583 = vld [vmem:[%s405 + $0x28] sm:$0xff]
        %v1584 = vld [vmem:[%s405 + $0x30] sm:$0xff]
        %v1585 = vld [vmem:[%s405 + $0x38] sm:$0xff]
        %v1586 = vld [vmem:[%s405 + $0x40] sm:$0xff]
        %v1587 = vld [vmem:[%s405 + $0x48] sm:$0xff]
        %v1588 = vld [vmem:[%s405 + $0x50] sm:$0xff]
        %v1589 = vld [vmem:[%s405 + $0x58] sm:$0xff]
        %v1590 = vld [vmem:[%s405 + $0x60] sm:$0xff]
        %v1591 = vld [vmem:[%s405 + $0x68] sm:$0xff]
        %v1592 = vld [vmem:[%s405 + $0x70] sm:$0xff]
        %v1593 = vld [vmem:[%s405 + $0x78] sm:$0xff]
        %v1594 = vld [vmem:[%s405 + $0x80] sm:$0xff]
        %v1595 = vld [vmem:[%s405 + $0x88] sm:$0xff]
        %v1596 = vld [vmem:[%s405 + $0x90] sm:$0xff]
        %v1597 = vld [vmem:[%s405 + $0x98] sm:$0xff]
        %v1598 = vld [vmem:[%s405 + $0xa0] sm:$0xff]
        %v1599 = vld [vmem:[%s405 + $0xa8] sm:$0xff]
        %v1600 = vld [vmem:[%s405 + $0xb0] sm:$0xff]
        %v1601 = vld [vmem:[%s405 + $0xb8] sm:$0xff]
        %v1602 = vld [vmem:[%s405 + $0xc0] sm:$0xff]
        %v1603 = vld [vmem:[%s405 + $0xc8] sm:$0xff]
        %v1604 = vld [vmem:[%s405 + $0xd0] sm:$0xff]
        %v1605 = vld [vmem:[%s405 + $0xd8] sm:$0xff]
        %v1606 = vld [vmem:[%s405 + $0xe0] sm:$0xff]
        %v1607 = vld [vmem:[%s405 + $0xe8] sm:$0xff]
        %v1608 = vld [vmem:[%s405 + $0xf0] sm:$0xff]
        %v1609 = vld [vmem:[%s405 + $0xf8] sm:$0xff]
        %1610 = vmatprep.subr.bf16.mxu0 0
        %1611 = vmatpush1.bf16.xpose.msra.mxu0 %v1532
        %1612 = vmatprep.subr.bf16.mxu0 0
        %1613 = vmatpush1.bf16.xpose.msra.mxu0 %v1538
        %1614 = vmatprep.subr.bf16.mxu0 0
        %1615 = vmatpush1.bf16.xpose.msra.mxu0 %v1544
        %1616 = vmatprep.subr.bf16.mxu0 0
        %1617 = vmatpush1.bf16.xpose.msra.mxu0 %v1550
        %1618 = vmatprep.subr.bf16.mxu0 0
        %1619 = vmatpush1.bf16.xpose.msra.mxu0 %v1556
        %1620 = vmatprep.subr.bf16.mxu0 0
        %1621 = vmatpush1.bf16.xpose.msra.mxu0 %v1562
        %1622 = vmatprep.subr.bf16.mxu0 0
        %1623 = vmatpush1.bf16.xpose.msra.mxu0 %v1568
        %1624 = vmatprep.subr.bf16.mxu0 0
        %1625 = vmatpush1.bf16.xpose.msra.mxu0 %v1574
        %1626 = vmatprep.subr.bf16.mxu0 0
        %1627 = vmatpush1.bf16.xpose.msra.mxu0 0
        %1628 = vmatprep.subr.bf16.mxu0 0
        %1629 = vmatpush1.bf16.xpose.msra.mxu0 0
        %1630 = vmatprep.subr.bf16.mxu0 0
        %1631 = vmatpush1.bf16.xpose.msra.mxu0 0
        %1632 = vmatprep.subr.bf16.mxu0 0
        %1633 = vmatpush1.bf16.xpose.msra.mxu0 0
        %1634 = vmatprep.subr.bf16.mxu0 0
        %1635 = vmatpush1.bf16.xpose.msra.mxu0 0
        %1636 = vmatprep.subr.bf16.mxu0 0
        %1637 = vmatpush1.bf16.xpose.msra.mxu0 0
        %1638 = vmatprep.subr.bf16.mxu0 0
        %1639 = vmatpush1.bf16.xpose.msra.mxu0 0
        %1640 = vmatprep.subr.bf16.mxu0 0
        %1641 = vmatpush1.bf16.xpose.msra.mxu0 0
        %1642 = vmatprep.mubr.bf16.mxu0 0
        %1643 = vmatmul.mubr.bf16.gmra.mrb[0].mxu0 %v1530
        %v1644 = vpop.f32.mrb[0].mxu0
        %v1645 = vadd.f32 %v1578, %v1644
        %v1646 = vpop.f32.mrb[0].mxu0
        %v1647 = vpop.f32.mrb[0].mxu0
        %v1648 = vadd.f32 %v1579, %v1647
        %v1649 = vpop.f32.mrb[0].mxu0
        %1650 = vmatprep.mubr.bf16.mxu0 0
        %1651 = vmatmul.mubr.bf16.gmra.mrb[0].mxu0 %v1536
        %v1652 = vpop.f32.mrb[0].mxu0
        %v1653 = vadd.f32 %v1580, %v1652
        %v1654 = vpop.f32.mrb[0].mxu0
        %v1655 = vpop.f32.mrb[0].mxu0
        %v1656 = vadd.f32 %v1581, %v1655
        %v1657 = vpop.f32.mrb[0].mxu0
        %1658 = vmatprep.mubr.bf16.mxu0 0
        %1659 = vmatmul.mubr.bf16.gmra.mrb[0].mxu0 %v1542
        %v1660 = vpop.f32.mrb[0].mxu0
        %v1661 = vadd.f32 %v1582, %v1660
        %v1662 = vpop.f32.mrb[0].mxu0
        %v1663 = vpop.f32.mrb[0].mxu0
        %v1664 = vadd.f32 %v1583, %v1663
        %v1665 = vpop.f32.mrb[0].mxu0
        %1666 = vmatprep.mubr.bf16.mxu0 0
        %1667 = vmatmul.mubr.bf16.gmra.mrb[0].mxu0 %v1548
        %v1668 = vpop.f32.mrb[0].mxu0
        %v1669 = vadd.f32 %v1584, %v1668
        %v1670 = vpop.f32.mrb[0].mxu0
        %v1671 = vpop.f32.mrb[0].mxu0
        %v1672 = vadd.f32 %v1585, %v1671
        %v1673 = vpop.f32.mrb[0].mxu0
        %1674 = vmatprep.mubr.bf16.mxu0 0
        %1675 = vmatmul.mubr.bf16.gmra.mrb[0].mxu0 %v1554
        %v1676 = vpop.f32.mrb[0].mxu0
        %v1677 = vadd.f32 %v1586, %v1676
        %v1678 = vpop.f32.mrb[0].mxu0
        %v1679 = vpop.f32.mrb[0].mxu0
        %v1680 = vadd.f32 %v1587, %v1679
        %v1681 = vpop.f32.mrb[0].mxu0
        %1682 = vmatprep.mubr.bf16.mxu0 0
        %1683 = vmatmul.mubr.bf16.gmra.mrb[0].mxu0 %v1560
        %v1684 = vpop.f32.mrb[0].mxu0
        %v1685 = vadd.f32 %v1588, %v1684
        %v1686 = vpop.f32.mrb[0].mxu0
        %v1687 = vpop.f32.mrb[0].mxu0
        %v1688 = vadd.f32 %v1589, %v1687
        %v1689 = vpop.f32.mrb[0].mxu0
        %1690 = vmatprep.mubr.bf16.mxu0 0
        %1691 = vmatmul.mubr.bf16.gmra.mrb[0].mxu0 %v1566
        %v1692 = vpop.f32.mrb[0].mxu0
        %v1693 = vadd.f32 %v1590, %v1692
        %v1694 = vpop.f32.mrb[0].mxu0
        %v1695 = vpop.f32.mrb[0].mxu0
        %v1696 = vadd.f32 %v1591, %v1695
        %v1697 = vpop.f32.mrb[0].mxu0
        %1698 = vmatprep.mubr.bf16.mxu0 0
        %1699 = vmatmul.mubr.bf16.gmra.mrb[0].mxu0 %v1572
        %v1700 = vpop.f32.mrb[0].mxu0
        %v1701 = vadd.f32 %v1592, %v1700
        %v1702 = vpop.f32.mrb[0].mxu0
        %v1703 = vpop.f32.mrb[0].mxu0
        %v1704 = vadd.f32 %v1593, %v1703
        %v1705 = vpop.f32.mrb[0].mxu0
        %1706 = vdwg.mxu0
        %1707 = vmatprep.subr.bf16.mxu0 0
        %1708 = vmatpush1.bf16.xpose.msra.mxu0 %v1533
        %1709 = vmatprep.subr.bf16.mxu0 0
        %1710 = vmatpush1.bf16.xpose.msra.mxu0 %v1539
        %1711 = vmatprep.subr.bf16.mxu0 0
        %1712 = vmatpush1.bf16.xpose.msra.mxu0 %v1545
        %1713 = vmatprep.subr.bf16.mxu0 0
        %1714 = vmatpush1.bf16.xpose.msra.mxu0 %v1551
        %1715 = vmatprep.subr.bf16.mxu0 0
        %1716 = vmatpush1.bf16.xpose.msra.mxu0 %v1557
        %1717 = vmatprep.subr.bf16.mxu0 0
        %1718 = vmatpush1.bf16.xpose.msra.mxu0 %v1563
        %1719 = vmatprep.subr.bf16.mxu0 0
        %1720 = vmatpush1.bf16.xpose.msra.mxu0 %v1569
        %1721 = vmatprep.subr.bf16.mxu0 0
        %1722 = vmatpush1.bf16.xpose.msra.mxu0 %v1575
        %1723 = vmatprep.subr.bf16.mxu0 0
        %1724 = vmatpush1.bf16.xpose.msra.mxu0 0
        %1725 = vmatprep.subr.bf16.mxu0 0
        %1726 = vmatpush1.bf16.xpose.msra.mxu0 0
        %1727 = vmatprep.subr.bf16.mxu0 0
        %1728 = vmatpush1.bf16.xpose.msra.mxu0 0
        %1729 = vmatprep.subr.bf16.mxu0 0
        %1730 = vmatpush1.bf16.xpose.msra.mxu0 0
        %1731 = vmatprep.subr.bf16.mxu0 0
        %1732 = vmatpush1.bf16.xpose.msra.mxu0 0
        %1733 = vmatprep.subr.bf16.mxu0 0
        %1734 = vmatpush1.bf16.xpose.msra.mxu0 0
        %1735 = vmatprep.subr.bf16.mxu0 0
        %1736 = vmatpush1.bf16.xpose.msra.mxu0 0
        %1737 = vmatprep.subr.bf16.mxu0 0
        %1738 = vmatpush1.bf16.xpose.msra.mxu0 0
        %1739 = vmatprep.mubr.bf16.mxu0 0
        %1740 = vmatmul.mubr.bf16.gmra.mrb[0].mxu0 %v1531
        %v1741 = vpop.f32.mrb[0].mxu0
        %v1742 = vadd.f32 %v1594, %v1741
        %v1743 = vpop.f32.mrb[0].mxu0
        %v1744 = vpop.f32.mrb[0].mxu0
        %v1745 = vadd.f32 %v1595, %v1744
        %v1746 = vpop.f32.mrb[0].mxu0
        %1747 = vmatprep.mubr.bf16.mxu0 0
        %1748 = vmatmul.mubr.bf16.gmra.mrb[0].mxu0 %v1537
        %v1749 = vpop.f32.mrb[0].mxu0
        %v1750 = vadd.f32 %v1596, %v1749
        %v1751 = vpop.f32.mrb[0].mxu0
        %v1752 = vpop.f32.mrb[0].mxu0
        %v1753 = vadd.f32 %v1597, %v1752
        %v1754 = vpop.f32.mrb[0].mxu0
        %1755 = vmatprep.mubr.bf16.mxu0 0
        %1756 = vmatmul.mubr.bf16.gmra.mrb[0].mxu0 %v1543
        %v1757 = vpop.f32.mrb[0].mxu0
        %v1758 = vadd.f32 %v1598, %v1757
        %v1759 = vpop.f32.mrb[0].mxu0
        %v1760 = vpop.f32.mrb[0].mxu0
        %v1761 = vadd.f32 %v1599, %v1760
        %v1762 = vpop.f32.mrb[0].mxu0
        %1763 = vmatprep.mubr.bf16.mxu0 0
        %1764 = vmatmul.mubr.bf16.gmra.mrb[0].mxu0 %v1549
        %v1765 = vpop.f32.mrb[0].mxu0
        %v1766 = vadd.f32 %v1600, %v1765
        %v1767 = vpop.f32.mrb[0].mxu0
        %v1768 = vpop.f32.mrb[0].mxu0
        %v1769 = vadd.f32 %v1601, %v1768
        %v1770 = vpop.f32.mrb[0].mxu0
        %1771 = vmatprep.mubr.bf16.mxu0 0
        %1772 = vmatmul.mubr.bf16.gmra.mrb[0].mxu0 %v1555
        %v1773 = vpop.f32.mrb[0].mxu0
        %v1774 = vadd.f32 %v1602, %v1773
        %v1775 = vpop.f32.mrb[0].mxu0
        %v1776 = vpop.f32.mrb[0].mxu0
        %v1777 = vadd.f32 %v1603, %v1776
        %v1778 = vpop.f32.mrb[0].mxu0
        %1779 = vmatprep.mubr.bf16.mxu0 0
        %1780 = vmatmul.mubr.bf16.gmra.mrb[0].mxu0 %v1561
        %v1781 = vpop.f32.mrb[0].mxu0
        %v1782 = vadd.f32 %v1604, %v1781
        %v1783 = vpop.f32.mrb[0].mxu0
        %v1784 = vpop.f32.mrb[0].mxu0
        %v1785 = vadd.f32 %v1605, %v1784
        %v1786 = vpop.f32.mrb[0].mxu0
        %1787 = vmatprep.mubr.bf16.mxu0 0
        %1788 = vmatmul.mubr.bf16.gmra.mrb[0].mxu0 %v1567
        %v1789 = vpop.f32.mrb[0].mxu0
        %v1790 = vadd.f32 %v1606, %v1789
        %v1791 = vpop.f32.mrb[0].mxu0
        %v1792 = vpop.f32.mrb[0].mxu0
        %v1793 = vadd.f32 %v1607, %v1792
        %v1794 = vpop.f32.mrb[0].mxu0
        %1795 = vmatprep.mubr.bf16.mxu0 0
        %1796 = vmatmul.mubr.bf16.gmra.mrb[0].mxu0 %v1573
        %v1797 = vpop.f32.mrb[0].mxu0
        %v1798 = vadd.f32 %v1608, %v1797
        %v1799 = vpop.f32.mrb[0].mxu0
        %v1800 = vpop.f32.mrb[0].mxu0
        %v1801 = vadd.f32 %v1609, %v1800
        %v1802 = vpop.f32.mrb[0].mxu0
        %1803 = vdwg.mxu0
        %1804 = vmax.xlane.f32.xlu0 %v1645
        %v1805 = vpop.xlane.xlu0 %1804
        %1806 = vmax.xlane.f32.xlu0 %v1648
        %v1807 = vpop.xlane.xlu0 %1806
        %1808 = vmax.xlane.f32.xlu0 %v1653
        %v1809 = vpop.xlane.xlu0 %1808
        %1810 = vmax.xlane.f32.xlu0 %v1656
        %v1811 = vpop.xlane.xlu0 %1810
        %1812 = vmax.xlane.f32.xlu0 %v1661
        %v1813 = vpop.xlane.xlu0 %1812
        %1814 = vmax.xlane.f32.xlu0 %v1664
        %v1815 = vpop.xlane.xlu0 %1814
        %1816 = vmax.xlane.f32.xlu0 %v1669
        %v1817 = vpop.xlane.xlu0 %1816
        %1818 = vmax.xlane.f32.xlu0 %v1672
        %v1819 = vpop.xlane.xlu0 %1818
        %1820 = vmax.xlane.f32.xlu0 %v1677
        %v1821 = vpop.xlane.xlu0 %1820
        %1822 = vmax.xlane.f32.xlu0 %v1680
        %v1823 = vpop.xlane.xlu0 %1822
        %1824 = vmax.xlane.f32.xlu0 %v1685
        %v1825 = vpop.xlane.xlu0 %1824
        %1826 = vmax.xlane.f32.xlu0 %v1688
        %v1827 = vpop.xlane.xlu0 %1826
        %1828 = vmax.xlane.f32.xlu0 %v1693
        %v1829 = vpop.xlane.xlu0 %1828
        %1830 = vmax.xlane.f32.xlu0 %v1696
        %v1831 = vpop.xlane.xlu0 %1830
        %1832 = vmax.xlane.f32.xlu0 %v1701
        %v1833 = vpop.xlane.xlu0 %1832
        %1834 = vmax.xlane.f32.xlu0 %v1704
        %v1835 = vpop.xlane.xlu0 %1834
        %1836 = vmax.xlane.f32.xlu0 %v1742
        %v1837 = vpop.xlane.xlu0 %1836
        %1838 = vmax.xlane.f32.xlu0 %v1745
        %v1839 = vpop.xlane.xlu0 %1838
        %1840 = vmax.xlane.f32.xlu0 %v1750
        %v1841 = vpop.xlane.xlu0 %1840
        %1842 = vmax.xlane.f32.xlu0 %v1753
        %v1843 = vpop.xlane.xlu0 %1842
        %1844 = vmax.xlane.f32.xlu0 %v1758
        %v1845 = vpop.xlane.xlu0 %1844
        %1846 = vmax.xlane.f32.xlu0 %v1761
        %v1847 = vpop.xlane.xlu0 %1846
        %1848 = vmax.xlane.f32.xlu0 %v1766
        %v1849 = vpop.xlane.xlu0 %1848
        %1850 = vmax.xlane.f32.xlu0 %v1769
        %v1851 = vpop.xlane.xlu0 %1850
        %1852 = vmax.xlane.f32.xlu0 %v1774
        %v1853 = vpop.xlane.xlu0 %1852
        %1854 = vmax.xlane.f32.xlu0 %v1777
        %v1855 = vpop.xlane.xlu0 %1854
        %1856 = vmax.xlane.f32.xlu0 %v1782
        %v1857 = vpop.xlane.xlu0 %1856
        %1858 = vmax.xlane.f32.xlu0 %v1785
        %v1859 = vpop.xlane.xlu0 %1858
        %1860 = vmax.xlane.f32.xlu0 %v1790
        %v1861 = vpop.xlane.xlu0 %1860
        %1862 = vmax.xlane.f32.xlu0 %v1793
        %v1863 = vpop.xlane.xlu0 %1862
        %1864 = vmax.xlane.f32.xlu0 %v1798
        %v1865 = vpop.xlane.xlu0 %1864
        %1866 = vmax.xlane.f32.xlu0 %v1801
        %v1867 = vpop.xlane.xlu0 %1866
        %v1868 = vsub.f32 %v1645, %v1805
        %v1869 = vsub.f32 %v1648, %v1807
        %v1870 = vsub.f32 %v1653, %v1809
        %v1871 = vsub.f32 %v1656, %v1811
        %v1872 = vsub.f32 %v1661, %v1813
        %v1873 = vsub.f32 %v1664, %v1815
        %v1874 = vsub.f32 %v1669, %v1817
        %v1875 = vsub.f32 %v1672, %v1819
        %v1876 = vsub.f32 %v1677, %v1821
        %v1877 = vsub.f32 %v1680, %v1823
        %v1878 = vsub.f32 %v1685, %v1825
        %v1879 = vsub.f32 %v1688, %v1827
        %v1880 = vsub.f32 %v1693, %v1829
        %v1881 = vsub.f32 %v1696, %v1831
        %v1882 = vsub.f32 %v1701, %v1833
        %v1883 = vsub.f32 %v1704, %v1835
        %v1884 = vsub.f32 %v1742, %v1837
        %v1885 = vsub.f32 %v1745, %v1839
        %v1886 = vsub.f32 %v1750, %v1841
        %v1887 = vsub.f32 %v1753, %v1843
        %v1888 = vsub.f32 %v1758, %v1845
        %v1889 = vsub.f32 %v1761, %v1847
        %v1890 = vsub.f32 %v1766, %v1849
        %v1891 = vsub.f32 %v1769, %v1851
        %v1892 = vsub.f32 %v1774, %v1853
        %v1893 = vsub.f32 %v1777, %v1855
        %v1894 = vsub.f32 %v1782, %v1857
        %v1895 = vsub.f32 %v1785, %v1859
        %v1896 = vsub.f32 %v1790, %v1861
        %v1897 = vsub.f32 %v1793, %v1863
        %v1898 = vsub.f32 %v1798, %v1865
        %v1899 = vsub.f32 %v1801, %v1867
        %v1900 = vmul.f32 %v1868, 1.442695
        %v1901 = vpow.pop %v1900
        %v1902 = vmul.f32 %v1869, 1.442695
        %v1903 = vpow.pop %v1902
        %v1904 = vmul.f32 %v1870, 1.442695
        %v1905 = vpow.pop %v1904
        %v1906 = vmul.f32 %v1871, 1.442695
        %v1907 = vpow.pop %v1906
        %v1908 = vmul.f32 %v1872, 1.442695
        %v1909 = vpow.pop %v1908
        %v1910 = vmul.f32 %v1873, 1.442695
        %v1911 = vpow.pop %v1910
        %v1912 = vmul.f32 %v1874, 1.442695
        %v1913 = vpow.pop %v1912
        %v1914 = vmul.f32 %v1875, 1.442695
        %v1915 = vpow.pop %v1914
        %v1916 = vmul.f32 %v1876, 1.442695
        %v1917 = vpow.pop %v1916
        %v1918 = vmul.f32 %v1877, 1.442695
        %v1919 = vpow.pop %v1918
        %v1920 = vmul.f32 %v1878, 1.442695
        %v1921 = vpow.pop %v1920
        %v1922 = vmul.f32 %v1879, 1.442695
        %v1923 = vpow.pop %v1922
        %v1924 = vmul.f32 %v1880, 1.442695
        %v1925 = vpow.pop %v1924
        %v1926 = vmul.f32 %v1881, 1.442695
        %v1927 = vpow.pop %v1926
        %v1928 = vmul.f32 %v1882, 1.442695
        %v1929 = vpow.pop %v1928
        %v1930 = vmul.f32 %v1883, 1.442695
        %v1931 = vpow.pop %v1930
        %v1932 = vmul.f32 %v1884, 1.442695
        %v1933 = vpow.pop %v1932
        %v1934 = vmul.f32 %v1885, 1.442695
        %v1935 = vpow.pop %v1934
        %v1936 = vmul.f32 %v1886, 1.442695
        %v1937 = vpow.pop %v1936
        %v1938 = vmul.f32 %v1887, 1.442695
        %v1939 = vpow.pop %v1938
        %v1940 = vmul.f32 %v1888, 1.442695
        %v1941 = vpow.pop %v1940
        %v1942 = vmul.f32 %v1889, 1.442695
        %v1943 = vpow.pop %v1942
        %v1944 = vmul.f32 %v1890, 1.442695
        %v1945 = vpow.pop %v1944
        %v1946 = vmul.f32 %v1891, 1.442695
        %v1947 = vpow.pop %v1946
        %v1948 = vmul.f32 %v1892, 1.442695
        %v1949 = vpow.pop %v1948
        %v1950 = vmul.f32 %v1893, 1.442695
        %v1951 = vpow.pop %v1950
        %v1952 = vmul.f32 %v1894, 1.442695
        %v1953 = vpow.pop %v1952
        %v1954 = vmul.f32 %v1895, 1.442695
        %v1955 = vpow.pop %v1954
        %v1956 = vmul.f32 %v1896, 1.442695
        %v1957 = vpow.pop %v1956
        %v1958 = vmul.f32 %v1897, 1.442695
        %v1959 = vpow.pop %v1958
        %v1960 = vmul.f32 %v1898, 1.442695
        %v1961 = vpow.pop %v1960
        %v1962 = vmul.f32 %v1899, 1.442695
        %v1963 = vpow.pop %v1962
        %1964 = vadd.xlane.f32.xlu0 %v1901
        %v1965 = vpop.xlane.xlu0 %1964
        %1966 = vadd.xlane.f32.xlu0 %v1903
        %v1967 = vpop.xlane.xlu0 %1966
        %1968 = vadd.xlane.f32.xlu0 %v1905
        %v1969 = vpop.xlane.xlu0 %1968
        %1970 = vadd.xlane.f32.xlu0 %v1907
        %v1971 = vpop.xlane.xlu0 %1970
        %1972 = vadd.xlane.f32.xlu0 %v1909
        %v1973 = vpop.xlane.xlu0 %1972
        %1974 = vadd.xlane.f32.xlu0 %v1911
        %v1975 = vpop.xlane.xlu0 %1974
        %1976 = vadd.xlane.f32.xlu0 %v1913
        %v1977 = vpop.xlane.xlu0 %1976
        %1978 = vadd.xlane.f32.xlu0 %v1915
        %v1979 = vpop.xlane.xlu0 %1978
        %1980 = vadd.xlane.f32.xlu0 %v1917
        %v1981 = vpop.xlane.xlu0 %1980
        %1982 = vadd.xlane.f32.xlu0 %v1919
        %v1983 = vpop.xlane.xlu0 %1982
        %1984 = vadd.xlane.f32.xlu0 %v1921
        %v1985 = vpop.xlane.xlu0 %1984
        %1986 = vadd.xlane.f32.xlu0 %v1923
        %v1987 = vpop.xlane.xlu0 %1986
        %1988 = vadd.xlane.f32.xlu0 %v1925
        %v1989 = vpop.xlane.xlu0 %1988
        %1990 = vadd.xlane.f32.xlu0 %v1927
        %v1991 = vpop.xlane.xlu0 %1990
        %1992 = vadd.xlane.f32.xlu0 %v1929
        %v1993 = vpop.xlane.xlu0 %1992
        %1994 = vadd.xlane.f32.xlu0 %v1931
        %v1995 = vpop.xlane.xlu0 %1994
        %1996 = vadd.xlane.f32.xlu0 %v1933
        %v1997 = vpop.xlane.xlu0 %1996
        %1998 = vadd.xlane.f32.xlu0 %v1935
        %v1999 = vpop.xlane.xlu0 %1998
        %2000 = vadd.xlane.f32.xlu0 %v1937
        %v2001 = vpop.xlane.xlu0 %2000
        %2002 = vadd.xlane.f32.xlu0 %v1939
        %v2003 = vpop.xlane.xlu0 %2002
        %2004 = vadd.xlane.f32.xlu0 %v1941
        %v2005 = vpop.xlane.xlu0 %2004
        %2006 = vadd.xlane.f32.xlu0 %v1943
        %v2007 = vpop.xlane.xlu0 %2006
        %2008 = vadd.xlane.f32.xlu0 %v1945
        %v2009 = vpop.xlane.xlu0 %2008
        %2010 = vadd.xlane.f32.xlu0 %v1947
        %v2011 = vpop.xlane.xlu0 %2010
        %2012 = vadd.xlane.f32.xlu0 %v1949
        %v2013 = vpop.xlane.xlu0 %2012
        %2014 = vadd.xlane.f32.xlu0 %v1951
        %v2015 = vpop.xlane.xlu0 %2014
        %2016 = vadd.xlane.f32.xlu0 %v1953
        %v2017 = vpop.xlane.xlu0 %2016
        %2018 = vadd.xlane.f32.xlu0 %v1955
        %v2019 = vpop.xlane.xlu0 %2018
        %2020 = vadd.xlane.f32.xlu0 %v1957
        %v2021 = vpop.xlane.xlu0 %2020
        %2022 = vadd.xlane.f32.xlu0 %v1959
        %v2023 = vpop.xlane.xlu0 %2022
        %2024 = vadd.xlane.f32.xlu0 %v1961
        %v2025 = vpop.xlane.xlu0 %2024
        %2026 = vadd.xlane.f32.xlu0 %v1963
        %v2027 = vpop.xlane.xlu0 %2026
        %v2028 = vrcp.pop %v1965
        %v2029 = vmul.f32 %v1901, %v2028
        %v2030 = vrcp.pop %v1967
        %v2031 = vmul.f32 %v1903, %v2030
        %v2032 = vrcp.pop %v1969
        %v2033 = vmul.f32 %v1905, %v2032
        %v2034 = vrcp.pop %v1971
        %v2035 = vmul.f32 %v1907, %v2034
        %v2036 = vrcp.pop %v1973
        %v2037 = vmul.f32 %v1909, %v2036
        %v2038 = vrcp.pop %v1975
        %v2039 = vmul.f32 %v1911, %v2038
        %v2040 = vrcp.pop %v1977
        %v2041 = vmul.f32 %v1913, %v2040
        %v2042 = vrcp.pop %v1979
        %v2043 = vmul.f32 %v1915, %v2042
        %v2044 = vrcp.pop %v1981
        %v2045 = vmul.f32 %v1917, %v2044
        %v2046 = vrcp.pop %v1983
        %v2047 = vmul.f32 %v1919, %v2046
        %v2048 = vrcp.pop %v1985
        %v2049 = vmul.f32 %v1921, %v2048
        %v2050 = vrcp.pop %v1987
        %v2051 = vmul.f32 %v1923, %v2050
        %v2052 = vrcp.pop %v1989
        %v2053 = vmul.f32 %v1925, %v2052
        %v2054 = vrcp.pop %v1991
        %v2055 = vmul.f32 %v1927, %v2054
        %v2056 = vrcp.pop %v1993
        %v2057 = vmul.f32 %v1929, %v2056
        %v2058 = vrcp.pop %v1995
        %v2059 = vmul.f32 %v1931, %v2058
        %v2060 = vrcp.pop %v1997
        %v2061 = vmul.f32 %v1933, %v2060
        %v2062 = vrcp.pop %v1999
        %v2063 = vmul.f32 %v1935, %v2062
        %v2064 = vrcp.pop %v2001
        %v2065 = vmul.f32 %v1937, %v2064
        %v2066 = vrcp.pop %v2003
        %v2067 = vmul.f32 %v1939, %v2066
        %v2068 = vrcp.pop %v2005
        %v2069 = vmul.f32 %v1941, %v2068
        %v2070 = vrcp.pop %v2007
        %v2071 = vmul.f32 %v1943, %v2070
        %v2072 = vrcp.pop %v2009
        %v2073 = vmul.f32 %v1945, %v2072
        %v2074 = vrcp.pop %v2011
        %v2075 = vmul.f32 %v1947, %v2074
        %v2076 = vrcp.pop %v2013
        %v2077 = vmul.f32 %v1949, %v2076
        %v2078 = vrcp.pop %v2015
        %v2079 = vmul.f32 %v1951, %v2078
        %v2080 = vrcp.pop %v2017
        %v2081 = vmul.f32 %v1953, %v2080
        %v2082 = vrcp.pop %v2019
        %v2083 = vmul.f32 %v1955, %v2082
        %v2084 = vrcp.pop %v2021
        %v2085 = vmul.f32 %v1957, %v2084
        %v2086 = vrcp.pop %v2023
        %v2087 = vmul.f32 %v1959, %v2086
        %v2088 = vrcp.pop %v2025
        %v2089 = vmul.f32 %v1961, %v2088
        %v2090 = vrcp.pop %v2027
        %v2091 = vmul.f32 %v1963, %v2090
        %v2092 = vpack.c.bf16 %v2031, %v2029
        %v2093 = vpack.c.bf16 %v2035, %v2033
        %v2094 = vpack.c.bf16 %v2039, %v2037
        %v2095 = vpack.c.bf16 %v2043, %v2041
        %v2096 = vpack.c.bf16 %v2047, %v2045
        %v2097 = vpack.c.bf16 %v2051, %v2049
        %v2098 = vpack.c.bf16 %v2055, %v2053
        %v2099 = vpack.c.bf16 %v2059, %v2057
        %v2100 = vpack.c.bf16 %v2063, %v2061
        %v2101 = vpack.c.bf16 %v2067, %v2065
        %v2102 = vpack.c.bf16 %v2071, %v2069
        %v2103 = vpack.c.bf16 %v2075, %v2073
        %v2104 = vpack.c.bf16 %v2079, %v2077
        %v2105 = vpack.c.bf16 %v2083, %v2081
        %v2106 = vpack.c.bf16 %v2087, %v2085
        %v2107 = vpack.c.bf16 %v2091, %v2089
        %2108 = vmatprep.subr.bf16.mxu0 0
        %2109 = vmatpush1.bf16.msra.mxu0 %v1534
        %2110 = vmatprep.subr.bf16.mxu0 0
        %2111 = vmatpush1.bf16.msra.mxu0 %v1540
        %2112 = vmatprep.subr.bf16.mxu0 0
        %2113 = vmatpush1.bf16.msra.mxu0 %v1546
        %2114 = vmatprep.subr.bf16.mxu0 0
        %2115 = vmatpush1.bf16.msra.mxu0 %v1552
        %2116 = vmatprep.subr.bf16.mxu0 0
        %2117 = vmatpush1.bf16.msra.mxu0 %v1558
        %2118 = vmatprep.subr.bf16.mxu0 0
        %2119 = vmatpush1.bf16.msra.mxu0 %v1564
        %2120 = vmatprep.subr.bf16.mxu0 0
        %2121 = vmatpush1.bf16.msra.mxu0 %v1570
        %2122 = vmatprep.subr.bf16.mxu0 0
        %2123 = vmatpush1.bf16.msra.mxu0 %v1576
        %2124 = vmatprep.subr.bf16.mxu0 0
        %2125 = vmatpush1.bf16.msra.mxu0 0
        %2126 = vmatprep.subr.bf16.mxu0 0
        %2127 = vmatpush1.bf16.msra.mxu0 0
        %2128 = vmatprep.subr.bf16.mxu0 0
        %2129 = vmatpush1.bf16.msra.mxu0 0
        %2130 = vmatprep.subr.bf16.mxu0 0
        %2131 = vmatpush1.bf16.msra.mxu0 0
        %2132 = vmatprep.subr.bf16.mxu0 0
        %2133 = vmatpush1.bf16.msra.mxu0 0
        %2134 = vmatprep.subr.bf16.mxu0 0
        %2135 = vmatpush1.bf16.msra.mxu0 0
        %2136 = vmatprep.subr.bf16.mxu0 0
        %2137 = vmatpush1.bf16.msra.mxu0 0
        %2138 = vmatprep.subr.bf16.mxu0 0
        %2139 = vmatpush1.bf16.msra.mxu0 0
        %2140 = vmatprep.mubr.bf16.mxu0 0
        %2141 = vmatmul.mubr.bf16.gmra.mrb[0].mxu0 %v2092
        %v2142 = vpop.f32.mrb[0].mxu0
        %v2143 = vadd.f32 0.0, %v2142
        %v2144 = vpop.f32.mrb[0].mxu0
        %v2145 = vpop.f32.mrb[0].mxu0
        %v2146 = vadd.f32 0.0, %v2145
        %v2147 = vpop.f32.mrb[0].mxu0
        %2148 = vmatprep.mubr.bf16.mxu0 0
        %2149 = vmatmul.mubr.bf16.gmra.mrb[0].mxu0 %v2093
        %v2150 = vpop.f32.mrb[0].mxu0
        %v2151 = vadd.f32 0.0, %v2150
        %v2152 = vpop.f32.mrb[0].mxu0
        %v2153 = vpop.f32.mrb[0].mxu0
        %v2154 = vadd.f32 0.0, %v2153
        %v2155 = vpop.f32.mrb[0].mxu0
        %2156 = vmatprep.mubr.bf16.mxu0 0
        %2157 = vmatmul.mubr.bf16.gmra.mrb[0].mxu0 %v2094
        %v2158 = vpop.f32.mrb[0].mxu0
        %v2159 = vadd.f32 0.0, %v2158
        %v2160 = vpop.f32.mrb[0].mxu0
        %v2161 = vpop.f32.mrb[0].mxu0
        %v2162 = vadd.f32 0.0, %v2161
        %v2163 = vpop.f32.mrb[0].mxu0
        %2164 = vmatprep.mubr.bf16.mxu0 0
        %2165 = vmatmul.mubr.bf16.gmra.mrb[0].mxu0 %v2095
        %v2166 = vpop.f32.mrb[0].mxu0
        %v2167 = vadd.f32 0.0, %v2166
        %v2168 = vpop.f32.mrb[0].mxu0
        %v2169 = vpop.f32.mrb[0].mxu0
        %v2170 = vadd.f32 0.0, %v2169
        %v2171 = vpop.f32.mrb[0].mxu0
        %2172 = vmatprep.mubr.bf16.mxu0 0
        %2173 = vmatmul.mubr.bf16.gmra.mrb[0].mxu0 %v2096
        %v2174 = vpop.f32.mrb[0].mxu0
        %v2175 = vadd.f32 0.0, %v2174
        %v2176 = vpop.f32.mrb[0].mxu0
        %v2177 = vpop.f32.mrb[0].mxu0
        %v2178 = vadd.f32 0.0, %v2177
        %v2179 = vpop.f32.mrb[0].mxu0
        %2180 = vmatprep.mubr.bf16.mxu0 0
        %2181 = vmatmul.mubr.bf16.gmra.mrb[0].mxu0 %v2097
        %v2182 = vpop.f32.mrb[0].mxu0
        %v2183 = vadd.f32 0.0, %v2182
        %v2184 = vpop.f32.mrb[0].mxu0
        %v2185 = vpop.f32.mrb[0].mxu0
        %v2186 = vadd.f32 0.0, %v2185
        %v2187 = vpop.f32.mrb[0].mxu0
        %2188 = vmatprep.mubr.bf16.mxu0 0
        %2189 = vmatmul.mubr.bf16.gmra.mrb[0].mxu0 %v2098
        %v2190 = vpop.f32.mrb[0].mxu0
        %v2191 = vadd.f32 0.0, %v2190
        %v2192 = vpop.f32.mrb[0].mxu0
        %v2193 = vpop.f32.mrb[0].mxu0
        %v2194 = vadd.f32 0.0, %v2193
        %v2195 = vpop.f32.mrb[0].mxu0
        %2196 = vmatprep.mubr.bf16.mxu0 0
        %2197 = vmatmul.mubr.bf16.gmra.mrb[0].mxu0 %v2099
        %v2198 = vpop.f32.mrb[0].mxu0
        %v2199 = vadd.f32 0.0, %v2198
        %v2200 = vpop.f32.mrb[0].mxu0
        %v2201 = vpop.f32.mrb[0].mxu0
        %v2202 = vadd.f32 0.0, %v2201
        %v2203 = vpop.f32.mrb[0].mxu0
        %2204 = vdwg.mxu0
        %2205 = vmatprep.subr.bf16.mxu0 0
        %2206 = vmatpush1.bf16.msra.mxu0 %v1535
        %2207 = vmatprep.subr.bf16.mxu0 0
        %2208 = vmatpush1.bf16.msra.mxu0 %v1541
        %2209 = vmatprep.subr.bf16.mxu0 0
        %2210 = vmatpush1.bf16.msra.mxu0 %v1547
        %2211 = vmatprep.subr.bf16.mxu0 0
        %2212 = vmatpush1.bf16.msra.mxu0 %v1553
        %2213 = vmatprep.subr.bf16.mxu0 0
        %2214 = vmatpush1.bf16.msra.mxu0 %v1559
        %2215 = vmatprep.subr.bf16.mxu0 0
        %2216 = vmatpush1.bf16.msra.mxu0 %v1565
        %2217 = vmatprep.subr.bf16.mxu0 0
        %2218 = vmatpush1.bf16.msra.mxu0 %v1571
        %2219 = vmatprep.subr.bf16.mxu0 0
        %2220 = vmatpush1.bf16.msra.mxu0 %v1577
        %2221 = vmatprep.subr.bf16.mxu0 0
        %2222 = vmatpush1.bf16.msra.mxu0 0
        %2223 = vmatprep.subr.bf16.mxu0 0
        %2224 = vmatpush1.bf16.msra.mxu0 0
        %2225 = vmatprep.subr.bf16.mxu0 0
        %2226 = vmatpush1.bf16.msra.mxu0 0
        %2227 = vmatprep.subr.bf16.mxu0 0
        %2228 = vmatpush1.bf16.msra.mxu0 0
        %2229 = vmatprep.subr.bf16.mxu0 0
        %2230 = vmatpush1.bf16.msra.mxu0 0
        %2231 = vmatprep.subr.bf16.mxu0 0
        %2232 = vmatpush1.bf16.msra.mxu0 0
        %2233 = vmatprep.subr.bf16.mxu0 0
        %2234 = vmatpush1.bf16.msra.mxu0 0
        %2235 = vmatprep.subr.bf16.mxu0 0
        %2236 = vmatpush1.bf16.msra.mxu0 0
        %2237 = vmatprep.mubr.bf16.mxu0 0
        %2238 = vmatmul.mubr.bf16.gmra.mrb[0].mxu0 %v2100
        %v2239 = vpop.f32.mrb[0].mxu0
        %v2240 = vadd.f32 0.0, %v2239
        %v2241 = vpop.f32.mrb[0].mxu0
        %v2242 = vpop.f32.mrb[0].mxu0
        %v2243 = vadd.f32 0.0, %v2242
        %v2244 = vpop.f32.mrb[0].mxu0
        %2245 = vmatprep.mubr.bf16.mxu0 0
        %2246 = vmatmul.mubr.bf16.gmra.mrb[0].mxu0 %v2101
        %v2247 = vpop.f32.mrb[0].mxu0
        %v2248 = vadd.f32 0.0, %v2247
        %v2249 = vpop.f32.mrb[0].mxu0
        %v2250 = vpop.f32.mrb[0].mxu0
        %v2251 = vadd.f32 0.0, %v2250
        %v2252 = vpop.f32.mrb[0].mxu0
        %2253 = vmatprep.mubr.bf16.mxu0 0
        %2254 = vmatmul.mubr.bf16.gmra.mrb[0].mxu0 %v2102
        %v2255 = vpop.f32.mrb[0].mxu0
        %v2256 = vadd.f32 0.0, %v2255
        %v2257 = vpop.f32.mrb[0].mxu0
        %v2258 = vpop.f32.mrb[0].mxu0
        %v2259 = vadd.f32 0.0, %v2258
        %v2260 = vpop.f32.mrb[0].mxu0
        %2261 = vmatprep.mubr.bf16.mxu0 0
        %2262 = vmatmul.mubr.bf16.gmra.mrb[0].mxu0 %v2103
        %v2263 = vpop.f32.mrb[0].mxu0
        %v2264 = vadd.f32 0.0, %v2263
        %v2265 = vpop.f32.mrb[0].mxu0
        %v2266 = vpop.f32.mrb[0].mxu0
        %v2267 = vadd.f32 0.0, %v2266
        %v2268 = vpop.f32.mrb[0].mxu0
        %2269 = vmatprep.mubr.bf16.mxu0 0
        %2270 = vmatmul.mubr.bf16.gmra.mrb[0].mxu0 %v2104
        %v2271 = vpop.f32.mrb[0].mxu0
        %v2272 = vadd.f32 0.0, %v2271
        %v2273 = vpop.f32.mrb[0].mxu0
        %v2274 = vpop.f32.mrb[0].mxu0
        %v2275 = vadd.f32 0.0, %v2274
        %v2276 = vpop.f32.mrb[0].mxu0
        %2277 = vmatprep.mubr.bf16.mxu0 0
        %2278 = vmatmul.mubr.bf16.gmra.mrb[0].mxu0 %v2105
        %v2279 = vpop.f32.mrb[0].mxu0
        %v2280 = vadd.f32 0.0, %v2279
        %v2281 = vpop.f32.mrb[0].mxu0
        %v2282 = vpop.f32.mrb[0].mxu0
        %v2283 = vadd.f32 0.0, %v2282
        %v2284 = vpop.f32.mrb[0].mxu0
        %2285 = vmatprep.mubr.bf16.mxu0 0
        %2286 = vmatmul.mubr.bf16.gmra.mrb[0].mxu0 %v2106
        %v2287 = vpop.f32.mrb[0].mxu0
        %v2288 = vadd.f32 0.0, %v2287
        %v2289 = vpop.f32.mrb[0].mxu0
        %v2290 = vpop.f32.mrb[0].mxu0
        %v2291 = vadd.f32 0.0, %v2290
        %v2292 = vpop.f32.mrb[0].mxu0
        %2293 = vmatprep.mubr.bf16.mxu0 0
        %2294 = vmatmul.mubr.bf16.gmra.mrb[0].mxu0 %v2107
        %v2295 = vpop.f32.mrb[0].mxu0
        %v2296 = vadd.f32 0.0, %v2295
        %v2297 = vpop.f32.mrb[0].mxu0
        %v2298 = vpop.f32.mrb[0].mxu0
        %v2299 = vadd.f32 0.0, %v2298
        %v2300 = vpop.f32.mrb[0].mxu0
        %2301 = vdwg.mxu0
        %v2302 = vpack.c.bf16 %v2146, %v2143
        %v2303 = vpack.c.bf16 %v2154, %v2151
        %v2304 = vpack.c.bf16 %v2162, %v2159
        %v2305 = vpack.c.bf16 %v2170, %v2167
        %v2306 = vpack.c.bf16 %v2178, %v2175
        %v2307 = vpack.c.bf16 %v2186, %v2183
        %v2308 = vpack.c.bf16 %v2194, %v2191
        %v2309 = vpack.c.bf16 %v2202, %v2199
        %v2310 = vpack.c.bf16 %v2243, %v2240
        %v2311 = vpack.c.bf16 %v2251, %v2248
        %v2312 = vpack.c.bf16 %v2259, %v2256
        %v2313 = vpack.c.bf16 %v2267, %v2264
        %v2314 = vpack.c.bf16 %v2275, %v2272
        %v2315 = vpack.c.bf16 %v2283, %v2280
        %v2316 = vpack.c.bf16 %v2291, %v2288
        %v2317 = vpack.c.bf16 %v2299, %v2296
        %s2318 = smul.u32 %s36, 2
        %s2319 = smul.addr %s2318, 8
        %s2320 = scalar_lea.vmem %s7, %s2319
        %v2321 = vld [vmem:[%s2320] sm:$0x3f]
        %v2322 = vld [vmem:[%s2320 + $0x8] sm:$0x3f]
        %s2323 = smul.u32 %s36, 64
        %s2324 = smul.addr %s2323, 4
        %s2325 = scalar_lea.vmem [#allocation9], %s2324
        %v2326 = vld [vmem:[%s2325] sm:$0xff]
        %v2327 = vld [vmem:[%s2325 + $0x8] sm:$0xff]
        %v2328 = vld [vmem:[%s2325 + $0x10] sm:$0xff]
        %v2329 = vld [vmem:[%s2325 + $0x18] sm:$0xff]
        %v2330 = vld [vmem:[%s2325 + $0x20] sm:$0xff]
        %v2331 = vld [vmem:[%s2325 + $0x28] sm:$0xff]
        %v2332 = vld [vmem:[%s2325 + $0x30] sm:$0xff]
        %v2333 = vld [vmem:[%s2325 + $0x38] sm:$0xff]
        %v2334 = vld [vmem:[%s2325 + $0x40] sm:$0xff]
        %v2335 = vld [vmem:[%s2325 + $0x48] sm:$0xff]
        %v2336 = vld [vmem:[%s2325 + $0x50] sm:$0xff]
        %v2337 = vld [vmem:[%s2325 + $0x58] sm:$0xff]
        %v2338 = vld [vmem:[%s2325 + $0x60] sm:$0xff]
        %v2339 = vld [vmem:[%s2325 + $0x68] sm:$0xff]
        %v2340 = vld [vmem:[%s2325 + $0x70] sm:$0xff]
        %v2341 = vld [vmem:[%s2325 + $0x78] sm:$0xff]
        %v2342 = vld [vmem:[%s2325 + $0x80] sm:$0xff]
        %v2343 = vld [vmem:[%s2325 + $0x88] sm:$0xff]
        %v2344 = vld [vmem:[%s2325 + $0x90] sm:$0xff]
        %v2345 = vld [vmem:[%s2325 + $0x98] sm:$0xff]
        %v2346 = vld [vmem:[%s2325 + $0xa0] sm:$0xff]
        %v2347 = vld [vmem:[%s2325 + $0xa8] sm:$0xff]
        %v2348 = vld [vmem:[%s2325 + $0xb0] sm:$0xff]
        %v2349 = vld [vmem:[%s2325 + $0xb8] sm:$0xff]
        %v2350 = vld [vmem:[%s2325 + $0xc0] sm:$0xff]
        %v2351 = vld [vmem:[%s2325 + $0xc8] sm:$0xff]
        %v2352 = vld [vmem:[%s2325 + $0xd0] sm:$0xff]
        %v2353 = vld [vmem:[%s2325 + $0xd8] sm:$0xff]
        %v2354 = vld [vmem:[%s2325 + $0xe0] sm:$0xff]
        %v2355 = vld [vmem:[%s2325 + $0xe8] sm:$0xff]
        %v2356 = vld [vmem:[%s2325 + $0xf0] sm:$0xff]
        %v2357 = vld [vmem:[%s2325 + $0xf8] sm:$0xff]
        %v2358 = vlaneseq
        %v2359 = vshrl.u32 %v2358, 7
        %v2360 = vsub.s32 0, %v2359
        %v2361 = vrot.slane %v2321, %v2360
        %v2362 = vlaneseq
        %v2363 = vshrl.u32 %v2362, 7
        %v2364 = vsub.s32 0, %v2363
        %v2365 = vrot.slane %v2322, %v2364
        %v2398 = vunpack.c.l.b16 %v2326
        %v2399 = vunpack.c.h.b16 %v2326
        %v2400 = vunpack.c.l.b16 %v2327
        %v2401 = vunpack.c.h.b16 %v2327
        %v2402 = vunpack.c.l.b16 %v2328
        %v2403 = vunpack.c.h.b16 %v2328
        %v2404 = vunpack.c.l.b16 %v2329
        %v2405 = vunpack.c.h.b16 %v2329
        %v2406 = vunpack.c.l.b16 %v2330
        %v2407 = vunpack.c.h.b16 %v2330
        %v2408 = vunpack.c.l.b16 %v2331
        %v2409 = vunpack.c.h.b16 %v2331
        %v2410 = vunpack.c.l.b16 %v2332
        %v2411 = vunpack.c.h.b16 %v2332
        %v2412 = vunpack.c.l.b16 %v2333
        %v2413 = vunpack.c.h.b16 %v2333
        %v2414 = vunpack.c.l.b16 %v2334
        %v2415 = vunpack.c.h.b16 %v2334
        %v2416 = vunpack.c.l.b16 %v2335
        %v2417 = vunpack.c.h.b16 %v2335
        %v2418 = vunpack.c.l.b16 %v2336
        %v2419 = vunpack.c.h.b16 %v2336
        %v2420 = vunpack.c.l.b16 %v2337
        %v2421 = vunpack.c.h.b16 %v2337
        %v2422 = vunpack.c.l.b16 %v2338
        %v2423 = vunpack.c.h.b16 %v2338
        %v2424 = vunpack.c.l.b16 %v2339
        %v2425 = vunpack.c.h.b16 %v2339
        %v2426 = vunpack.c.l.b16 %v2340
        %v2427 = vunpack.c.h.b16 %v2340
        %v2428 = vunpack.c.l.b16 %v2341
        %v2429 = vunpack.c.h.b16 %v2341
        %v2430 = vunpack.c.l.b16 %v2342
        %v2431 = vunpack.c.h.b16 %v2342
        %v2432 = vunpack.c.l.b16 %v2343
        %v2433 = vunpack.c.h.b16 %v2343
        %v2434 = vunpack.c.l.b16 %v2344
        %v2435 = vunpack.c.h.b16 %v2344
        %v2436 = vunpack.c.l.b16 %v2345
        %v2437 = vunpack.c.h.b16 %v2345
        %v2438 = vunpack.c.l.b16 %v2346
        %v2439 = vunpack.c.h.b16 %v2346
        %v2440 = vunpack.c.l.b16 %v2347
        %v2441 = vunpack.c.h.b16 %v2347
        %v2442 = vunpack.c.l.b16 %v2348
        %v2443 = vunpack.c.h.b16 %v2348
        %v2444 = vunpack.c.l.b16 %v2349
        %v2445 = vunpack.c.h.b16 %v2349
        %v2446 = vunpack.c.l.b16 %v2350
        %v2447 = vunpack.c.h.b16 %v2350
        %v2448 = vunpack.c.l.b16 %v2351
        %v2449 = vunpack.c.h.b16 %v2351
        %v2450 = vunpack.c.l.b16 %v2352
        %v2451 = vunpack.c.h.b16 %v2352
        %v2452 = vunpack.c.l.b16 %v2353
        %v2453 = vunpack.c.h.b16 %v2353
        %v2454 = vunpack.c.l.b16 %v2354
        %v2455 = vunpack.c.h.b16 %v2354
        %v2456 = vunpack.c.l.b16 %v2355
        %v2457 = vunpack.c.h.b16 %v2355
        %v2458 = vunpack.c.l.b16 %v2356
        %v2459 = vunpack.c.h.b16 %v2356
        %v2460 = vunpack.c.l.b16 %v2357
        %v2461 = vunpack.c.h.b16 %v2357
        %v2462 = vpack.c.b16 %v2400, %v2398
        %v2463 = vpack.c.b16 %v2401, %v2399
        %v2464 = vpack.c.b16 %v2404, %v2402
        %v2465 = vpack.c.b16 %v2405, %v2403
        %v2466 = vpack.c.b16 %v2408, %v2406
        %v2467 = vpack.c.b16 %v2409, %v2407
        %v2468 = vpack.c.b16 %v2412, %v2410
        %v2469 = vpack.c.b16 %v2413, %v2411
        %v2470 = vpack.c.b16 %v2416, %v2414
        %v2471 = vpack.c.b16 %v2417, %v2415
        %v2472 = vpack.c.b16 %v2420, %v2418
        %v2473 = vpack.c.b16 %v2421, %v2419
        %v2474 = vpack.c.b16 %v2424, %v2422
        %v2475 = vpack.c.b16 %v2425, %v2423
        %v2476 = vpack.c.b16 %v2428, %v2426
        %v2477 = vpack.c.b16 %v2429, %v2427
        %v2478 = vpack.c.b16 %v2432, %v2430
        %v2479 = vpack.c.b16 %v2433, %v2431
        %v2480 = vpack.c.b16 %v2436, %v2434
        %v2481 = vpack.c.b16 %v2437, %v2435
        %v2482 = vpack.c.b16 %v2440, %v2438
        %v2483 = vpack.c.b16 %v2441, %v2439
        %v2484 = vpack.c.b16 %v2444, %v2442
        %v2485 = vpack.c.b16 %v2445, %v2443
        %v2486 = vpack.c.b16 %v2448, %v2446
        %v2487 = vpack.c.b16 %v2449, %v2447
        %v2488 = vpack.c.b16 %v2452, %v2450
        %v2489 = vpack.c.b16 %v2453, %v2451
        %v2490 = vpack.c.b16 %v2456, %v2454
        %v2491 = vpack.c.b16 %v2457, %v2455
        %v2492 = vpack.c.b16 %v2460, %v2458
        %v2493 = vpack.c.b16 %v2461, %v2459
        %2526 = vmatprep.subr.bf16.mxu0 %v2463
        %2527 = vmatpush1.bf16.msra.mxu0 %v2462
        %2528 = vmatprep.subr.bf16.mxu0 %v2465
        %2529 = vmatpush1.bf16.msra.mxu0 %v2464
        %2530 = vmatprep.subr.bf16.mxu0 %v2467
        %2531 = vmatpush1.bf16.msra.mxu0 %v2466
        %2532 = vmatprep.subr.bf16.mxu0 %v2469
        %2533 = vmatpush1.bf16.msra.mxu0 %v2468
        %2534 = vmatprep.subr.bf16.mxu0 %v2471
        %2535 = vmatpush1.bf16.msra.mxu0 %v2470
        %2536 = vmatprep.subr.bf16.mxu0 %v2473
        %2537 = vmatpush1.bf16.msra.mxu0 %v2472
        %2538 = vmatprep.subr.bf16.mxu0 %v2475
        %2539 = vmatpush1.bf16.msra.mxu0 %v2474
        %2540 = vmatprep.subr.bf16.mxu0 %v2477
        %2541 = vmatpush1.bf16.msra.mxu0 %v2476
        %2542 = vmatprep.subr.bf16.mxu0 %v2479
        %2543 = vmatpush1.bf16.msra.mxu0 %v2478
        %2544 = vmatprep.subr.bf16.mxu0 %v2481
        %2545 = vmatpush1.bf16.msra.mxu0 %v2480
        %2546 = vmatprep.subr.bf16.mxu0 %v2483
        %2547 = vmatpush1.bf16.msra.mxu0 %v2482
        %2548 = vmatprep.subr.bf16.mxu0 %v2485
        %2549 = vmatpush1.bf16.msra.mxu0 %v2484
        %2550 = vmatprep.subr.bf16.mxu0 %v2487
        %2551 = vmatpush1.bf16.msra.mxu0 %v2486
        %2552 = vmatprep.subr.bf16.mxu0 %v2489
        %2553 = vmatpush1.bf16.msra.mxu0 %v2488
        %2554 = vmatprep.subr.bf16.mxu0 %v2491
        %2555 = vmatpush1.bf16.msra.mxu0 %v2490
        %2556 = vmatprep.subr.bf16.mxu0 %v2493
        %2557 = vmatpush1.bf16.msra.mxu0 %v2492
        %2558 = vmatprep.mubr.bf16.mxu0 %v2310
        %2559 = vmatmul.mubr.bf16.gmra.mrb[0].mxu0 %v2302
        %v2560 = vpop.f32.mrb[0].mxu0
        %v2561 = vadd.f32 %v2361, %v2560
        %v2562 = vpop.f32.mrb[0].mxu0
        %v2563 = vadd.f32 %v2365, %v2562
        %v2564 = vpop.f32.mrb[0].mxu0
        %v2565 = vadd.f32 %v2361, %v2564
        %v2566 = vpop.f32.mrb[0].mxu0
        %v2567 = vadd.f32 %v2365, %v2566
        %2568 = vmatprep.mubr.bf16.mxu0 %v2311
        %2569 = vmatmul.mubr.bf16.gmra.mrb[0].mxu0 %v2303
        %v2570 = vpop.f32.mrb[0].mxu0
        %v2571 = vadd.f32 %v2361, %v2570
        %v2572 = vpop.f32.mrb[0].mxu0
        %v2573 = vadd.f32 %v2365, %v2572
        %v2574 = vpop.f32.mrb[0].mxu0
        %v2575 = vadd.f32 %v2361, %v2574
        %v2576 = vpop.f32.mrb[0].mxu0
        %v2577 = vadd.f32 %v2365, %v2576
        %2578 = vmatprep.mubr.bf16.mxu0 %v2312
        %2579 = vmatmul.mubr.bf16.gmra.mrb[0].mxu0 %v2304
        %v2580 = vpop.f32.mrb[0].mxu0
        %v2581 = vadd.f32 %v2361, %v2580
        %v2582 = vpop.f32.mrb[0].mxu0
        %v2583 = vadd.f32 %v2365, %v2582
        %v2584 = vpop.f32.mrb[0].mxu0
        %v2585 = vadd.f32 %v2361, %v2584
        %v2586 = vpop.f32.mrb[0].mxu0
        %v2587 = vadd.f32 %v2365, %v2586
        %2588 = vmatprep.mubr.bf16.mxu0 %v2313
        %2589 = vmatmul.mubr.bf16.gmra.mrb[0].mxu0 %v2305
        %v2590 = vpop.f32.mrb[0].mxu0
        %v2591 = vadd.f32 %v2361, %v2590
        %v2592 = vpop.f32.mrb[0].mxu0
        %v2593 = vadd.f32 %v2365, %v2592
        %v2594 = vpop.f32.mrb[0].mxu0
        %v2595 = vadd.f32 %v2361, %v2594
        %v2596 = vpop.f32.mrb[0].mxu0
        %v2597 = vadd.f32 %v2365, %v2596
        %2598 = vmatprep.mubr.bf16.mxu0 %v2314
        %2599 = vmatmul.mubr.bf16.gmra.mrb[0].mxu0 %v2306
        %v2600 = vpop.f32.mrb[0].mxu0
        %v2601 = vadd.f32 %v2361, %v2600
        %v2602 = vpop.f32.mrb[0].mxu0
        %v2603 = vadd.f32 %v2365, %v2602
        %v2604 = vpop.f32.mrb[0].mxu0
        %v2605 = vadd.f32 %v2361, %v2604
        %v2606 = vpop.f32.mrb[0].mxu0
        %v2607 = vadd.f32 %v2365, %v2606
        %2608 = vmatprep.mubr.bf16.mxu0 %v2315
        %2609 = vmatmul.mubr.bf16.gmra.mrb[0].mxu0 %v2307
        %v2610 = vpop.f32.mrb[0].mxu0
        %v2611 = vadd.f32 %v2361, %v2610
        %v2612 = vpop.f32.mrb[0].mxu0
        %v2613 = vadd.f32 %v2365, %v2612
        %v2614 = vpop.f32.mrb[0].mxu0
        %v2615 = vadd.f32 %v2361, %v2614
        %v2616 = vpop.f32.mrb[0].mxu0
        %v2617 = vadd.f32 %v2365, %v2616
        %2618 = vmatprep.mubr.bf16.mxu0 %v2316
        %2619 = vmatmul.mubr.bf16.gmra.mrb[0].mxu0 %v2308
        %v2620 = vpop.f32.mrb[0].mxu0
        %v2621 = vadd.f32 %v2361, %v2620
        %v2622 = vpop.f32.mrb[0].mxu0
        %v2623 = vadd.f32 %v2365, %v2622
        %v2624 = vpop.f32.mrb[0].mxu0
        %v2625 = vadd.f32 %v2361, %v2624
        %v2626 = vpop.f32.mrb[0].mxu0
        %v2627 = vadd.f32 %v2365, %v2626
        %2628 = vmatprep.mubr.bf16.mxu0 %v2317
        %2629 = vmatmul.mubr.bf16.gmra.mrb[0].mxu0 %v2309
        %v2630 = vpop.f32.mrb[0].mxu0
        %v2631 = vadd.f32 %v2361, %v2630
        %v2632 = vpop.f32.mrb[0].mxu0
        %v2633 = vadd.f32 %v2365, %v2632
        %v2634 = vpop.f32.mrb[0].mxu0
        %v2635 = vadd.f32 %v2361, %v2634
        %v2636 = vpop.f32.mrb[0].mxu0
        %v2637 = vadd.f32 %v2365, %v2636
        %2638 = vdwg.mxu0
        %v2639 = vadd.f32 %v2561, %v530
        %v2640 = vadd.f32 %v2563, %v531
        %v2641 = vadd.f32 %v2565, %v532
        %v2642 = vadd.f32 %v2567, %v533
        %v2643 = vadd.f32 %v2571, %v534
        %v2644 = vadd.f32 %v2573, %v535
        %v2645 = vadd.f32 %v2575, %v536
        %v2646 = vadd.f32 %v2577, %v537
        %v2647 = vadd.f32 %v2581, %v538
        %v2648 = vadd.f32 %v2583, %v539
        %v2649 = vadd.f32 %v2585, %v540
        %v2650 = vadd.f32 %v2587, %v541
        %v2651 = vadd.f32 %v2591, %v542
        %v2652 = vadd.f32 %v2593, %v543
        %v2653 = vadd.f32 %v2595, %v544
        %v2654 = vadd.f32 %v2597, %v545
        %v2655 = vadd.f32 %v2601, %v546
        %v2656 = vadd.f32 %v2603, %v547
        %v2657 = vadd.f32 %v2605, %v548
        %v2658 = vadd.f32 %v2607, %v549
        %v2659 = vadd.f32 %v2611, %v550
        %v2660 = vadd.f32 %v2613, %v551
        %v2661 = vadd.f32 %v2615, %v552
        %v2662 = vadd.f32 %v2617, %v553
        %v2663 = vadd.f32 %v2621, %v554
        %v2664 = vadd.f32 %v2623, %v555
        %v2665 = vadd.f32 %v2625, %v556
        %v2666 = vadd.f32 %v2627, %v557
        %v2667 = vadd.f32 %v2631, %v558
        %v2668 = vadd.f32 %v2633, %v559
        %v2669 = vadd.f32 %v2635, %v560
        %v2670 = vadd.f32 %v2637, %v561
        %v2671 = vadd.f32 %v2639, %v2640
        %2672 = vadd.xlane.f32.xlu0 %v2671
        %v2673 = vpop.xlane.xlu0 %2672
        %v2674 = vadd.f32 %v2641, %v2642
        %2675 = vadd.xlane.f32.xlu0 %v2674
        %v2676 = vpop.xlane.xlu0 %2675
        %v2677 = vadd.f32 %v2643, %v2644
        %2678 = vadd.xlane.f32.xlu0 %v2677
        %v2679 = vpop.xlane.xlu0 %2678
        %v2680 = vadd.f32 %v2645, %v2646
        %2681 = vadd.xlane.f32.xlu0 %v2680
        %v2682 = vpop.xlane.xlu0 %2681
        %v2683 = vadd.f32 %v2647, %v2648
        %2684 = vadd.xlane.f32.xlu0 %v2683
        %v2685 = vpop.xlane.xlu0 %2684
        %v2686 = vadd.f32 %v2649, %v2650
        %2687 = vadd.xlane.f32.xlu0 %v2686
        %v2688 = vpop.xlane.xlu0 %2687
        %v2689 = vadd.f32 %v2651, %v2652
        %2690 = vadd.xlane.f32.xlu0 %v2689
        %v2691 = vpop.xlane.xlu0 %2690
        %v2692 = vadd.f32 %v2653, %v2654
        %2693 = vadd.xlane.f32.xlu0 %v2692
        %v2694 = vpop.xlane.xlu0 %2693
        %v2695 = vadd.f32 %v2655, %v2656
        %2696 = vadd.xlane.f32.xlu0 %v2695
        %v2697 = vpop.xlane.xlu0 %2696
        %v2698 = vadd.f32 %v2657, %v2658
        %2699 = vadd.xlane.f32.xlu0 %v2698
        %v2700 = vpop.xlane.xlu0 %2699
        %v2701 = vadd.f32 %v2659, %v2660
        %2702 = vadd.xlane.f32.xlu0 %v2701
        %v2703 = vpop.xlane.xlu0 %2702
        %v2704 = vadd.f32 %v2661, %v2662
        %2705 = vadd.xlane.f32.xlu0 %v2704
        %v2706 = vpop.xlane.xlu0 %2705
        %v2707 = vadd.f32 %v2663, %v2664
        %2708 = vadd.xlane.f32.xlu0 %v2707
        %v2709 = vpop.xlane.xlu0 %2708
        %v2710 = vadd.f32 %v2665, %v2666
        %2711 = vadd.xlane.f32.xlu0 %v2710
        %v2712 = vpop.xlane.xlu0 %2711
        %v2713 = vadd.f32 %v2667, %v2668
        %2714 = vadd.xlane.f32.xlu0 %v2713
        %v2715 = vpop.xlane.xlu0 %2714
        %v2716 = vadd.f32 %v2669, %v2670
        %2717 = vadd.xlane.f32.xlu0 %v2716
        %v2718 = vpop.xlane.xlu0 %2717
        %v2719 = vrcp.pop 256.0
        %v2720 = vmul.f32 %v2673, %v2719
        %v2721 = vmul.f32 %v2676, %v2719
        %v2722 = vmul.f32 %v2679, %v2719
        %v2723 = vmul.f32 %v2682, %v2719
        %v2724 = vmul.f32 %v2685, %v2719
        %v2725 = vmul.f32 %v2688, %v2719
        %v2726 = vmul.f32 %v2691, %v2719
        %v2727 = vmul.f32 %v2694, %v2719
        %v2728 = vmul.f32 %v2697, %v2719
        %v2729 = vmul.f32 %v2700, %v2719
        %v2730 = vmul.f32 %v2703, %v2719
        %v2731 = vmul.f32 %v2706, %v2719
        %v2732 = vmul.f32 %v2709, %v2719
        %v2733 = vmul.f32 %v2712, %v2719
        %v2734 = vmul.f32 %v2715, %v2719
        %v2735 = vmul.f32 %v2718, %v2719
        %v2736 = vsub.f32 %v2639, %v2720
        %v2737 = vsub.f32 %v2640, %v2720
        %v2738 = vsub.f32 %v2641, %v2721
        %v2739 = vsub.f32 %v2642, %v2721
        %v2740 = vsub.f32 %v2643, %v2722
        %v2741 = vsub.f32 %v2644, %v2722
        %v2742 = vsub.f32 %v2645, %v2723
        %v2743 = vsub.f32 %v2646, %v2723
        %v2744 = vsub.f32 %v2647, %v2724
        %v2745 = vsub.f32 %v2648, %v2724
        %v2746 = vsub.f32 %v2649, %v2725
        %v2747 = vsub.f32 %v2650, %v2725
        %v2748 = vsub.f32 %v2651, %v2726
        %v2749 = vsub.f32 %v2652, %v2726
        %v2750 = vsub.f32 %v2653, %v2727
        %v2751 = vsub.f32 %v2654, %v2727
        %v2752 = vsub.f32 %v2655, %v2728
        %v2753 = vsub.f32 %v2656, %v2728
        %v2754 = vsub.f32 %v2657, %v2729
        %v2755 = vsub.f32 %v2658, %v2729
        %v2756 = vsub.f32 %v2659, %v2730
        %v2757 = vsub.f32 %v2660, %v2730
        %v2758 = vsub.f32 %v2661, %v2731
        %v2759 = vsub.f32 %v2662, %v2731
        %v2760 = vsub.f32 %v2663, %v2732
        %v2761 = vsub.f32 %v2664, %v2732
        %v2762 = vsub.f32 %v2665, %v2733
        %v2763 = vsub.f32 %v2666, %v2733
        %v2764 = vsub.f32 %v2667, %v2734
        %v2765 = vsub.f32 %v2668, %v2734
        %v2766 = vsub.f32 %v2669, %v2735
        %v2767 = vsub.f32 %v2670, %v2735
        %v2768 = vmul.f32 %v2736, %v2736
        %v2769 = vmul.f32 %v2737, %v2737
        %v2770 = vmul.f32 %v2738, %v2738
        %v2771 = vmul.f32 %v2739, %v2739
        %v2772 = vmul.f32 %v2740, %v2740
        %v2773 = vmul.f32 %v2741, %v2741
        %v2774 = vmul.f32 %v2742, %v2742
        %v2775 = vmul.f32 %v2743, %v2743
        %v2776 = vmul.f32 %v2744, %v2744
        %v2777 = vmul.f32 %v2745, %v2745
        %v2778 = vmul.f32 %v2746, %v2746
        %v2779 = vmul.f32 %v2747, %v2747
        %v2780 = vmul.f32 %v2748, %v2748
        %v2781 = vmul.f32 %v2749, %v2749
        %v2782 = vmul.f32 %v2750, %v2750
        %v2783 = vmul.f32 %v2751, %v2751
        %v2784 = vmul.f32 %v2752, %v2752
        %v2785 = vmul.f32 %v2753, %v2753
        %v2786 = vmul.f32 %v2754, %v2754
        %v2787 = vmul.f32 %v2755, %v2755
        %v2788 = vmul.f32 %v2756, %v2756
        %v2789 = vmul.f32 %v2757, %v2757
        %v2790 = vmul.f32 %v2758, %v2758
        %v2791 = vmul.f32 %v2759, %v2759
        %v2792 = vmul.f32 %v2760, %v2760
        %v2793 = vmul.f32 %v2761, %v2761
        %v2794 = vmul.f32 %v2762, %v2762
        %v2795 = vmul.f32 %v2763, %v2763
        %v2796 = vmul.f32 %v2764, %v2764
        %v2797 = vmul.f32 %v2765, %v2765
        %v2798 = vmul.f32 %v2766, %v2766
        %v2799 = vmul.f32 %v2767, %v2767
        %v2800 = vadd.f32 %v2768, %v2769
        %2801 = vadd.xlane.f32.xlu0 %v2800
        %v2802 = vpop.xlane.xlu0 %2801
        %v2803 = vadd.f32 %v2770, %v2771
        %2804 = vadd.xlane.f32.xlu0 %v2803
        %v2805 = vpop.xlane.xlu0 %2804
        %v2806 = vadd.f32 %v2772, %v2773
        %2807 = vadd.xlane.f32.xlu0 %v2806
        %v2808 = vpop.xlane.xlu0 %2807
        %v2809 = vadd.f32 %v2774, %v2775
        %2810 = vadd.xlane.f32.xlu0 %v2809
        %v2811 = vpop.xlane.xlu0 %2810
        %v2812 = vadd.f32 %v2776, %v2777
        %2813 = vadd.xlane.f32.xlu0 %v2812
        %v2814 = vpop.xlane.xlu0 %2813
        %v2815 = vadd.f32 %v2778, %v2779
        %2816 = vadd.xlane.f32.xlu0 %v2815
        %v2817 = vpop.xlane.xlu0 %2816
        %v2818 = vadd.f32 %v2780, %v2781
        %2819 = vadd.xlane.f32.xlu0 %v2818
        %v2820 = vpop.xlane.xlu0 %2819
        %v2821 = vadd.f32 %v2782, %v2783
        %2822 = vadd.xlane.f32.xlu0 %v2821
        %v2823 = vpop.xlane.xlu0 %2822
        %v2824 = vadd.f32 %v2784, %v2785
        %2825 = vadd.xlane.f32.xlu0 %v2824
        %v2826 = vpop.xlane.xlu0 %2825
        %v2827 = vadd.f32 %v2786, %v2787
        %2828 = vadd.xlane.f32.xlu0 %v2827
        %v2829 = vpop.xlane.xlu0 %2828
        %v2830 = vadd.f32 %v2788, %v2789
        %2831 = vadd.xlane.f32.xlu0 %v2830
        %v2832 = vpop.xlane.xlu0 %2831
        %v2833 = vadd.f32 %v2790, %v2791
        %2834 = vadd.xlane.f32.xlu0 %v2833
        %v2835 = vpop.xlane.xlu0 %2834
        %v2836 = vadd.f32 %v2792, %v2793
        %2837 = vadd.xlane.f32.xlu0 %v2836
        %v2838 = vpop.xlane.xlu0 %2837
        %v2839 = vadd.f32 %v2794, %v2795
        %2840 = vadd.xlane.f32.xlu0 %v2839
        %v2841 = vpop.xlane.xlu0 %2840
        %v2842 = vadd.f32 %v2796, %v2797
        %2843 = vadd.xlane.f32.xlu0 %v2842
        %v2844 = vpop.xlane.xlu0 %2843
        %v2845 = vadd.f32 %v2798, %v2799
        %2846 = vadd.xlane.f32.xlu0 %v2845
        %v2847 = vpop.xlane.xlu0 %2846
        %v2848 = vmul.f32 %v2802, %v2719
        %v2849 = vmul.f32 %v2805, %v2719
        %v2850 = vmul.f32 %v2808, %v2719
        %v2851 = vmul.f32 %v2811, %v2719
        %v2852 = vmul.f32 %v2814, %v2719
        %v2853 = vmul.f32 %v2817, %v2719
        %v2854 = vmul.f32 %v2820, %v2719
        %v2855 = vmul.f32 %v2823, %v2719
        %v2856 = vmul.f32 %v2826, %v2719
        %v2857 = vmul.f32 %v2829, %v2719
        %v2858 = vmul.f32 %v2832, %v2719
        %v2859 = vmul.f32 %v2835, %v2719
        %v2860 = vmul.f32 %v2838, %v2719
        %v2861 = vmul.f32 %v2841, %v2719
        %v2862 = vmul.f32 %v2844, %v2719
        %v2863 = vmul.f32 %v2847, %v2719
        %v2864 = vadd.f32 %v2848, 1e-06
        %v2865 = vadd.f32 %v2849, 1e-06
        %v2866 = vadd.f32 %v2850, 1e-06
        %v2867 = vadd.f32 %v2851, 1e-06
        %v2868 = vadd.f32 %v2852, 1e-06
        %v2869 = vadd.f32 %v2853, 1e-06
        %v2870 = vadd.f32 %v2854, 1e-06
        %v2871 = vadd.f32 %v2855, 1e-06
        %v2872 = vadd.f32 %v2856, 1e-06
        %v2873 = vadd.f32 %v2857, 1e-06
        %v2874 = vadd.f32 %v2858, 1e-06
        %v2875 = vadd.f32 %v2859, 1e-06
        %v2876 = vadd.f32 %v2860, 1e-06
        %v2877 = vadd.f32 %v2861, 1e-06
        %v2878 = vadd.f32 %v2862, 1e-06
        %v2879 = vadd.f32 %v2863, 1e-06
        %v2880 = vrsqrt.pop %v2864
        %v2881 = vrsqrt.pop %v2865
        %v2882 = vrsqrt.pop %v2866
        %v2883 = vrsqrt.pop %v2867
        %v2884 = vrsqrt.pop %v2868
        %v2885 = vrsqrt.pop %v2869
        %v2886 = vrsqrt.pop %v2870
        %v2887 = vrsqrt.pop %v2871
        %v2888 = vrsqrt.pop %v2872
        %v2889 = vrsqrt.pop %v2873
        %v2890 = vrsqrt.pop %v2874
        %v2891 = vrsqrt.pop %v2875
        %v2892 = vrsqrt.pop %v2876
        %v2893 = vrsqrt.pop %v2877
        %v2894 = vrsqrt.pop %v2878
        %v2895 = vrsqrt.pop %v2879
        %v2896 = vmul.f32 %v2736, %v2880
        %v2897 = vmul.f32 %v2737, %v2880
        %v2898 = vmul.f32 %v2738, %v2881
        %v2899 = vmul.f32 %v2739, %v2881
        %v2900 = vmul.f32 %v2740, %v2882
        %v2901 = vmul.f32 %v2741, %v2882
        %v2902 = vmul.f32 %v2742, %v2883
        %v2903 = vmul.f32 %v2743, %v2883
        %v2904 = vmul.f32 %v2744, %v2884
        %v2905 = vmul.f32 %v2745, %v2884
        %v2906 = vmul.f32 %v2746, %v2885
        %v2907 = vmul.f32 %v2747, %v2885
        %v2908 = vmul.f32 %v2748, %v2886
        %v2909 = vmul.f32 %v2749, %v2886
        %v2910 = vmul.f32 %v2750, %v2887
        %v2911 = vmul.f32 %v2751, %v2887
        %v2912 = vmul.f32 %v2752, %v2888
        %v2913 = vmul.f32 %v2753, %v2888
        %v2914 = vmul.f32 %v2754, %v2889
        %v2915 = vmul.f32 %v2755, %v2889
        %v2916 = vmul.f32 %v2756, %v2890
        %v2917 = vmul.f32 %v2757, %v2890
        %v2918 = vmul.f32 %v2758, %v2891
        %v2919 = vmul.f32 %v2759, %v2891
        %v2920 = vmul.f32 %v2760, %v2892
        %v2921 = vmul.f32 %v2761, %v2892
        %v2922 = vmul.f32 %v2762, %v2893
        %v2923 = vmul.f32 %v2763, %v2893
        %v2924 = vmul.f32 %v2764, %v2894
        %v2925 = vmul.f32 %v2765, %v2894
        %v2926 = vmul.f32 %v2766, %v2895
        %v2927 = vmul.f32 %v2767, %v2895
        %v2928 = vlaneseq
        %v2929 = vshrl.u32 %v2928, 7
        %v2930 = vsub.s32 1, %v2929
        %v2931 = vrot.slane %v2321, %v2930
        %v2932 = vlaneseq
        %v2933 = vshrl.u32 %v2932, 7
        %v2934 = vsub.s32 1, %v2933
        %v2935 = vrot.slane %v2322, %v2934
        %v2936 = vmul.f32 %v2896, %v2931
        %v2937 = vmul.f32 %v2897, %v2935
        %v2938 = vmul.f32 %v2898, %v2931
        %v2939 = vmul.f32 %v2899, %v2935
        %v2940 = vmul.f32 %v2900, %v2931
        %v2941 = vmul.f32 %v2901, %v2935
        %v2942 = vmul.f32 %v2902, %v2931
        %v2943 = vmul.f32 %v2903, %v2935
        %v2944 = vmul.f32 %v2904, %v2931
        %v2945 = vmul.f32 %v2905, %v2935
        %v2946 = vmul.f32 %v2906, %v2931
        %v2947 = vmul.f32 %v2907, %v2935
        %v2948 = vmul.f32 %v2908, %v2931
        %v2949 = vmul.f32 %v2909, %v2935
        %v2950 = vmul.f32 %v2910, %v2931
        %v2951 = vmul.f32 %v2911, %v2935
        %v2952 = vmul.f32 %v2912, %v2931
        %v2953 = vmul.f32 %v2913, %v2935
        %v2954 = vmul.f32 %v2914, %v2931
        %v2955 = vmul.f32 %v2915, %v2935
        %v2956 = vmul.f32 %v2916, %v2931
        %v2957 = vmul.f32 %v2917, %v2935
        %v2958 = vmul.f32 %v2918, %v2931
        %v2959 = vmul.f32 %v2919, %v2935
        %v2960 = vmul.f32 %v2920, %v2931
        %v2961 = vmul.f32 %v2921, %v2935
        %v2962 = vmul.f32 %v2922, %v2931
        %v2963 = vmul.f32 %v2923, %v2935
        %v2964 = vmul.f32 %v2924, %v2931
        %v2965 = vmul.f32 %v2925, %v2935
        %v2966 = vmul.f32 %v2926, %v2931
        %v2967 = vmul.f32 %v2927, %v2935
        %v2968 = vlaneseq
        %v2969 = vshrl.u32 %v2968, 7
        %v2970 = vsub.s32 2, %v2969
        %v2971 = vrot.slane %v2321, %v2970
        %v2972 = vlaneseq
        %v2973 = vshrl.u32 %v2972, 7
        %v2974 = vsub.s32 2, %v2973
        %v2975 = vrot.slane %v2322, %v2974
        %v2976 = vadd.f32 %v2936, %v2971
        %v2977 = vadd.f32 %v2937, %v2975
        %v2978 = vadd.f32 %v2938, %v2971
        %v2979 = vadd.f32 %v2939, %v2975
        %v2980 = vadd.f32 %v2940, %v2971
        %v2981 = vadd.f32 %v2941, %v2975
        %v2982 = vadd.f32 %v2942, %v2971
        %v2983 = vadd.f32 %v2943, %v2975
        %v2984 = vadd.f32 %v2944, %v2971
        %v2985 = vadd.f32 %v2945, %v2975
        %v2986 = vadd.f32 %v2946, %v2971
        %v2987 = vadd.f32 %v2947, %v2975
        %v2988 = vadd.f32 %v2948, %v2971
        %v2989 = vadd.f32 %v2949, %v2975
        %v2990 = vadd.f32 %v2950, %v2971
        %v2991 = vadd.f32 %v2951, %v2975
        %v2992 = vadd.f32 %v2952, %v2971
        %v2993 = vadd.f32 %v2953, %v2975
        %v2994 = vadd.f32 %v2954, %v2971
        %v2995 = vadd.f32 %v2955, %v2975
        %v2996 = vadd.f32 %v2956, %v2971
        %v2997 = vadd.f32 %v2957, %v2975
        %v2998 = vadd.f32 %v2958, %v2971
        %v2999 = vadd.f32 %v2959, %v2975
        %v3000 = vadd.f32 %v2960, %v2971
        %v3001 = vadd.f32 %v2961, %v2975
        %v3002 = vadd.f32 %v2962, %v2971
        %v3003 = vadd.f32 %v2963, %v2975
        %v3004 = vadd.f32 %v2964, %v2971
        %v3005 = vadd.f32 %v2965, %v2975
        %v3006 = vadd.f32 %v2966, %v2971
        %v3007 = vadd.f32 %v2967, %v2975
        %v3008 = vpack.c.bf16 %v2978, %v2976
        %v3009 = vpack.c.bf16 %v2979, %v2977
        %v3010 = vpack.c.bf16 %v2982, %v2980
        %v3011 = vpack.c.bf16 %v2983, %v2981
        %v3012 = vpack.c.bf16 %v2986, %v2984
        %v3013 = vpack.c.bf16 %v2987, %v2985
        %v3014 = vpack.c.bf16 %v2990, %v2988
        %v3015 = vpack.c.bf16 %v2991, %v2989
        %v3016 = vpack.c.bf16 %v2994, %v2992
        %v3017 = vpack.c.bf16 %v2995, %v2993
        %v3018 = vpack.c.bf16 %v2998, %v2996
        %v3019 = vpack.c.bf16 %v2999, %v2997
        %v3020 = vpack.c.bf16 %v3002, %v3000
        %v3021 = vpack.c.bf16 %v3003, %v3001
        %v3022 = vpack.c.bf16 %v3006, %v3004
        %v3023 = vpack.c.bf16 %v3007, %v3005
        %s3024 = smul.u32 %s36, 128
        %s3025 = smul.addr %s3024, 4
        %s3026 = scalar_lea.vmem [#allocation11], %s3025
        %v3027 = vld [vmem:[%s3026] sm:$0xff]
        %v3028 = vld [vmem:[%s3026 + $0x8] sm:$0xff]
        %v3029 = vld [vmem:[%s3026 + $0x10] sm:$0xff]
        %v3030 = vld [vmem:[%s3026 + $0x18] sm:$0xff]
        %v3031 = vld [vmem:[%s3026 + $0x20] sm:$0xff]
        %v3032 = vld [vmem:[%s3026 + $0x28] sm:$0xff]
        %v3033 = vld [vmem:[%s3026 + $0x30] sm:$0xff]
        %v3034 = vld [vmem:[%s3026 + $0x38] sm:$0xff]
        %v3035 = vld [vmem:[%s3026 + $0x40] sm:$0xff]
        %v3036 = vld [vmem:[%s3026 + $0x48] sm:$0xff]
        %v3037 = vld [vmem:[%s3026 + $0x50] sm:$0xff]
        %v3038 = vld [vmem:[%s3026 + $0x58] sm:$0xff]
        %v3039 = vld [vmem:[%s3026 + $0x60] sm:$0xff]
        %v3040 = vld [vmem:[%s3026 + $0x68] sm:$0xff]
        %v3041 = vld [vmem:[%s3026 + $0x70] sm:$0xff]
        %v3042 = vld [vmem:[%s3026 + $0x78] sm:$0xff]
        %v3043 = vld [vmem:[%s3026 + $0x80] sm:$0xff]
        %v3044 = vld [vmem:[%s3026 + $0x88] sm:$0xff]
        %v3045 = vld [vmem:[%s3026 + $0x90] sm:$0xff]
        %v3046 = vld [vmem:[%s3026 + $0x98] sm:$0xff]
        %v3047 = vld [vmem:[%s3026 + $0xa0] sm:$0xff]
        %v3048 = vld [vmem:[%s3026 + $0xa8] sm:$0xff]
        %v3049 = vld [vmem:[%s3026 + $0xb0] sm:$0xff]
        %v3050 = vld [vmem:[%s3026 + $0xb8] sm:$0xff]
        %v3051 = vld [vmem:[%s3026 + $0xc0] sm:$0xff]
        %v3052 = vld [vmem:[%s3026 + $0xc8] sm:$0xff]
        %v3053 = vld [vmem:[%s3026 + $0xd0] sm:$0xff]
        %v3054 = vld [vmem:[%s3026 + $0xd8] sm:$0xff]
        %v3055 = vld [vmem:[%s3026 + $0xe0] sm:$0xff]
        %v3056 = vld [vmem:[%s3026 + $0xe8] sm:$0xff]
        %v3057 = vld [vmem:[%s3026 + $0xf0] sm:$0xff]
        %v3058 = vld [vmem:[%s3026 + $0xf8] sm:$0xff]
        %v3059 = vld [vmem:[%s3026 + $0x100] sm:$0xff]
        %v3060 = vld [vmem:[%s3026 + $0x108] sm:$0xff]
        %v3061 = vld [vmem:[%s3026 + $0x110] sm:$0xff]
        %v3062 = vld [vmem:[%s3026 + $0x118] sm:$0xff]
        %v3063 = vld [vmem:[%s3026 + $0x120] sm:$0xff]
        %v3064 = vld [vmem:[%s3026 + $0x128] sm:$0xff]
        %v3065 = vld [vmem:[%s3026 + $0x130] sm:$0xff]
        %v3066 = vld [vmem:[%s3026 + $0x138] sm:$0xff]
        %v3067 = vld [vmem:[%s3026 + $0x140] sm:$0xff]
        %v3068 = vld [vmem:[%s3026 + $0x148] sm:$0xff]
        %v3069 = vld [vmem:[%s3026 + $0x150] sm:$0xff]
        %v3070 = vld [vmem:[%s3026 + $0x158] sm:$0xff]
        %v3071 = vld [vmem:[%s3026 + $0x160] sm:$0xff]
        %v3072 = vld [vmem:[%s3026 + $0x168] sm:$0xff]
        %v3073 = vld [vmem:[%s3026 + $0x170] sm:$0xff]
        %v3074 = vld [vmem:[%s3026 + $0x178] sm:$0xff]
        %v3075 = vld [vmem:[%s3026 + $0x180] sm:$0xff]
        %v3076 = vld [vmem:[%s3026 + $0x188] sm:$0xff]
        %v3077 = vld [vmem:[%s3026 + $0x190] sm:$0xff]
        %v3078 = vld [vmem:[%s3026 + $0x198] sm:$0xff]
        %v3079 = vld [vmem:[%s3026 + $0x1a0] sm:$0xff]
        %v3080 = vld [vmem:[%s3026 + $0x1a8] sm:$0xff]
        %v3081 = vld [vmem:[%s3026 + $0x1b0] sm:$0xff]
        %v3082 = vld [vmem:[%s3026 + $0x1b8] sm:$0xff]
        %v3083 = vld [vmem:[%s3026 + $0x1c0] sm:$0xff]
        %v3084 = vld [vmem:[%s3026 + $0x1c8] sm:$0xff]
        %v3085 = vld [vmem:[%s3026 + $0x1d0] sm:$0xff]
        %v3086 = vld [vmem:[%s3026 + $0x1d8] sm:$0xff]
        %v3087 = vld [vmem:[%s3026 + $0x1e0] sm:$0xff]
        %v3088 = vld [vmem:[%s3026 + $0x1e8] sm:$0xff]
        %v3089 = vld [vmem:[%s3026 + $0x1f0] sm:$0xff]
        %v3090 = vld [vmem:[%s3026 + $0x1f8] sm:$0xff]
        %s3091 = smul.u32 %s36, 4
        %s3092 = scalar_lea.vmem %s8, %s3091
        %v3093 = vld [vmem:[%s3092] sm:$0xf]
        %v3095 = vlaneseq
        %v3096 = vshrl.u32 %v3095, 7
        %v3097 = vsub.s32 0, %v3096
        %v3098 = vrot.slane %v3093, %v3097
        %v3099 = vlaneseq
        %v3100 = vshrl.u32 %v3099, 7
        %v3101 = vsub.s32 1, %v3100
        %v3102 = vrot.slane %v3093, %v3101
        %v3103 = vlaneseq
        %v3104 = vshrl.u32 %v3103, 7
        %v3105 = vsub.s32 2, %v3104
        %v3106 = vrot.slane %v3093, %v3105
        %v3107 = vlaneseq
        %v3108 = vshrl.u32 %v3107, 7
        %v3109 = vsub.s32 3, %v3108
        %v3110 = vrot.slane %v3093, %v3109
        %v3179 = vunpack.c.l.b16 %v3027
        %v3180 = vunpack.c.h.b16 %v3027
        %v3181 = vunpack.c.l.b16 %v3028
        %v3182 = vunpack.c.h.b16 %v3028
        %v3183 = vunpack.c.l.b16 %v3029
        %v3184 = vunpack.c.h.b16 %v3029
        %v3185 = vunpack.c.l.b16 %v3030
        %v3186 = vunpack.c.h.b16 %v3030
        %v3187 = vunpack.c.l.b16 %v3031
        %v3188 = vunpack.c.h.b16 %v3031
        %v3189 = vunpack.c.l.b16 %v3032
        %v3190 = vunpack.c.h.b16 %v3032
        %v3191 = vunpack.c.l.b16 %v3033
        %v3192 = vunpack.c.h.b16 %v3033
        %v3193 = vunpack.c.l.b16 %v3034
        %v3194 = vunpack.c.h.b16 %v3034
        %v3195 = vunpack.c.l.b16 %v3035
        %v3196 = vunpack.c.h.b16 %v3035
        %v3197 = vunpack.c.l.b16 %v3036
        %v3198 = vunpack.c.h.b16 %v3036
        %v3199 = vunpack.c.l.b16 %v3037
        %v3200 = vunpack.c.h.b16 %v3037
        %v3201 = vunpack.c.l.b16 %v3038
        %v3202 = vunpack.c.h.b16 %v3038
        %v3203 = vunpack.c.l.b16 %v3039
        %v3204 = vunpack.c.h.b16 %v3039
        %v3205 = vunpack.c.l.b16 %v3040
        %v3206 = vunpack.c.h.b16 %v3040
        %v3207 = vunpack.c.l.b16 %v3041
        %v3208 = vunpack.c.h.b16 %v3041
        %v3209 = vunpack.c.l.b16 %v3042
        %v3210 = vunpack.c.h.b16 %v3042
        %v3211 = vunpack.c.l.b16 %v3043
        %v3212 = vunpack.c.h.b16 %v3043
        %v3213 = vunpack.c.l.b16 %v3044
        %v3214 = vunpack.c.h.b16 %v3044
        %v3215 = vunpack.c.l.b16 %v3045
        %v3216 = vunpack.c.h.b16 %v3045
        %v3217 = vunpack.c.l.b16 %v3046
        %v3218 = vunpack.c.h.b16 %v3046
        %v3219 = vunpack.c.l.b16 %v3047
        %v3220 = vunpack.c.h.b16 %v3047
        %v3221 = vunpack.c.l.b16 %v3048
        %v3222 = vunpack.c.h.b16 %v3048
        %v3223 = vunpack.c.l.b16 %v3049
        %v3224 = vunpack.c.h.b16 %v3049
        %v3225 = vunpack.c.l.b16 %v3050
        %v3226 = vunpack.c.h.b16 %v3050
        %v3227 = vunpack.c.l.b16 %v3051
        %v3228 = vunpack.c.h.b16 %v3051
        %v3229 = vunpack.c.l.b16 %v3052
        %v3230 = vunpack.c.h.b16 %v3052
        %v3231 = vunpack.c.l.b16 %v3053
        %v3232 = vunpack.c.h.b16 %v3053
        %v3233 = vunpack.c.l.b16 %v3054
        %v3234 = vunpack.c.h.b16 %v3054
        %v3235 = vunpack.c.l.b16 %v3055
        %v3236 = vunpack.c.h.b16 %v3055
        %v3237 = vunpack.c.l.b16 %v3056
        %v3238 = vunpack.c.h.b16 %v3056
        %v3239 = vunpack.c.l.b16 %v3057
        %v3240 = vunpack.c.h.b16 %v3057
        %v3241 = vunpack.c.l.b16 %v3058
        %v3242 = vunpack.c.h.b16 %v3058
        %v3243 = vunpack.c.l.b16 %v3059
        %v3244 = vunpack.c.h.b16 %v3059
        %v3245 = vunpack.c.l.b16 %v3060
        %v3246 = vunpack.c.h.b16 %v3060
        %v3247 = vunpack.c.l.b16 %v3061
        %v3248 = vunpack.c.h.b16 %v3061
        %v3249 = vunpack.c.l.b16 %v3062
        %v3250 = vunpack.c.h.b16 %v3062
        %v3251 = vunpack.c.l.b16 %v3063
        %v3252 = vunpack.c.h.b16 %v3063
        %v3253 = vunpack.c.l.b16 %v3064
        %v3254 = vunpack.c.h.b16 %v3064
        %v3255 = vunpack.c.l.b16 %v3065
        %v3256 = vunpack.c.h.b16 %v3065
        %v3257 = vunpack.c.l.b16 %v3066
        %v3258 = vunpack.c.h.b16 %v3066
        %v3259 = vunpack.c.l.b16 %v3067
        %v3260 = vunpack.c.h.b16 %v3067
        %v3261 = vunpack.c.l.b16 %v3068
        %v3262 = vunpack.c.h.b16 %v3068
        %v3263 = vunpack.c.l.b16 %v3069
        %v3264 = vunpack.c.h.b16 %v3069
        %v3265 = vunpack.c.l.b16 %v3070
        %v3266 = vunpack.c.h.b16 %v3070
        %v3267 = vunpack.c.l.b16 %v3071
        %v3268 = vunpack.c.h.b16 %v3071
        %v3269 = vunpack.c.l.b16 %v3072
        %v3270 = vunpack.c.h.b16 %v3072
        %v3271 = vunpack.c.l.b16 %v3073
        %v3272 = vunpack.c.h.b16 %v3073
        %v3273 = vunpack.c.l.b16 %v3074
        %v3274 = vunpack.c.h.b16 %v3074
        %v3275 = vunpack.c.l.b16 %v3075
        %v3276 = vunpack.c.h.b16 %v3075
        %v3277 = vunpack.c.l.b16 %v3076
        %v3278 = vunpack.c.h.b16 %v3076
        %v3279 = vunpack.c.l.b16 %v3077
        %v3280 = vunpack.c.h.b16 %v3077
        %v3281 = vunpack.c.l.b16 %v3078
        %v3282 = vunpack.c.h.b16 %v3078
        %v3283 = vunpack.c.l.b16 %v3079
        %v3284 = vunpack.c.h.b16 %v3079
        %v3285 = vunpack.c.l.b16 %v3080
        %v3286 = vunpack.c.h.b16 %v3080
        %v3287 = vunpack.c.l.b16 %v3081
        %v3288 = vunpack.c.h.b16 %v3081
        %v3289 = vunpack.c.l.b16 %v3082
        %v3290 = vunpack.c.h.b16 %v3082
        %v3291 = vunpack.c.l.b16 %v3083
        %v3292 = vunpack.c.h.b16 %v3083
        %v3293 = vunpack.c.l.b16 %v3084
        %v3294 = vunpack.c.h.b16 %v3084
        %v3295 = vunpack.c.l.b16 %v3085
        %v3296 = vunpack.c.h.b16 %v3085
        %v3297 = vunpack.c.l.b16 %v3086
        %v3298 = vunpack.c.h.b16 %v3086
        %v3299 = vunpack.c.l.b16 %v3087
        %v3300 = vunpack.c.h.b16 %v3087
        %v3301 = vunpack.c.l.b16 %v3088
        %v3302 = vunpack.c.h.b16 %v3088
        %v3303 = vunpack.c.l.b16 %v3089
        %v3304 = vunpack.c.h.b16 %v3089
        %v3305 = vunpack.c.l.b16 %v3090
        %v3306 = vunpack.c.h.b16 %v3090
        %v3307 = vpack.c.b16 %v3183, %v3179
        %v3308 = vpack.c.b16 %v3184, %v3180
        %v3309 = vpack.c.b16 %v3185, %v3181
        %v3310 = vpack.c.b16 %v3186, %v3182
        %v3311 = vpack.c.b16 %v3191, %v3187
        %v3312 = vpack.c.b16 %v3192, %v3188
        %v3313 = vpack.c.b16 %v3193, %v3189
        %v3314 = vpack.c.b16 %v3194, %v3190
        %v3315 = vpack.c.b16 %v3199, %v3195
        %v3316 = vpack.c.b16 %v3200, %v3196
        %v3317 = vpack.c.b16 %v3201, %v3197
        %v3318 = vpack.c.b16 %v3202, %v3198
        %v3319 = vpack.c.b16 %v3207, %v3203
        %v3320 = vpack.c.b16 %v3208, %v3204
        %v3321 = vpack.c.b16 %v3209, %v3205
        %v3322 = vpack.c.b16 %v3210, %v3206
        %v3323 = vpack.c.b16 %v3215, %v3211
        %v3324 = vpack.c.b16 %v3216, %v3212
        %v3325 = vpack.c.b16 %v3217, %v3213
        %v3326 = vpack.c.b16 %v3218, %v3214
        %v3327 = vpack.c.b16 %v3223, %v3219
        %v3328 = vpack.c.b16 %v3224, %v3220
        %v3329 = vpack.c.b16 %v3225, %v3221
        %v3330 = vpack.c.b16 %v3226, %v3222
        %v3331 = vpack.c.b16 %v3231, %v3227
        %v3332 = vpack.c.b16 %v3232, %v3228
        %v3333 = vpack.c.b16 %v3233, %v3229
        %v3334 = vpack.c.b16 %v3234, %v3230
        %v3335 = vpack.c.b16 %v3239, %v3235
        %v3336 = vpack.c.b16 %v3240, %v3236
        %v3337 = vpack.c.b16 %v3241, %v3237
        %v3338 = vpack.c.b16 %v3242, %v3238
        %v3339 = vpack.c.b16 %v3247, %v3243
        %v3340 = vpack.c.b16 %v3248, %v3244
        %v3341 = vpack.c.b16 %v3249, %v3245
        %v3342 = vpack.c.b16 %v3250, %v3246
        %v3343 = vpack.c.b16 %v3255, %v3251
        %v3344 = vpack.c.b16 %v3256, %v3252
        %v3345 = vpack.c.b16 %v3257, %v3253
        %v3346 = vpack.c.b16 %v3258, %v3254
        %v3347 = vpack.c.b16 %v3263, %v3259
        %v3348 = vpack.c.b16 %v3264, %v3260
        %v3349 = vpack.c.b16 %v3265, %v3261
        %v3350 = vpack.c.b16 %v3266, %v3262
        %v3351 = vpack.c.b16 %v3271, %v3267
        %v3352 = vpack.c.b16 %v3272, %v3268
        %v3353 = vpack.c.b16 %v3273, %v3269
        %v3354 = vpack.c.b16 %v3274, %v3270
        %v3355 = vpack.c.b16 %v3279, %v3275
        %v3356 = vpack.c.b16 %v3280, %v3276
        %v3357 = vpack.c.b16 %v3281, %v3277
        %v3358 = vpack.c.b16 %v3282, %v3278
        %v3359 = vpack.c.b16 %v3287, %v3283
        %v3360 = vpack.c.b16 %v3288, %v3284
        %v3361 = vpack.c.b16 %v3289, %v3285
        %v3362 = vpack.c.b16 %v3290, %v3286
        %v3363 = vpack.c.b16 %v3295, %v3291
        %v3364 = vpack.c.b16 %v3296, %v3292
        %v3365 = vpack.c.b16 %v3297, %v3293
        %v3366 = vpack.c.b16 %v3298, %v3294
        %v3367 = vpack.c.b16 %v3303, %v3299
        %v3368 = vpack.c.b16 %v3304, %v3300
        %v3369 = vpack.c.b16 %v3305, %v3301
        %v3370 = vpack.c.b16 %v3306, %v3302
        %3435 = vmatprep.subr.bf16.mxu0 %v3308
        %3436 = vmatpush1.bf16.msra.mxu0 %v3307
        %3437 = vmatprep.subr.bf16.mxu0 %v3312
        %3438 = vmatpush1.bf16.msra.mxu0 %v3311
        %3439 = vmatprep.subr.bf16.mxu0 %v3316
        %3440 = vmatpush1.bf16.msra.mxu0 %v3315
        %3441 = vmatprep.subr.bf16.mxu0 %v3320
        %3442 = vmatpush1.bf16.msra.mxu0 %v3319
        %3443 = vmatprep.subr.bf16.mxu0 %v3324
        %3444 = vmatpush1.bf16.msra.mxu0 %v3323
        %3445 = vmatprep.subr.bf16.mxu0 %v3328
        %3446 = vmatpush1.bf16.msra.mxu0 %v3327
        %3447 = vmatprep.subr.bf16.mxu0 %v3332
        %3448 = vmatpush1.bf16.msra.mxu0 %v3331
        %3449 = vmatprep.subr.bf16.mxu0 %v3336
        %3450 = vmatpush1.bf16.msra.mxu0 %v3335
        %3451 = vmatprep.subr.bf16.mxu0 %v3340
        %3452 = vmatpush1.bf16.msra.mxu0 %v3339
        %3453 = vmatprep.subr.bf16.mxu0 %v3344
        %3454 = vmatpush1.bf16.msra.mxu0 %v3343
        %3455 = vmatprep.subr.bf16.mxu0 %v3348
        %3456 = vmatpush1.bf16.msra.mxu0 %v3347
        %3457 = vmatprep.subr.bf16.mxu0 %v3352
        %3458 = vmatpush1.bf16.msra.mxu0 %v3351
        %3459 = vmatprep.subr.bf16.mxu0 %v3356
        %3460 = vmatpush1.bf16.msra.mxu0 %v3355
        %3461 = vmatprep.subr.bf16.mxu0 %v3360
        %3462 = vmatpush1.bf16.msra.mxu0 %v3359
        %3463 = vmatprep.subr.bf16.mxu0 %v3364
        %3464 = vmatpush1.bf16.msra.mxu0 %v3363
        %3465 = vmatprep.subr.bf16.mxu0 %v3368
        %3466 = vmatpush1.bf16.msra.mxu0 %v3367
        %3467 = vmatprep.mubr.bf16.mxu0 %v3009
        %3468 = vmatmul.mubr.bf16.gmra.mrb[0].mxu0 %v3008
        %v3469 = vpop.f32.mrb[0].mxu0
        %v3470 = vadd.f32 %v3098, %v3469
        %v3471 = vpop.f32.mrb[0].mxu0
        %v3472 = vadd.f32 %v3102, %v3471
        %v3473 = vpop.f32.mrb[0].mxu0
        %v3474 = vadd.f32 %v3098, %v3473
        %v3475 = vpop.f32.mrb[0].mxu0
        %v3476 = vadd.f32 %v3102, %v3475
        %3477 = vmatprep.mubr.bf16.mxu0 %v3011
        %3478 = vmatmul.mubr.bf16.gmra.mrb[0].mxu0 %v3010
        %v3479 = vpop.f32.mrb[0].mxu0
        %v3480 = vadd.f32 %v3098, %v3479
        %v3481 = vpop.f32.mrb[0].mxu0
        %v3482 = vadd.f32 %v3102, %v3481
        %v3483 = vpop.f32.mrb[0].mxu0
        %v3484 = vadd.f32 %v3098, %v3483
        %v3485 = vpop.f32.mrb[0].mxu0
        %v3486 = vadd.f32 %v3102, %v3485
        %3487 = vmatprep.mubr.bf16.mxu0 %v3013
        %3488 = vmatmul.mubr.bf16.gmra.mrb[0].mxu0 %v3012
        %v3489 = vpop.f32.mrb[0].mxu0
        %v3490 = vadd.f32 %v3098, %v3489
        %v3491 = vpop.f32.mrb[0].mxu0
        %v3492 = vadd.f32 %v3102, %v3491
        %v3493 = vpop.f32.mrb[0].mxu0
        %v3494 = vadd.f32 %v3098, %v3493
        %v3495 = vpop.f32.mrb[0].mxu0
        %v3496 = vadd.f32 %v3102, %v3495
        %3497 = vmatprep.mubr.bf16.mxu0 %v3015
        %3498 = vmatmul.mubr.bf16.gmra.mrb[0].mxu0 %v3014
        %v3499 = vpop.f32.mrb[0].mxu0
        %v3500 = vadd.f32 %v3098, %v3499
        %v3501 = vpop.f32.mrb[0].mxu0
        %v3502 = vadd.f32 %v3102, %v3501
        %v3503 = vpop.f32.mrb[0].mxu0
        %v3504 = vadd.f32 %v3098, %v3503
        %v3505 = vpop.f32.mrb[0].mxu0
        %v3506 = vadd.f32 %v3102, %v3505
        %3507 = vmatprep.mubr.bf16.mxu0 %v3017
        %3508 = vmatmul.mubr.bf16.gmra.mrb[0].mxu0 %v3016
        %v3509 = vpop.f32.mrb[0].mxu0
        %v3510 = vadd.f32 %v3098, %v3509
        %v3511 = vpop.f32.mrb[0].mxu0
        %v3512 = vadd.f32 %v3102, %v3511
        %v3513 = vpop.f32.mrb[0].mxu0
        %v3514 = vadd.f32 %v3098, %v3513
        %v3515 = vpop.f32.mrb[0].mxu0
        %v3516 = vadd.f32 %v3102, %v3515
        %3517 = vmatprep.mubr.bf16.mxu0 %v3019
        %3518 = vmatmul.mubr.bf16.gmra.mrb[0].mxu0 %v3018
        %v3519 = vpop.f32.mrb[0].mxu0
        %v3520 = vadd.f32 %v3098, %v3519
        %v3521 = vpop.f32.mrb[0].mxu0
        %v3522 = vadd.f32 %v3102, %v3521
        %v3523 = vpop.f32.mrb[0].mxu0
        %v3524 = vadd.f32 %v3098, %v3523
        %v3525 = vpop.f32.mrb[0].mxu0
        %v3526 = vadd.f32 %v3102, %v3525
        %3527 = vmatprep.mubr.bf16.mxu0 %v3021
        %3528 = vmatmul.mubr.bf16.gmra.mrb[0].mxu0 %v3020
        %v3529 = vpop.f32.mrb[0].mxu0
        %v3530 = vadd.f32 %v3098, %v3529
        %v3531 = vpop.f32.mrb[0].mxu0
        %v3532 = vadd.f32 %v3102, %v3531
        %v3533 = vpop.f32.mrb[0].mxu0
        %v3534 = vadd.f32 %v3098, %v3533
        %v3535 = vpop.f32.mrb[0].mxu0
        %v3536 = vadd.f32 %v3102, %v3535
        %3537 = vmatprep.mubr.bf16.mxu0 %v3023
        %3538 = vmatmul.mubr.bf16.gmra.mrb[0].mxu0 %v3022
        %v3539 = vpop.f32.mrb[0].mxu0
        %v3540 = vadd.f32 %v3098, %v3539
        %v3541 = vpop.f32.mrb[0].mxu0
        %v3542 = vadd.f32 %v3102, %v3541
        %v3543 = vpop.f32.mrb[0].mxu0
        %v3544 = vadd.f32 %v3098, %v3543
        %v3545 = vpop.f32.mrb[0].mxu0
        %v3546 = vadd.f32 %v3102, %v3545
        %3547 = vdwg.mxu0
        %3548 = vmatprep.subr.bf16.mxu0 %v3310
        %3549 = vmatpush1.bf16.msra.mxu0 %v3309
        %3550 = vmatprep.subr.bf16.mxu0 %v3314
        %3551 = vmatpush1.bf16.msra.mxu0 %v3313
        %3552 = vmatprep.subr.bf16.mxu0 %v3318
        %3553 = vmatpush1.bf16.msra.mxu0 %v3317
        %3554 = vmatprep.subr.bf16.mxu0 %v3322
        %3555 = vmatpush1.bf16.msra.mxu0 %v3321
        %3556 = vmatprep.subr.bf16.mxu0 %v3326
        %3557 = vmatpush1.bf16.msra.mxu0 %v3325
        %3558 = vmatprep.subr.bf16.mxu0 %v3330
        %3559 = vmatpush1.bf16.msra.mxu0 %v3329
        %3560 = vmatprep.subr.bf16.mxu0 %v3334
        %3561 = vmatpush1.bf16.msra.mxu0 %v3333
        %3562 = vmatprep.subr.bf16.mxu0 %v3338
        %3563 = vmatpush1.bf16.msra.mxu0 %v3337
        %3564 = vmatprep.subr.bf16.mxu0 %v3342
        %3565 = vmatpush1.bf16.msra.mxu0 %v3341
        %3566 = vmatprep.subr.bf16.mxu0 %v3346
        %3567 = vmatpush1.bf16.msra.mxu0 %v3345
        %3568 = vmatprep.subr.bf16.mxu0 %v3350
        %3569 = vmatpush1.bf16.msra.mxu0 %v3349
        %3570 = vmatprep.subr.bf16.mxu0 %v3354
        %3571 = vmatpush1.bf16.msra.mxu0 %v3353
        %3572 = vmatprep.subr.bf16.mxu0 %v3358
        %3573 = vmatpush1.bf16.msra.mxu0 %v3357
        %3574 = vmatprep.subr.bf16.mxu0 %v3362
        %3575 = vmatpush1.bf16.msra.mxu0 %v3361
        %3576 = vmatprep.subr.bf16.mxu0 %v3366
        %3577 = vmatpush1.bf16.msra.mxu0 %v3365
        %3578 = vmatprep.subr.bf16.mxu0 %v3370
        %3579 = vmatpush1.bf16.msra.mxu0 %v3369
        %3580 = vmatprep.mubr.bf16.mxu0 %v3009
        %3581 = vmatmul.mubr.bf16.gmra.mrb[0].mxu0 %v3008
        %v3582 = vpop.f32.mrb[0].mxu0
        %v3583 = vadd.f32 %v3106, %v3582
        %v3584 = vpop.f32.mrb[0].mxu0
        %v3585 = vadd.f32 %v3110, %v3584
        %v3586 = vpop.f32.mrb[0].mxu0
        %v3587 = vadd.f32 %v3106, %v3586
        %v3588 = vpop.f32.mrb[0].mxu0
        %v3589 = vadd.f32 %v3110, %v3588
        %3590 = vmatprep.mubr.bf16.mxu0 %v3011
        %3591 = vmatmul.mubr.bf16.gmra.mrb[0].mxu0 %v3010
        %v3592 = vpop.f32.mrb[0].mxu0
        %v3593 = vadd.f32 %v3106, %v3592
        %v3594 = vpop.f32.mrb[0].mxu0
        %v3595 = vadd.f32 %v3110, %v3594
        %v3596 = vpop.f32.mrb[0].mxu0
        %v3597 = vadd.f32 %v3106, %v3596
        %v3598 = vpop.f32.mrb[0].mxu0
        %v3599 = vadd.f32 %v3110, %v3598
        %3600 = vmatprep.mubr.bf16.mxu0 %v3013
        %3601 = vmatmul.mubr.bf16.gmra.mrb[0].mxu0 %v3012
        %v3602 = vpop.f32.mrb[0].mxu0
        %v3603 = vadd.f32 %v3106, %v3602
        %v3604 = vpop.f32.mrb[0].mxu0
        %v3605 = vadd.f32 %v3110, %v3604
        %v3606 = vpop.f32.mrb[0].mxu0
        %v3607 = vadd.f32 %v3106, %v3606
        %v3608 = vpop.f32.mrb[0].mxu0
        %v3609 = vadd.f32 %v3110, %v3608
        %3610 = vmatprep.mubr.bf16.mxu0 %v3015
        %3611 = vmatmul.mubr.bf16.gmra.mrb[0].mxu0 %v3014
        %v3612 = vpop.f32.mrb[0].mxu0
        %v3613 = vadd.f32 %v3106, %v3612
        %v3614 = vpop.f32.mrb[0].mxu0
        %v3615 = vadd.f32 %v3110, %v3614
        %v3616 = vpop.f32.mrb[0].mxu0
        %v3617 = vadd.f32 %v3106, %v3616
        %v3618 = vpop.f32.mrb[0].mxu0
        %v3619 = vadd.f32 %v3110, %v3618
        %3620 = vmatprep.mubr.bf16.mxu0 %v3017
        %3621 = vmatmul.mubr.bf16.gmra.mrb[0].mxu0 %v3016
        %v3622 = vpop.f32.mrb[0].mxu0
        %v3623 = vadd.f32 %v3106, %v3622
        %v3624 = vpop.f32.mrb[0].mxu0
        %v3625 = vadd.f32 %v3110, %v3624
        %v3626 = vpop.f32.mrb[0].mxu0
        %v3627 = vadd.f32 %v3106, %v3626
        %v3628 = vpop.f32.mrb[0].mxu0
        %v3629 = vadd.f32 %v3110, %v3628
        %3630 = vmatprep.mubr.bf16.mxu0 %v3019
        %3631 = vmatmul.mubr.bf16.gmra.mrb[0].mxu0 %v3018
        %v3632 = vpop.f32.mrb[0].mxu0
        %v3633 = vadd.f32 %v3106, %v3632
        %v3634 = vpop.f32.mrb[0].mxu0
        %v3635 = vadd.f32 %v3110, %v3634
        %v3636 = vpop.f32.mrb[0].mxu0
        %v3637 = vadd.f32 %v3106, %v3636
        %v3638 = vpop.f32.mrb[0].mxu0
        %v3639 = vadd.f32 %v3110, %v3638
        %3640 = vmatprep.mubr.bf16.mxu0 %v3021
        %3641 = vmatmul.mubr.bf16.gmra.mrb[0].mxu0 %v3020
        %v3642 = vpop.f32.mrb[0].mxu0
        %v3643 = vadd.f32 %v3106, %v3642
        %v3644 = vpop.f32.mrb[0].mxu0
        %v3645 = vadd.f32 %v3110, %v3644
        %v3646 = vpop.f32.mrb[0].mxu0
        %v3647 = vadd.f32 %v3106, %v3646
        %v3648 = vpop.f32.mrb[0].mxu0
        %v3649 = vadd.f32 %v3110, %v3648
        %3650 = vmatprep.mubr.bf16.mxu0 %v3023
        %3651 = vmatmul.mubr.bf16.gmra.mrb[0].mxu0 %v3022
        %v3652 = vpop.f32.mrb[0].mxu0
        %v3653 = vadd.f32 %v3106, %v3652
        %v3654 = vpop.f32.mrb[0].mxu0
        %v3655 = vadd.f32 %v3110, %v3654
        %v3656 = vpop.f32.mrb[0].mxu0
        %v3657 = vadd.f32 %v3106, %v3656
        %v3658 = vpop.f32.mrb[0].mxu0
        %v3659 = vadd.f32 %v3110, %v3658
        %3660 = vdwg.mxu0
        %v3661 = vmax.f32 %v3470, 0.0
        %v3662 = vmax.f32 %v3472, 0.0
        %v3663 = vmax.f32 %v3583, 0.0
        %v3664 = vmax.f32 %v3585, 0.0
        %v3665 = vmax.f32 %v3474, 0.0
        %v3666 = vmax.f32 %v3476, 0.0
        %v3667 = vmax.f32 %v3587, 0.0
        %v3668 = vmax.f32 %v3589, 0.0
        %v3669 = vmax.f32 %v3480, 0.0
        %v3670 = vmax.f32 %v3482, 0.0
        %v3671 = vmax.f32 %v3593, 0.0
        %v3672 = vmax.f32 %v3595, 0.0
        %v3673 = vmax.f32 %v3484, 0.0
        %v3674 = vmax.f32 %v3486, 0.0
        %v3675 = vmax.f32 %v3597, 0.0
        %v3676 = vmax.f32 %v3599, 0.0
        %v3677 = vmax.f32 %v3490, 0.0
        %v3678 = vmax.f32 %v3492, 0.0
        %v3679 = vmax.f32 %v3603, 0.0
        %v3680 = vmax.f32 %v3605, 0.0
        %v3681 = vmax.f32 %v3494, 0.0
        %v3682 = vmax.f32 %v3496, 0.0
        %v3683 = vmax.f32 %v3607, 0.0
        %v3684 = vmax.f32 %v3609, 0.0
        %v3685 = vmax.f32 %v3500, 0.0
        %v3686 = vmax.f32 %v3502, 0.0
        %v3687 = vmax.f32 %v3613, 0.0
        %v3688 = vmax.f32 %v3615, 0.0
        %v3689 = vmax.f32 %v3504, 0.0
        %v3690 = vmax.f32 %v3506, 0.0
        %v3691 = vmax.f32 %v3617, 0.0
        %v3692 = vmax.f32 %v3619, 0.0
        %v3693 = vmax.f32 %v3510, 0.0
        %v3694 = vmax.f32 %v3512, 0.0
        %v3695 = vmax.f32 %v3623, 0.0
        %v3696 = vmax.f32 %v3625, 0.0
        %v3697 = vmax.f32 %v3514, 0.0
        %v3698 = vmax.f32 %v3516, 0.0
        %v3699 = vmax.f32 %v3627, 0.0
        %v3700 = vmax.f32 %v3629, 0.0
        %v3701 = vmax.f32 %v3520, 0.0
        %v3702 = vmax.f32 %v3522, 0.0
        %v3703 = vmax.f32 %v3633, 0.0
        %v3704 = vmax.f32 %v3635, 0.0
        %v3705 = vmax.f32 %v3524, 0.0
        %v3706 = vmax.f32 %v3526, 0.0
        %v3707 = vmax.f32 %v3637, 0.0
        %v3708 = vmax.f32 %v3639, 0.0
        %v3709 = vmax.f32 %v3530, 0.0
        %v3710 = vmax.f32 %v3532, 0.0
        %v3711 = vmax.f32 %v3643, 0.0
        %v3712 = vmax.f32 %v3645, 0.0
        %v3713 = vmax.f32 %v3534, 0.0
        %v3714 = vmax.f32 %v3536, 0.0
        %v3715 = vmax.f32 %v3647, 0.0
        %v3716 = vmax.f32 %v3649, 0.0
        %v3717 = vmax.f32 %v3540, 0.0
        %v3718 = vmax.f32 %v3542, 0.0
        %v3719 = vmax.f32 %v3653, 0.0
        %v3720 = vmax.f32 %v3655, 0.0
        %v3721 = vmax.f32 %v3544, 0.0
        %v3722 = vmax.f32 %v3546, 0.0
        %v3723 = vmax.f32 %v3657, 0.0
        %v3724 = vmax.f32 %v3659, 0.0
        %v3725 = vpack.c.bf16 %v3665, %v3661
        %v3726 = vpack.c.bf16 %v3666, %v3662
        %v3727 = vpack.c.bf16 %v3667, %v3663
        %v3728 = vpack.c.bf16 %v3668, %v3664
        %v3729 = vpack.c.bf16 %v3673, %v3669
        %v3730 = vpack.c.bf16 %v3674, %v3670
        %v3731 = vpack.c.bf16 %v3675, %v3671
        %v3732 = vpack.c.bf16 %v3676, %v3672
        %v3733 = vpack.c.bf16 %v3681, %v3677
        %v3734 = vpack.c.bf16 %v3682, %v3678
        %v3735 = vpack.c.bf16 %v3683, %v3679
        %v3736 = vpack.c.bf16 %v3684, %v3680
        %v3737 = vpack.c.bf16 %v3689, %v3685
        %v3738 = vpack.c.bf16 %v3690, %v3686
        %v3739 = vpack.c.bf16 %v3691, %v3687
        %v3740 = vpack.c.bf16 %v3692, %v3688
        %v3741 = vpack.c.bf16 %v3697, %v3693
        %v3742 = vpack.c.bf16 %v3698, %v3694
        %v3743 = vpack.c.bf16 %v3699, %v3695
        %v3744 = vpack.c.bf16 %v3700, %v3696
        %v3745 = vpack.c.bf16 %v3705, %v3701
        %v3746 = vpack.c.bf16 %v3706, %v3702
        %v3747 = vpack.c.bf16 %v3707, %v3703
        %v3748 = vpack.c.bf16 %v3708, %v3704
        %v3749 = vpack.c.bf16 %v3713, %v3709
        %v3750 = vpack.c.bf16 %v3714, %v3710
        %v3751 = vpack.c.bf16 %v3715, %v3711
        %v3752 = vpack.c.bf16 %v3716, %v3712
        %v3753 = vpack.c.bf16 %v3721, %v3717
        %v3754 = vpack.c.bf16 %v3722, %v3718
        %v3755 = vpack.c.bf16 %v3723, %v3719
        %v3756 = vpack.c.bf16 %v3724, %v3720
        %s3757 = smul.addr %s3024, 4
        %s3758 = scalar_lea.vmem [#allocation12], %s3757
        %v3759 = vld [vmem:[%s3758] sm:$0xff]
        %v3760 = vld [vmem:[%s3758 + $0x8] sm:$0xff]
        %v3761 = vld [vmem:[%s3758 + $0x10] sm:$0xff]
        %v3762 = vld [vmem:[%s3758 + $0x18] sm:$0xff]
        %v3763 = vld [vmem:[%s3758 + $0x20] sm:$0xff]
        %v3764 = vld [vmem:[%s3758 + $0x28] sm:$0xff]
        %v3765 = vld [vmem:[%s3758 + $0x30] sm:$0xff]
        %v3766 = vld [vmem:[%s3758 + $0x38] sm:$0xff]
        %v3767 = vld [vmem:[%s3758 + $0x40] sm:$0xff]
        %v3768 = vld [vmem:[%s3758 + $0x48] sm:$0xff]
        %v3769 = vld [vmem:[%s3758 + $0x50] sm:$0xff]
        %v3770 = vld [vmem:[%s3758 + $0x58] sm:$0xff]
        %v3771 = vld [vmem:[%s3758 + $0x60] sm:$0xff]
        %v3772 = vld [vmem:[%s3758 + $0x68] sm:$0xff]
        %v3773 = vld [vmem:[%s3758 + $0x70] sm:$0xff]
        %v3774 = vld [vmem:[%s3758 + $0x78] sm:$0xff]
        %v3775 = vld [vmem:[%s3758 + $0x80] sm:$0xff]
        %v3776 = vld [vmem:[%s3758 + $0x88] sm:$0xff]
        %v3777 = vld [vmem:[%s3758 + $0x90] sm:$0xff]
        %v3778 = vld [vmem:[%s3758 + $0x98] sm:$0xff]
        %v3779 = vld [vmem:[%s3758 + $0xa0] sm:$0xff]
        %v3780 = vld [vmem:[%s3758 + $0xa8] sm:$0xff]
        %v3781 = vld [vmem:[%s3758 + $0xb0] sm:$0xff]
        %v3782 = vld [vmem:[%s3758 + $0xb8] sm:$0xff]
        %v3783 = vld [vmem:[%s3758 + $0xc0] sm:$0xff]
        %v3784 = vld [vmem:[%s3758 + $0xc8] sm:$0xff]
        %v3785 = vld [vmem:[%s3758 + $0xd0] sm:$0xff]
        %v3786 = vld [vmem:[%s3758 + $0xd8] sm:$0xff]
        %v3787 = vld [vmem:[%s3758 + $0xe0] sm:$0xff]
        %v3788 = vld [vmem:[%s3758 + $0xe8] sm:$0xff]
        %v3789 = vld [vmem:[%s3758 + $0xf0] sm:$0xff]
        %v3790 = vld [vmem:[%s3758 + $0xf8] sm:$0xff]
        %v3791 = vld [vmem:[%s3758 + $0x100] sm:$0xff]
        %v3792 = vld [vmem:[%s3758 + $0x108] sm:$0xff]
        %v3793 = vld [vmem:[%s3758 + $0x110] sm:$0xff]
        %v3794 = vld [vmem:[%s3758 + $0x118] sm:$0xff]
        %v3795 = vld [vmem:[%s3758 + $0x120] sm:$0xff]
        %v3796 = vld [vmem:[%s3758 + $0x128] sm:$0xff]
        %v3797 = vld [vmem:[%s3758 + $0x130] sm:$0xff]
        %v3798 = vld [vmem:[%s3758 + $0x138] sm:$0xff]
        %v3799 = vld [vmem:[%s3758 + $0x140] sm:$0xff]
        %v3800 = vld [vmem:[%s3758 + $0x148] sm:$0xff]
        %v3801 = vld [vmem:[%s3758 + $0x150] sm:$0xff]
        %v3802 = vld [vmem:[%s3758 + $0x158] sm:$0xff]
        %v3803 = vld [vmem:[%s3758 + $0x160] sm:$0xff]
        %v3804 = vld [vmem:[%s3758 + $0x168] sm:$0xff]
        %v3805 = vld [vmem:[%s3758 + $0x170] sm:$0xff]
        %v3806 = vld [vmem:[%s3758 + $0x178] sm:$0xff]
        %v3807 = vld [vmem:[%s3758 + $0x180] sm:$0xff]
        %v3808 = vld [vmem:[%s3758 + $0x188] sm:$0xff]
        %v3809 = vld [vmem:[%s3758 + $0x190] sm:$0xff]
        %v3810 = vld [vmem:[%s3758 + $0x198] sm:$0xff]
        %v3811 = vld [vmem:[%s3758 + $0x1a0] sm:$0xff]
        %v3812 = vld [vmem:[%s3758 + $0x1a8] sm:$0xff]
        %v3813 = vld [vmem:[%s3758 + $0x1b0] sm:$0xff]
        %v3814 = vld [vmem:[%s3758 + $0x1b8] sm:$0xff]
        %v3815 = vld [vmem:[%s3758 + $0x1c0] sm:$0xff]
        %v3816 = vld [vmem:[%s3758 + $0x1c8] sm:$0xff]
        %v3817 = vld [vmem:[%s3758 + $0x1d0] sm:$0xff]
        %v3818 = vld [vmem:[%s3758 + $0x1d8] sm:$0xff]
        %v3819 = vld [vmem:[%s3758 + $0x1e0] sm:$0xff]
        %v3820 = vld [vmem:[%s3758 + $0x1e8] sm:$0xff]
        %v3821 = vld [vmem:[%s3758 + $0x1f0] sm:$0xff]
        %v3822 = vld [vmem:[%s3758 + $0x1f8] sm:$0xff]
        %v3823 = vlaneseq
        %v3824 = vshrl.u32 %v3823, 7
        %v3825 = vsub.s32 3, %v3824
        %v3826 = vrot.slane %v2321, %v3825
        %v3827 = vlaneseq
        %v3828 = vshrl.u32 %v3827, 7
        %v3829 = vsub.s32 3, %v3828
        %v3830 = vrot.slane %v2322, %v3829
        %v3895 = vunpack.c.l.b16 %v3759
        %v3896 = vunpack.c.h.b16 %v3759
        %v3897 = vunpack.c.l.b16 %v3760
        %v3898 = vunpack.c.h.b16 %v3760
        %v3899 = vunpack.c.l.b16 %v3761
        %v3900 = vunpack.c.h.b16 %v3761
        %v3901 = vunpack.c.l.b16 %v3762
        %v3902 = vunpack.c.h.b16 %v3762
        %v3903 = vunpack.c.l.b16 %v3763
        %v3904 = vunpack.c.h.b16 %v3763
        %v3905 = vunpack.c.l.b16 %v3764
        %v3906 = vunpack.c.h.b16 %v3764
        %v3907 = vunpack.c.l.b16 %v3765
        %v3908 = vunpack.c.h.b16 %v3765
        %v3909 = vunpack.c.l.b16 %v3766
        %v3910 = vunpack.c.h.b16 %v3766
        %v3911 = vunpack.c.l.b16 %v3767
        %v3912 = vunpack.c.h.b16 %v3767
        %v3913 = vunpack.c.l.b16 %v3768
        %v3914 = vunpack.c.h.b16 %v3768
        %v3915 = vunpack.c.l.b16 %v3769
        %v3916 = vunpack.c.h.b16 %v3769
        %v3917 = vunpack.c.l.b16 %v3770
        %v3918 = vunpack.c.h.b16 %v3770
        %v3919 = vunpack.c.l.b16 %v3771
        %v3920 = vunpack.c.h.b16 %v3771
        %v3921 = vunpack.c.l.b16 %v3772
        %v3922 = vunpack.c.h.b16 %v3772
        %v3923 = vunpack.c.l.b16 %v3773
        %v3924 = vunpack.c.h.b16 %v3773
        %v3925 = vunpack.c.l.b16 %v3774
        %v3926 = vunpack.c.h.b16 %v3774
        %v3927 = vunpack.c.l.b16 %v3775
        %v3928 = vunpack.c.h.b16 %v3775
        %v3929 = vunpack.c.l.b16 %v3776
        %v3930 = vunpack.c.h.b16 %v3776
        %v3931 = vunpack.c.l.b16 %v3777
        %v3932 = vunpack.c.h.b16 %v3777
        %v3933 = vunpack.c.l.b16 %v3778
        %v3934 = vunpack.c.h.b16 %v3778
        %v3935 = vunpack.c.l.b16 %v3779
        %v3936 = vunpack.c.h.b16 %v3779
        %v3937 = vunpack.c.l.b16 %v3780
        %v3938 = vunpack.c.h.b16 %v3780
        %v3939 = vunpack.c.l.b16 %v3781
        %v3940 = vunpack.c.h.b16 %v3781
        %v3941 = vunpack.c.l.b16 %v3782
        %v3942 = vunpack.c.h.b16 %v3782
        %v3943 = vunpack.c.l.b16 %v3783
        %v3944 = vunpack.c.h.b16 %v3783
        %v3945 = vunpack.c.l.b16 %v3784
        %v3946 = vunpack.c.h.b16 %v3784
        %v3947 = vunpack.c.l.b16 %v3785
        %v3948 = vunpack.c.h.b16 %v3785
        %v3949 = vunpack.c.l.b16 %v3786
        %v3950 = vunpack.c.h.b16 %v3786
        %v3951 = vunpack.c.l.b16 %v3787
        %v3952 = vunpack.c.h.b16 %v3787
        %v3953 = vunpack.c.l.b16 %v3788
        %v3954 = vunpack.c.h.b16 %v3788
        %v3955 = vunpack.c.l.b16 %v3789
        %v3956 = vunpack.c.h.b16 %v3789
        %v3957 = vunpack.c.l.b16 %v3790
        %v3958 = vunpack.c.h.b16 %v3790
        %v3959 = vunpack.c.l.b16 %v3791
        %v3960 = vunpack.c.h.b16 %v3791
        %v3961 = vunpack.c.l.b16 %v3792
        %v3962 = vunpack.c.h.b16 %v3792
        %v3963 = vunpack.c.l.b16 %v3793
        %v3964 = vunpack.c.h.b16 %v3793
        %v3965 = vunpack.c.l.b16 %v3794
        %v3966 = vunpack.c.h.b16 %v3794
        %v3967 = vunpack.c.l.b16 %v3795
        %v3968 = vunpack.c.h.b16 %v3795
        %v3969 = vunpack.c.l.b16 %v3796
        %v3970 = vunpack.c.h.b16 %v3796
        %v3971 = vunpack.c.l.b16 %v3797
        %v3972 = vunpack.c.h.b16 %v3797
        %v3973 = vunpack.c.l.b16 %v3798
        %v3974 = vunpack.c.h.b16 %v3798
        %v3975 = vunpack.c.l.b16 %v3799
        %v3976 = vunpack.c.h.b16 %v3799
        %v3977 = vunpack.c.l.b16 %v3800
        %v3978 = vunpack.c.h.b16 %v3800
        %v3979 = vunpack.c.l.b16 %v3801
        %v3980 = vunpack.c.h.b16 %v3801
        %v3981 = vunpack.c.l.b16 %v3802
        %v3982 = vunpack.c.h.b16 %v3802
        %v3983 = vunpack.c.l.b16 %v3803
        %v3984 = vunpack.c.h.b16 %v3803
        %v3985 = vunpack.c.l.b16 %v3804
        %v3986 = vunpack.c.h.b16 %v3804
        %v3987 = vunpack.c.l.b16 %v3805
        %v3988 = vunpack.c.h.b16 %v3805
        %v3989 = vunpack.c.l.b16 %v3806
        %v3990 = vunpack.c.h.b16 %v3806
        %v3991 = vunpack.c.l.b16 %v3807
        %v3992 = vunpack.c.h.b16 %v3807
        %v3993 = vunpack.c.l.b16 %v3808
        %v3994 = vunpack.c.h.b16 %v3808
        %v3995 = vunpack.c.l.b16 %v3809
        %v3996 = vunpack.c.h.b16 %v3809
        %v3997 = vunpack.c.l.b16 %v3810
        %v3998 = vunpack.c.h.b16 %v3810
        %v3999 = vunpack.c.l.b16 %v3811
        %v4000 = vunpack.c.h.b16 %v3811
        %v4001 = vunpack.c.l.b16 %v3812
        %v4002 = vunpack.c.h.b16 %v3812
        %v4003 = vunpack.c.l.b16 %v3813
        %v4004 = vunpack.c.h.b16 %v3813
        %v4005 = vunpack.c.l.b16 %v3814
        %v4006 = vunpack.c.h.b16 %v3814
        %v4007 = vunpack.c.l.b16 %v3815
        %v4008 = vunpack.c.h.b16 %v3815
        %v4009 = vunpack.c.l.b16 %v3816
        %v4010 = vunpack.c.h.b16 %v3816
        %v4011 = vunpack.c.l.b16 %v3817
        %v4012 = vunpack.c.h.b16 %v3817
        %v4013 = vunpack.c.l.b16 %v3818
        %v4014 = vunpack.c.h.b16 %v3818
        %v4015 = vunpack.c.l.b16 %v3819
        %v4016 = vunpack.c.h.b16 %v3819
        %v4017 = vunpack.c.l.b16 %v3820
        %v4018 = vunpack.c.h.b16 %v3820
        %v4019 = vunpack.c.l.b16 %v3821
        %v4020 = vunpack.c.h.b16 %v3821
        %v4021 = vunpack.c.l.b16 %v3822
        %v4022 = vunpack.c.h.b16 %v3822
        %v4023 = vpack.c.b16 %v3897, %v3895
        %v4024 = vpack.c.b16 %v3898, %v3896
        %v4025 = vpack.c.b16 %v3901, %v3899
        %v4026 = vpack.c.b16 %v3902, %v3900
        %v4027 = vpack.c.b16 %v3905, %v3903
        %v4028 = vpack.c.b16 %v3906, %v3904
        %v4029 = vpack.c.b16 %v3909, %v3907
        %v4030 = vpack.c.b16 %v3910, %v3908
        %v4031 = vpack.c.b16 %v3913, %v3911
        %v4032 = vpack.c.b16 %v3914, %v3912
        %v4033 = vpack.c.b16 %v3917, %v3915
        %v4034 = vpack.c.b16 %v3918, %v3916
        %v4035 = vpack.c.b16 %v3921, %v3919
        %v4036 = vpack.c.b16 %v3922, %v3920
        %v4037 = vpack.c.b16 %v3925, %v3923
        %v4038 = vpack.c.b16 %v3926, %v3924
        %v4039 = vpack.c.b16 %v3929, %v3927
        %v4040 = vpack.c.b16 %v3930, %v3928
        %v4041 = vpack.c.b16 %v3933, %v3931
        %v4042 = vpack.c.b16 %v3934, %v3932
        %v4043 = vpack.c.b16 %v3937, %v3935
        %v4044 = vpack.c.b16 %v3938, %v3936
        %v4045 = vpack.c.b16 %v3941, %v3939
        %v4046 = vpack.c.b16 %v3942, %v3940
        %v4047 = vpack.c.b16 %v3945, %v3943
        %v4048 = vpack.c.b16 %v3946, %v3944
        %v4049 = vpack.c.b16 %v3949, %v3947
        %v4050 = vpack.c.b16 %v3950, %v3948
        %v4051 = vpack.c.b16 %v3953, %v3951
        %v4052 = vpack.c.b16 %v3954, %v3952
        %v4053 = vpack.c.b16 %v3957, %v3955
        %v4054 = vpack.c.b16 %v3958, %v3956
        %v4055 = vpack.c.b16 %v3961, %v3959
        %v4056 = vpack.c.b16 %v3962, %v3960
        %v4057 = vpack.c.b16 %v3965, %v3963
        %v4058 = vpack.c.b16 %v3966, %v3964
        %v4059 = vpack.c.b16 %v3969, %v3967
        %v4060 = vpack.c.b16 %v3970, %v3968
        %v4061 = vpack.c.b16 %v3973, %v3971
        %v4062 = vpack.c.b16 %v3974, %v3972
        %v4063 = vpack.c.b16 %v3977, %v3975
        %v4064 = vpack.c.b16 %v3978, %v3976
        %v4065 = vpack.c.b16 %v3981, %v3979
        %v4066 = vpack.c.b16 %v3982, %v3980
        %v4067 = vpack.c.b16 %v3985, %v3983
        %v4068 = vpack.c.b16 %v3986, %v3984
        %v4069 = vpack.c.b16 %v3989, %v3987
        %v4070 = vpack.c.b16 %v3990, %v3988
        %v4071 = vpack.c.b16 %v3993, %v3991
        %v4072 = vpack.c.b16 %v3994, %v3992
        %v4073 = vpack.c.b16 %v3997, %v3995
        %v4074 = vpack.c.b16 %v3998, %v3996
        %v4075 = vpack.c.b16 %v4001, %v3999
        %v4076 = vpack.c.b16 %v4002, %v4000
        %v4077 = vpack.c.b16 %v4005, %v4003
        %v4078 = vpack.c.b16 %v4006, %v4004
        %v4079 = vpack.c.b16 %v4009, %v4007
        %v4080 = vpack.c.b16 %v4010, %v4008
        %v4081 = vpack.c.b16 %v4013, %v4011
        %v4082 = vpack.c.b16 %v4014, %v4012
        %v4083 = vpack.c.b16 %v4017, %v4015
        %v4084 = vpack.c.b16 %v4018, %v4016
        %v4085 = vpack.c.b16 %v4021, %v4019
        %v4086 = vpack.c.b16 %v4022, %v4020
        %4151 = vmatprep.subr.bf16.mxu0 %v4024
        %4152 = vmatpush1.bf16.msra.mxu0 %v4023
        %4153 = vmatprep.subr.bf16.mxu0 %v4026
        %4154 = vmatpush1.bf16.msra.mxu0 %v4025
        %4155 = vmatprep.subr.bf16.mxu0 %v4028
        %4156 = vmatpush1.bf16.msra.mxu0 %v4027
        %4157 = vmatprep.subr.bf16.mxu0 %v4030
        %4158 = vmatpush1.bf16.msra.mxu0 %v4029
        %4159 = vmatprep.subr.bf16.mxu0 %v4032
        %4160 = vmatpush1.bf16.msra.mxu0 %v4031
        %4161 = vmatprep.subr.bf16.mxu0 %v4034
        %4162 = vmatpush1.bf16.msra.mxu0 %v4033
        %4163 = vmatprep.subr.bf16.mxu0 %v4036
        %4164 = vmatpush1.bf16.msra.mxu0 %v4035
        %4165 = vmatprep.subr.bf16.mxu0 %v4038
        %4166 = vmatpush1.bf16.msra.mxu0 %v4037
        %4167 = vmatprep.subr.bf16.mxu0 %v4040
        %4168 = vmatpush1.bf16.msra.mxu0 %v4039
        %4169 = vmatprep.subr.bf16.mxu0 %v4042
        %4170 = vmatpush1.bf16.msra.mxu0 %v4041
        %4171 = vmatprep.subr.bf16.mxu0 %v4044
        %4172 = vmatpush1.bf16.msra.mxu0 %v4043
        %4173 = vmatprep.subr.bf16.mxu0 %v4046
        %4174 = vmatpush1.bf16.msra.mxu0 %v4045
        %4175 = vmatprep.subr.bf16.mxu0 %v4048
        %4176 = vmatpush1.bf16.msra.mxu0 %v4047
        %4177 = vmatprep.subr.bf16.mxu0 %v4050
        %4178 = vmatpush1.bf16.msra.mxu0 %v4049
        %4179 = vmatprep.subr.bf16.mxu0 %v4052
        %4180 = vmatpush1.bf16.msra.mxu0 %v4051
        %4181 = vmatprep.subr.bf16.mxu0 %v4054
        %4182 = vmatpush1.bf16.msra.mxu0 %v4053
        %4183 = vmatprep.mubr.bf16.mxu0 %v3726
        %4184 = vmatmul.mubr.bf16.gmra.mrb[0].mxu0 %v3725
        %v4185 = vpop.f32.mrb[0].mxu0
        %v4186 = vadd.f32 %v3826, %v4185
        %v4187 = vpop.f32.mrb[0].mxu0
        %v4188 = vadd.f32 %v3830, %v4187
        %v4189 = vpop.f32.mrb[0].mxu0
        %v4190 = vadd.f32 %v3826, %v4189
        %v4191 = vpop.f32.mrb[0].mxu0
        %v4192 = vadd.f32 %v3830, %v4191
        %4193 = vmatprep.mubr.bf16.mxu0 %v3730
        %4194 = vmatmul.mubr.bf16.gmra.mrb[0].mxu0 %v3729
        %v4195 = vpop.f32.mrb[0].mxu0
        %v4196 = vadd.f32 %v3826, %v4195
        %v4197 = vpop.f32.mrb[0].mxu0
        %v4198 = vadd.f32 %v3830, %v4197
        %v4199 = vpop.f32.mrb[0].mxu0
        %v4200 = vadd.f32 %v3826, %v4199
        %v4201 = vpop.f32.mrb[0].mxu0
        %v4202 = vadd.f32 %v3830, %v4201
        %4203 = vmatprep.mubr.bf16.mxu0 %v3734
        %4204 = vmatmul.mubr.bf16.gmra.mrb[0].mxu0 %v3733
        %v4205 = vpop.f32.mrb[0].mxu0
        %v4206 = vadd.f32 %v3826, %v4205
        %v4207 = vpop.f32.mrb[0].mxu0
        %v4208 = vadd.f32 %v3830, %v4207
        %v4209 = vpop.f32.mrb[0].mxu0
        %v4210 = vadd.f32 %v3826, %v4209
        %v4211 = vpop.f32.mrb[0].mxu0
        %v4212 = vadd.f32 %v3830, %v4211
        %4213 = vmatprep.mubr.bf16.mxu0 %v3738
        %4214 = vmatmul.mubr.bf16.gmra.mrb[0].mxu0 %v3737
        %v4215 = vpop.f32.mrb[0].mxu0
        %v4216 = vadd.f32 %v3826, %v4215
        %v4217 = vpop.f32.mrb[0].mxu0
        %v4218 = vadd.f32 %v3830, %v4217
        %v4219 = vpop.f32.mrb[0].mxu0
        %v4220 = vadd.f32 %v3826, %v4219
        %v4221 = vpop.f32.mrb[0].mxu0
        %v4222 = vadd.f32 %v3830, %v4221
        %4223 = vmatprep.mubr.bf16.mxu0 %v3742
        %4224 = vmatmul.mubr.bf16.gmra.mrb[0].mxu0 %v3741
        %v4225 = vpop.f32.mrb[0].mxu0
        %v4226 = vadd.f32 %v3826, %v4225
        %v4227 = vpop.f32.mrb[0].mxu0
        %v4228 = vadd.f32 %v3830, %v4227
        %v4229 = vpop.f32.mrb[0].mxu0
        %v4230 = vadd.f32 %v3826, %v4229
        %v4231 = vpop.f32.mrb[0].mxu0
        %v4232 = vadd.f32 %v3830, %v4231
        %4233 = vmatprep.mubr.bf16.mxu0 %v3746
        %4234 = vmatmul.mubr.bf16.gmra.mrb[0].mxu0 %v3745
        %v4235 = vpop.f32.mrb[0].mxu0
        %v4236 = vadd.f32 %v3826, %v4235
        %v4237 = vpop.f32.mrb[0].mxu0
        %v4238 = vadd.f32 %v3830, %v4237
        %v4239 = vpop.f32.mrb[0].mxu0
        %v4240 = vadd.f32 %v3826, %v4239
        %v4241 = vpop.f32.mrb[0].mxu0
        %v4242 = vadd.f32 %v3830, %v4241
        %4243 = vmatprep.mubr.bf16.mxu0 %v3750
        %4244 = vmatmul.mubr.bf16.gmra.mrb[0].mxu0 %v3749
        %v4245 = vpop.f32.mrb[0].mxu0
        %v4246 = vadd.f32 %v3826, %v4245
        %v4247 = vpop.f32.mrb[0].mxu0
        %v4248 = vadd.f32 %v3830, %v4247
        %v4249 = vpop.f32.mrb[0].mxu0
        %v4250 = vadd.f32 %v3826, %v4249
        %v4251 = vpop.f32.mrb[0].mxu0
        %v4252 = vadd.f32 %v3830, %v4251
        %4253 = vmatprep.mubr.bf16.mxu0 %v3754
        %4254 = vmatmul.mubr.bf16.gmra.mrb[0].mxu0 %v3753
        %v4255 = vpop.f32.mrb[0].mxu0
        %v4256 = vadd.f32 %v3826, %v4255
        %v4257 = vpop.f32.mrb[0].mxu0
        %v4258 = vadd.f32 %v3830, %v4257
        %v4259 = vpop.f32.mrb[0].mxu0
        %v4260 = vadd.f32 %v3826, %v4259
        %v4261 = vpop.f32.mrb[0].mxu0
        %v4262 = vadd.f32 %v3830, %v4261
        %4263 = vdwg.mxu0
        %4264 = vmatprep.subr.bf16.mxu0 %v4056
        %4265 = vmatpush1.bf16.msra.mxu0 %v4055
        %4266 = vmatprep.subr.bf16.mxu0 %v4058
        %4267 = vmatpush1.bf16.msra.mxu0 %v4057
        %4268 = vmatprep.subr.bf16.mxu0 %v4060
        %4269 = vmatpush1.bf16.msra.mxu0 %v4059
        %4270 = vmatprep.subr.bf16.mxu0 %v4062
        %4271 = vmatpush1.bf16.msra.mxu0 %v4061
        %4272 = vmatprep.subr.bf16.mxu0 %v4064
        %4273 = vmatpush1.bf16.msra.mxu0 %v4063
        %4274 = vmatprep.subr.bf16.mxu0 %v4066
        %4275 = vmatpush1.bf16.msra.mxu0 %v4065
        %4276 = vmatprep.subr.bf16.mxu0 %v4068
        %4277 = vmatpush1.bf16.msra.mxu0 %v4067
        %4278 = vmatprep.subr.bf16.mxu0 %v4070
        %4279 = vmatpush1.bf16.msra.mxu0 %v4069
        %4280 = vmatprep.subr.bf16.mxu0 %v4072
        %4281 = vmatpush1.bf16.msra.mxu0 %v4071
        %4282 = vmatprep.subr.bf16.mxu0 %v4074
        %4283 = vmatpush1.bf16.msra.mxu0 %v4073
        %4284 = vmatprep.subr.bf16.mxu0 %v4076
        %4285 = vmatpush1.bf16.msra.mxu0 %v4075
        %4286 = vmatprep.subr.bf16.mxu0 %v4078
        %4287 = vmatpush1.bf16.msra.mxu0 %v4077
        %4288 = vmatprep.subr.bf16.mxu0 %v4080
        %4289 = vmatpush1.bf16.msra.mxu0 %v4079
        %4290 = vmatprep.subr.bf16.mxu0 %v4082
        %4291 = vmatpush1.bf16.msra.mxu0 %v4081
        %4292 = vmatprep.subr.bf16.mxu0 %v4084
        %4293 = vmatpush1.bf16.msra.mxu0 %v4083
        %4294 = vmatprep.subr.bf16.mxu0 %v4086
        %4295 = vmatpush1.bf16.msra.mxu0 %v4085
        %4296 = vmatprep.mubr.bf16.mxu0 %v3728
        %4297 = vmatmul.mubr.bf16.gmra.mrb[0].mxu0 %v3727
        %v4298 = vpop.f32.mrb[0].mxu0
        %v4299 = vadd.f32 %v4186, %v4298
        %v4300 = vpop.f32.mrb[0].mxu0
        %v4301 = vadd.f32 %v4188, %v4300
        %v4302 = vpop.f32.mrb[0].mxu0
        %v4303 = vadd.f32 %v4190, %v4302
        %v4304 = vpop.f32.mrb[0].mxu0
        %v4305 = vadd.f32 %v4192, %v4304
        %4306 = vmatprep.mubr.bf16.mxu0 %v3732
        %4307 = vmatmul.mubr.bf16.gmra.mrb[0].mxu0 %v3731
        %v4308 = vpop.f32.mrb[0].mxu0
        %v4309 = vadd.f32 %v4196, %v4308
        %v4310 = vpop.f32.mrb[0].mxu0
        %v4311 = vadd.f32 %v4198, %v4310
        %v4312 = vpop.f32.mrb[0].mxu0
        %v4313 = vadd.f32 %v4200, %v4312
        %v4314 = vpop.f32.mrb[0].mxu0
        %v4315 = vadd.f32 %v4202, %v4314
        %4316 = vmatprep.mubr.bf16.mxu0 %v3736
        %4317 = vmatmul.mubr.bf16.gmra.mrb[0].mxu0 %v3735
        %v4318 = vpop.f32.mrb[0].mxu0
        %v4319 = vadd.f32 %v4206, %v4318
        %v4320 = vpop.f32.mrb[0].mxu0
        %v4321 = vadd.f32 %v4208, %v4320
        %v4322 = vpop.f32.mrb[0].mxu0
        %v4323 = vadd.f32 %v4210, %v4322
        %v4324 = vpop.f32.mrb[0].mxu0
        %v4325 = vadd.f32 %v4212, %v4324
        %4326 = vmatprep.mubr.bf16.mxu0 %v3740
        %4327 = vmatmul.mubr.bf16.gmra.mrb[0].mxu0 %v3739
        %v4328 = vpop.f32.mrb[0].mxu0
        %v4329 = vadd.f32 %v4216, %v4328
        %v4330 = vpop.f32.mrb[0].mxu0
        %v4331 = vadd.f32 %v4218, %v4330
        %v4332 = vpop.f32.mrb[0].mxu0
        %v4333 = vadd.f32 %v4220, %v4332
        %v4334 = vpop.f32.mrb[0].mxu0
        %v4335 = vadd.f32 %v4222, %v4334
        %4336 = vmatprep.mubr.bf16.mxu0 %v3744
        %4337 = vmatmul.mubr.bf16.gmra.mrb[0].mxu0 %v3743
        %v4338 = vpop.f32.mrb[0].mxu0
        %v4339 = vadd.f32 %v4226, %v4338
        %v4340 = vpop.f32.mrb[0].mxu0
        %v4341 = vadd.f32 %v4228, %v4340
        %v4342 = vpop.f32.mrb[0].mxu0
        %v4343 = vadd.f32 %v4230, %v4342
        %v4344 = vpop.f32.mrb[0].mxu0
        %v4345 = vadd.f32 %v4232, %v4344
        %4346 = vmatprep.mubr.bf16.mxu0 %v3748
        %4347 = vmatmul.mubr.bf16.gmra.mrb[0].mxu0 %v3747
        %v4348 = vpop.f32.mrb[0].mxu0
        %v4349 = vadd.f32 %v4236, %v4348
        %v4350 = vpop.f32.mrb[0].mxu0
        %v4351 = vadd.f32 %v4238, %v4350
        %v4352 = vpop.f32.mrb[0].mxu0
        %v4353 = vadd.f32 %v4240, %v4352
        %v4354 = vpop.f32.mrb[0].mxu0
        %v4355 = vadd.f32 %v4242, %v4354
        %4356 = vmatprep.mubr.bf16.mxu0 %v3752
        %4357 = vmatmul.mubr.bf16.gmra.mrb[0].mxu0 %v3751
        %v4358 = vpop.f32.mrb[0].mxu0
        %v4359 = vadd.f32 %v4246, %v4358
        %v4360 = vpop.f32.mrb[0].mxu0
        %v4361 = vadd.f32 %v4248, %v4360
        %v4362 = vpop.f32.mrb[0].mxu0
        %v4363 = vadd.f32 %v4250, %v4362
        %v4364 = vpop.f32.mrb[0].mxu0
        %v4365 = vadd.f32 %v4252, %v4364
        %4366 = vmatprep.mubr.bf16.mxu0 %v3756
        %4367 = vmatmul.mubr.bf16.gmra.mrb[0].mxu0 %v3755
        %v4368 = vpop.f32.mrb[0].mxu0
        %v4369 = vadd.f32 %v4256, %v4368
        %v4370 = vpop.f32.mrb[0].mxu0
        %v4371 = vadd.f32 %v4258, %v4370
        %v4372 = vpop.f32.mrb[0].mxu0
        %v4373 = vadd.f32 %v4260, %v4372
        %v4374 = vpop.f32.mrb[0].mxu0
        %v4375 = vadd.f32 %v4262, %v4374
        %4376 = vdwg.mxu0
        %v4377 = vadd.f32 %v4299, %v2976
        %v4378 = vadd.f32 %v4301, %v2977
        %v4379 = vadd.f32 %v4303, %v2978
        %v4380 = vadd.f32 %v4305, %v2979
        %v4381 = vadd.f32 %v4309, %v2980
        %v4382 = vadd.f32 %v4311, %v2981
        %v4383 = vadd.f32 %v4313, %v2982
        %v4384 = vadd.f32 %v4315, %v2983
        %v4385 = vadd.f32 %v4319, %v2984
        %v4386 = vadd.f32 %v4321, %v2985
        %v4387 = vadd.f32 %v4323, %v2986
        %v4388 = vadd.f32 %v4325, %v2987
        %v4389 = vadd.f32 %v4329, %v2988
        %v4390 = vadd.f32 %v4331, %v2989
        %v4391 = vadd.f32 %v4333, %v2990
        %v4392 = vadd.f32 %v4335, %v2991
        %v4393 = vadd.f32 %v4339, %v2992
        %v4394 = vadd.f32 %v4341, %v2993
        %v4395 = vadd.f32 %v4343, %v2994
        %v4396 = vadd.f32 %v4345, %v2995
        %v4397 = vadd.f32 %v4349, %v2996
        %v4398 = vadd.f32 %v4351, %v2997
        %v4399 = vadd.f32 %v4353, %v2998
        %v4400 = vadd.f32 %v4355, %v2999
        %v4401 = vadd.f32 %v4359, %v3000
        %v4402 = vadd.f32 %v4361, %v3001
        %v4403 = vadd.f32 %v4363, %v3002
        %v4404 = vadd.f32 %v4365, %v3003
        %v4405 = vadd.f32 %v4369, %v3004
        %v4406 = vadd.f32 %v4371, %v3005
        %v4407 = vadd.f32 %v4373, %v3006
        %v4408 = vadd.f32 %v4375, %v3007
        %v4409 = vadd.f32 %v4377, %v4378
        %4410 = vadd.xlane.f32.xlu0 %v4409
        %v4411 = vpop.xlane.xlu0 %4410
        %v4412 = vadd.f32 %v4379, %v4380
        %4413 = vadd.xlane.f32.xlu0 %v4412
        %v4414 = vpop.xlane.xlu0 %4413
        %v4415 = vadd.f32 %v4381, %v4382
        %4416 = vadd.xlane.f32.xlu0 %v4415
        %v4417 = vpop.xlane.xlu0 %4416
        %v4418 = vadd.f32 %v4383, %v4384
        %4419 = vadd.xlane.f32.xlu0 %v4418
        %v4420 = vpop.xlane.xlu0 %4419
        %v4421 = vadd.f32 %v4385, %v4386
        %4422 = vadd.xlane.f32.xlu0 %v4421
        %v4423 = vpop.xlane.xlu0 %4422
        %v4424 = vadd.f32 %v4387, %v4388
        %4425 = vadd.xlane.f32.xlu0 %v4424
        %v4426 = vpop.xlane.xlu0 %4425
        %v4427 = vadd.f32 %v4389, %v4390
        %4428 = vadd.xlane.f32.xlu0 %v4427
        %v4429 = vpop.xlane.xlu0 %4428
        %v4430 = vadd.f32 %v4391, %v4392
        %4431 = vadd.xlane.f32.xlu0 %v4430
        %v4432 = vpop.xlane.xlu0 %4431
        %v4433 = vadd.f32 %v4393, %v4394
        %4434 = vadd.xlane.f32.xlu0 %v4433
        %v4435 = vpop.xlane.xlu0 %4434
        %v4436 = vadd.f32 %v4395, %v4396
        %4437 = vadd.xlane.f32.xlu0 %v4436
        %v4438 = vpop.xlane.xlu0 %4437
        %v4439 = vadd.f32 %v4397, %v4398
        %4440 = vadd.xlane.f32.xlu0 %v4439
        %v4441 = vpop.xlane.xlu0 %4440
        %v4442 = vadd.f32 %v4399, %v4400
        %4443 = vadd.xlane.f32.xlu0 %v4442
        %v4444 = vpop.xlane.xlu0 %4443
        %v4445 = vadd.f32 %v4401, %v4402
        %4446 = vadd.xlane.f32.xlu0 %v4445
        %v4447 = vpop.xlane.xlu0 %4446
        %v4448 = vadd.f32 %v4403, %v4404
        %4449 = vadd.xlane.f32.xlu0 %v4448
        %v4450 = vpop.xlane.xlu0 %4449
        %v4451 = vadd.f32 %v4405, %v4406
        %4452 = vadd.xlane.f32.xlu0 %v4451
        %v4453 = vpop.xlane.xlu0 %4452
        %v4454 = vadd.f32 %v4407, %v4408
        %4455 = vadd.xlane.f32.xlu0 %v4454
        %v4456 = vpop.xlane.xlu0 %4455
        %v4457 = vmul.f32 %v4411, %v2719
        %v4458 = vmul.f32 %v4414, %v2719
        %v4459 = vmul.f32 %v4417, %v2719
        %v4460 = vmul.f32 %v4420, %v2719
        %v4461 = vmul.f32 %v4423, %v2719
        %v4462 = vmul.f32 %v4426, %v2719
        %v4463 = vmul.f32 %v4429, %v2719
        %v4464 = vmul.f32 %v4432, %v2719
        %v4465 = vmul.f32 %v4435, %v2719
        %v4466 = vmul.f32 %v4438, %v2719
        %v4467 = vmul.f32 %v4441, %v2719
        %v4468 = vmul.f32 %v4444, %v2719
        %v4469 = vmul.f32 %v4447, %v2719
        %v4470 = vmul.f32 %v4450, %v2719
        %v4471 = vmul.f32 %v4453, %v2719
        %v4472 = vmul.f32 %v4456, %v2719
        %v4473 = vsub.f32 %v4377, %v4457
        %v4474 = vsub.f32 %v4378, %v4457
        %v4475 = vsub.f32 %v4379, %v4458
        %v4476 = vsub.f32 %v4380, %v4458
        %v4477 = vsub.f32 %v4381, %v4459
        %v4478 = vsub.f32 %v4382, %v4459
        %v4479 = vsub.f32 %v4383, %v4460
        %v4480 = vsub.f32 %v4384, %v4460
        %v4481 = vsub.f32 %v4385, %v4461
        %v4482 = vsub.f32 %v4386, %v4461
        %v4483 = vsub.f32 %v4387, %v4462
        %v4484 = vsub.f32 %v4388, %v4462
        %v4485 = vsub.f32 %v4389, %v4463
        %v4486 = vsub.f32 %v4390, %v4463
        %v4487 = vsub.f32 %v4391, %v4464
        %v4488 = vsub.f32 %v4392, %v4464
        %v4489 = vsub.f32 %v4393, %v4465
        %v4490 = vsub.f32 %v4394, %v4465
        %v4491 = vsub.f32 %v4395, %v4466
        %v4492 = vsub.f32 %v4396, %v4466
        %v4493 = vsub.f32 %v4397, %v4467
        %v4494 = vsub.f32 %v4398, %v4467
        %v4495 = vsub.f32 %v4399, %v4468
        %v4496 = vsub.f32 %v4400, %v4468
        %v4497 = vsub.f32 %v4401, %v4469
        %v4498 = vsub.f32 %v4402, %v4469
        %v4499 = vsub.f32 %v4403, %v4470
        %v4500 = vsub.f32 %v4404, %v4470
        %v4501 = vsub.f32 %v4405, %v4471
        %v4502 = vsub.f32 %v4406, %v4471
        %v4503 = vsub.f32 %v4407, %v4472
        %v4504 = vsub.f32 %v4408, %v4472
        %v4505 = vmul.f32 %v4473, %v4473
        %v4506 = vmul.f32 %v4474, %v4474
        %v4507 = vmul.f32 %v4475, %v4475
        %v4508 = vmul.f32 %v4476, %v4476
        %v4509 = vmul.f32 %v4477, %v4477
        %v4510 = vmul.f32 %v4478, %v4478
        %v4511 = vmul.f32 %v4479, %v4479
        %v4512 = vmul.f32 %v4480, %v4480
        %v4513 = vmul.f32 %v4481, %v4481
        %v4514 = vmul.f32 %v4482, %v4482
        %v4515 = vmul.f32 %v4483, %v4483
        %v4516 = vmul.f32 %v4484, %v4484
        %v4517 = vmul.f32 %v4485, %v4485
        %v4518 = vmul.f32 %v4486, %v4486
        %v4519 = vmul.f32 %v4487, %v4487
        %v4520 = vmul.f32 %v4488, %v4488
        %v4521 = vmul.f32 %v4489, %v4489
        %v4522 = vmul.f32 %v4490, %v4490
        %v4523 = vmul.f32 %v4491, %v4491
        %v4524 = vmul.f32 %v4492, %v4492
        %v4525 = vmul.f32 %v4493, %v4493
        %v4526 = vmul.f32 %v4494, %v4494
        %v4527 = vmul.f32 %v4495, %v4495
        %v4528 = vmul.f32 %v4496, %v4496
        %v4529 = vmul.f32 %v4497, %v4497
        %v4530 = vmul.f32 %v4498, %v4498
        %v4531 = vmul.f32 %v4499, %v4499
        %v4532 = vmul.f32 %v4500, %v4500
        %v4533 = vmul.f32 %v4501, %v4501
        %v4534 = vmul.f32 %v4502, %v4502
        %v4535 = vmul.f32 %v4503, %v4503
        %v4536 = vmul.f32 %v4504, %v4504
        %v4537 = vadd.f32 %v4505, %v4506
        %4538 = vadd.xlane.f32.xlu0 %v4537
        %v4539 = vpop.xlane.xlu0 %4538
        %v4540 = vadd.f32 %v4507, %v4508
        %4541 = vadd.xlane.f32.xlu0 %v4540
        %v4542 = vpop.xlane.xlu0 %4541
        %v4543 = vadd.f32 %v4509, %v4510
        %4544 = vadd.xlane.f32.xlu0 %v4543
        %v4545 = vpop.xlane.xlu0 %4544
        %v4546 = vadd.f32 %v4511, %v4512
        %4547 = vadd.xlane.f32.xlu0 %v4546
        %v4548 = vpop.xlane.xlu0 %4547
        %v4549 = vadd.f32 %v4513, %v4514
        %4550 = vadd.xlane.f32.xlu0 %v4549
        %v4551 = vpop.xlane.xlu0 %4550
        %v4552 = vadd.f32 %v4515, %v4516
        %4553 = vadd.xlane.f32.xlu0 %v4552
        %v4554 = vpop.xlane.xlu0 %4553
        %v4555 = vadd.f32 %v4517, %v4518
        %4556 = vadd.xlane.f32.xlu0 %v4555
        %v4557 = vpop.xlane.xlu0 %4556
        %v4558 = vadd.f32 %v4519, %v4520
        %4559 = vadd.xlane.f32.xlu0 %v4558
        %v4560 = vpop.xlane.xlu0 %4559
        %v4561 = vadd.f32 %v4521, %v4522
        %4562 = vadd.xlane.f32.xlu0 %v4561
        %v4563 = vpop.xlane.xlu0 %4562
        %v4564 = vadd.f32 %v4523, %v4524
        %4565 = vadd.xlane.f32.xlu0 %v4564
        %v4566 = vpop.xlane.xlu0 %4565
        %v4567 = vadd.f32 %v4525, %v4526
        %4568 = vadd.xlane.f32.xlu0 %v4567
        %v4569 = vpop.xlane.xlu0 %4568
        %v4570 = vadd.f32 %v4527, %v4528
        %4571 = vadd.xlane.f32.xlu0 %v4570
        %v4572 = vpop.xlane.xlu0 %4571
        %v4573 = vadd.f32 %v4529, %v4530
        %4574 = vadd.xlane.f32.xlu0 %v4573
        %v4575 = vpop.xlane.xlu0 %4574
        %v4576 = vadd.f32 %v4531, %v4532
        %4577 = vadd.xlane.f32.xlu0 %v4576
        %v4578 = vpop.xlane.xlu0 %4577
        %v4579 = vadd.f32 %v4533, %v4534
        %4580 = vadd.xlane.f32.xlu0 %v4579
        %v4581 = vpop.xlane.xlu0 %4580
        %v4582 = vadd.f32 %v4535, %v4536
        %4583 = vadd.xlane.f32.xlu0 %v4582
        %v4584 = vpop.xlane.xlu0 %4583
        %v4585 = vmul.f32 %v4539, %v2719
        %v4586 = vmul.f32 %v4542, %v2719
        %v4587 = vmul.f32 %v4545, %v2719
        %v4588 = vmul.f32 %v4548, %v2719
        %v4589 = vmul.f32 %v4551, %v2719
        %v4590 = vmul.f32 %v4554, %v2719
        %v4591 = vmul.f32 %v4557, %v2719
        %v4592 = vmul.f32 %v4560, %v2719
        %v4593 = vmul.f32 %v4563, %v2719
        %v4594 = vmul.f32 %v4566, %v2719
        %v4595 = vmul.f32 %v4569, %v2719
        %v4596 = vmul.f32 %v4572, %v2719
        %v4597 = vmul.f32 %v4575, %v2719
        %v4598 = vmul.f32 %v4578, %v2719
        %v4599 = vmul.f32 %v4581, %v2719
        %v4600 = vmul.f32 %v4584, %v2719
        %v4601 = vadd.f32 %v4585, 1e-06
        %v4602 = vadd.f32 %v4586, 1e-06
        %v4603 = vadd.f32 %v4587, 1e-06
        %v4604 = vadd.f32 %v4588, 1e-06
        %v4605 = vadd.f32 %v4589, 1e-06
        %v4606 = vadd.f32 %v4590, 1e-06
        %v4607 = vadd.f32 %v4591, 1e-06
        %v4608 = vadd.f32 %v4592, 1e-06
        %v4609 = vadd.f32 %v4593, 1e-06
        %v4610 = vadd.f32 %v4594, 1e-06
        %v4611 = vadd.f32 %v4595, 1e-06
        %v4612 = vadd.f32 %v4596, 1e-06
        %v4613 = vadd.f32 %v4597, 1e-06
        %v4614 = vadd.f32 %v4598, 1e-06
        %v4615 = vadd.f32 %v4599, 1e-06
        %v4616 = vadd.f32 %v4600, 1e-06
        %v4617 = vrsqrt.pop %v4601
        %v4618 = vrsqrt.pop %v4602
        %v4619 = vrsqrt.pop %v4603
        %v4620 = vrsqrt.pop %v4604
        %v4621 = vrsqrt.pop %v4605
        %v4622 = vrsqrt.pop %v4606
        %v4623 = vrsqrt.pop %v4607
        %v4624 = vrsqrt.pop %v4608
        %v4625 = vrsqrt.pop %v4609
        %v4626 = vrsqrt.pop %v4610
        %v4627 = vrsqrt.pop %v4611
        %v4628 = vrsqrt.pop %v4612
        %v4629 = vrsqrt.pop %v4613
        %v4630 = vrsqrt.pop %v4614
        %v4631 = vrsqrt.pop %v4615
        %v4632 = vrsqrt.pop %v4616
        %v4633 = vmul.f32 %v4473, %v4617
        %v4634 = vmul.f32 %v4474, %v4617
        %v4635 = vmul.f32 %v4475, %v4618
        %v4636 = vmul.f32 %v4476, %v4618
        %v4637 = vmul.f32 %v4477, %v4619
        %v4638 = vmul.f32 %v4478, %v4619
        %v4639 = vmul.f32 %v4479, %v4620
        %v4640 = vmul.f32 %v4480, %v4620
        %v4641 = vmul.f32 %v4481, %v4621
        %v4642 = vmul.f32 %v4482, %v4621
        %v4643 = vmul.f32 %v4483, %v4622
        %v4644 = vmul.f32 %v4484, %v4622
        %v4645 = vmul.f32 %v4485, %v4623
        %v4646 = vmul.f32 %v4486, %v4623
        %v4647 = vmul.f32 %v4487, %v4624
        %v4648 = vmul.f32 %v4488, %v4624
        %v4649 = vmul.f32 %v4489, %v4625
        %v4650 = vmul.f32 %v4490, %v4625
        %v4651 = vmul.f32 %v4491, %v4626
        %v4652 = vmul.f32 %v4492, %v4626
        %v4653 = vmul.f32 %v4493, %v4627
        %v4654 = vmul.f32 %v4494, %v4627
        %v4655 = vmul.f32 %v4495, %v4628
        %v4656 = vmul.f32 %v4496, %v4628
        %v4657 = vmul.f32 %v4497, %v4629
        %v4658 = vmul.f32 %v4498, %v4629
        %v4659 = vmul.f32 %v4499, %v4630
        %v4660 = vmul.f32 %v4500, %v4630
        %v4661 = vmul.f32 %v4501, %v4631
        %v4662 = vmul.f32 %v4502, %v4631
        %v4663 = vmul.f32 %v4503, %v4632
        %v4664 = vmul.f32 %v4504, %v4632
        %v4665 = vlaneseq
        %v4666 = vshrl.u32 %v4665, 7
        %v4667 = vsub.s32 4, %v4666
        %v4668 = vrot.slane %v2321, %v4667
        %v4669 = vlaneseq
        %v4670 = vshrl.u32 %v4669, 7
        %v4671 = vsub.s32 4, %v4670
        %v4672 = vrot.slane %v2322, %v4671
        %v4673 = vmul.f32 %v4633, %v4668
        %v4674 = vmul.f32 %v4634, %v4672
        %v4675 = vmul.f32 %v4635, %v4668
        %v4676 = vmul.f32 %v4636, %v4672
        %v4677 = vmul.f32 %v4637, %v4668
        %v4678 = vmul.f32 %v4638, %v4672
        %v4679 = vmul.f32 %v4639, %v4668
        %v4680 = vmul.f32 %v4640, %v4672
        %v4681 = vmul.f32 %v4641, %v4668
        %v4682 = vmul.f32 %v4642, %v4672
        %v4683 = vmul.f32 %v4643, %v4668
        %v4684 = vmul.f32 %v4644, %v4672
        %v4685 = vmul.f32 %v4645, %v4668
        %v4686 = vmul.f32 %v4646, %v4672
        %v4687 = vmul.f32 %v4647, %v4668
        %v4688 = vmul.f32 %v4648, %v4672
        %v4689 = vmul.f32 %v4649, %v4668
        %v4690 = vmul.f32 %v4650, %v4672
        %v4691 = vmul.f32 %v4651, %v4668
        %v4692 = vmul.f32 %v4652, %v4672
        %v4693 = vmul.f32 %v4653, %v4668
        %v4694 = vmul.f32 %v4654, %v4672
        %v4695 = vmul.f32 %v4655, %v4668
        %v4696 = vmul.f32 %v4656, %v4672
        %v4697 = vmul.f32 %v4657, %v4668
        %v4698 = vmul.f32 %v4658, %v4672
        %v4699 = vmul.f32 %v4659, %v4668
        %v4700 = vmul.f32 %v4660, %v4672
        %v4701 = vmul.f32 %v4661, %v4668
        %v4702 = vmul.f32 %v4662, %v4672
        %v4703 = vmul.f32 %v4663, %v4668
        %v4704 = vmul.f32 %v4664, %v4672
        %v4705 = vlaneseq
        %v4706 = vshrl.u32 %v4705, 7
        %v4707 = vsub.s32 5, %v4706
        %v4708 = vrot.slane %v2321, %v4707
        %v4709 = vlaneseq
        %v4710 = vshrl.u32 %v4709, 7
        %v4711 = vsub.s32 5, %v4710
        %v4712 = vrot.slane %v2322, %v4711
        %v4713 = vadd.f32 %v4673, %v4708
        %v4714 = vadd.f32 %v4674, %v4712
        %v4715 = vadd.f32 %v4675, %v4708
        %v4716 = vadd.f32 %v4676, %v4712
        %v4717 = vadd.f32 %v4677, %v4708
        %v4718 = vadd.f32 %v4678, %v4712
        %v4719 = vadd.f32 %v4679, %v4708
        %v4720 = vadd.f32 %v4680, %v4712
        %v4721 = vadd.f32 %v4681, %v4708
        %v4722 = vadd.f32 %v4682, %v4712
        %v4723 = vadd.f32 %v4683, %v4708
        %v4724 = vadd.f32 %v4684, %v4712
        %v4725 = vadd.f32 %v4685, %v4708
        %v4726 = vadd.f32 %v4686, %v4712
        %v4727 = vadd.f32 %v4687, %v4708
        %v4728 = vadd.f32 %v4688, %v4712
        %v4729 = vadd.f32 %v4689, %v4708
        %v4730 = vadd.f32 %v4690, %v4712
        %v4731 = vadd.f32 %v4691, %v4708
        %v4732 = vadd.f32 %v4692, %v4712
        %v4733 = vadd.f32 %v4693, %v4708
        %v4734 = vadd.f32 %v4694, %v4712
        %v4735 = vadd.f32 %v4695, %v4708
        %v4736 = vadd.f32 %v4696, %v4712
        %v4737 = vadd.f32 %v4697, %v4708
        %v4738 = vadd.f32 %v4698, %v4712
        %v4739 = vadd.f32 %v4699, %v4708
        %v4740 = vadd.f32 %v4700, %v4712
        %v4741 = vadd.f32 %v4701, %v4708
        %v4742 = vadd.f32 %v4702, %v4712
        %v4743 = vadd.f32 %v4703, %v4708
        %v4744 = vadd.f32 %v4704, %v4712
        %4745 = vst [vmem:[#allocation2] sm:$0xff] %v4713
        %4746 = vst [vmem:[#allocation2 + $0x8] sm:$0xff] %v4714
        %4747 = vst [vmem:[#allocation2 + $0x10] sm:$0xff] %v4715
        %4748 = vst [vmem:[#allocation2 + $0x18] sm:$0xff] %v4716
        %4749 = vst [vmem:[#allocation2 + $0x20] sm:$0xff] %v4717
        %4750 = vst [vmem:[#allocation2 + $0x28] sm:$0xff] %v4718
        %4751 = vst [vmem:[#allocation2 + $0x30] sm:$0xff] %v4719
        %4752 = vst [vmem:[#allocation2 + $0x38] sm:$0xff] %v4720
        %4753 = vst [vmem:[#allocation2 + $0x40] sm:$0xff] %v4721
        %4754 = vst [vmem:[#allocation2 + $0x48] sm:$0xff] %v4722
        %4755 = vst [vmem:[#allocation2 + $0x50] sm:$0xff] %v4723
        %4756 = vst [vmem:[#allocation2 + $0x58] sm:$0xff] %v4724
        %4757 = vst [vmem:[#allocation2 + $0x60] sm:$0xff] %v4725
        %4758 = vst [vmem:[#allocation2 + $0x68] sm:$0xff] %v4726
        %4759 = vst [vmem:[#allocation2 + $0x70] sm:$0xff] %v4727
        %4760 = vst [vmem:[#allocation2 + $0x78] sm:$0xff] %v4728
        %4761 = vst [vmem:[#allocation2 + $0x80] sm:$0xff] %v4729
        %4762 = vst [vmem:[#allocation2 + $0x88] sm:$0xff] %v4730
        %4763 = vst [vmem:[#allocation2 + $0x90] sm:$0xff] %v4731
        %4764 = vst [vmem:[#allocation2 + $0x98] sm:$0xff] %v4732
        %4765 = vst [vmem:[#allocation2 + $0xa0] sm:$0xff] %v4733
        %4766 = vst [vmem:[#allocation2 + $0xa8] sm:$0xff] %v4734
        %4767 = vst [vmem:[#allocation2 + $0xb0] sm:$0xff] %v4735
        %4768 = vst [vmem:[#allocation2 + $0xb8] sm:$0xff] %v4736
        %4769 = vst [vmem:[#allocation2 + $0xc0] sm:$0xff] %v4737
        %4770 = vst [vmem:[#allocation2 + $0xc8] sm:$0xff] %v4738
        %4771 = vst [vmem:[#allocation2 + $0xd0] sm:$0xff] %v4739
        %4772 = vst [vmem:[#allocation2 + $0xd8] sm:$0xff] %v4740
        %4773 = vst [vmem:[#allocation2 + $0xe0] sm:$0xff] %v4741
        %4774 = vst [vmem:[#allocation2 + $0xe8] sm:$0xff] %v4742
        %4775 = vst [vmem:[#allocation2 + $0xf0] sm:$0xff] %v4743
        %4776 = vst [vmem:[#allocation2 + $0xf8] sm:$0xff] %v4744
        %p4777 = scmp.eq.s32.totalorder %s36, 1
        // Predicated region
        $region85: #{tpu_custom_call.1} parent=55 // pred_check
          %p4778 = pneg %p4777
        $region86: #{tpu_custom_call.1} parent=55 // pred_check_branch
          %4780 = sbr.rel (%p4778) target = $region88
        $region87: #{tpu_custom_call.1} parent=55 // pred_region
          %4781 = vst [vmem:[%s460] sm:$0xff] %v4713
          %4782 = vst [vmem:[%s460 + $0x8] sm:$0xff] %v4714
          %4783 = vst [vmem:[%s460 + $0x10] sm:$0xff] %v4715
          %4784 = vst [vmem:[%s460 + $0x18] sm:$0xff] %v4716
          %4785 = vst [vmem:[%s460 + $0x20] sm:$0xff] %v4717
          %4786 = vst [vmem:[%s460 + $0x28] sm:$0xff] %v4718
          %4787 = vst [vmem:[%s460 + $0x30] sm:$0xff] %v4719
          %4788 = vst [vmem:[%s460 + $0x38] sm:$0xff] %v4720
          %4789 = vst [vmem:[%s460 + $0x40] sm:$0xff] %v4721
          %4790 = vst [vmem:[%s460 + $0x48] sm:$0xff] %v4722
          %4791 = vst [vmem:[%s460 + $0x50] sm:$0xff] %v4723
          %4792 = vst [vmem:[%s460 + $0x58] sm:$0xff] %v4724
          %4793 = vst [vmem:[%s460 + $0x60] sm:$0xff] %v4725
          %4794 = vst [vmem:[%s460 + $0x68] sm:$0xff] %v4726
          %4795 = vst [vmem:[%s460 + $0x70] sm:$0xff] %v4727
          %4796 = vst [vmem:[%s460 + $0x78] sm:$0xff] %v4728
          %4797 = vst [vmem:[%s460 + $0x80] sm:$0xff] %v4729
          %4798 = vst [vmem:[%s460 + $0x88] sm:$0xff] %v4730
          %4799 = vst [vmem:[%s460 + $0x90] sm:$0xff] %v4731
          %4800 = vst [vmem:[%s460 + $0x98] sm:$0xff] %v4732
          %4801 = vst [vmem:[%s460 + $0xa0] sm:$0xff] %v4733
          %4802 = vst [vmem:[%s460 + $0xa8] sm:$0xff] %v4734
          %4803 = vst [vmem:[%s460 + $0xb0] sm:$0xff] %v4735
          %4804 = vst [vmem:[%s460 + $0xb8] sm:$0xff] %v4736
          %4805 = vst [vmem:[%s460 + $0xc0] sm:$0xff] %v4737
          %4806 = vst [vmem:[%s460 + $0xc8] sm:$0xff] %v4738
          %4807 = vst [vmem:[%s460 + $0xd0] sm:$0xff] %v4739
          %4808 = vst [vmem:[%s460 + $0xd8] sm:$0xff] %v4740
          %4809 = vst [vmem:[%s460 + $0xe0] sm:$0xff] %v4741
          %4810 = vst [vmem:[%s460 + $0xe8] sm:$0xff] %v4742
          %4811 = vst [vmem:[%s460 + $0xf0] sm:$0xff] %v4743
          %4812 = vst [vmem:[%s460 + $0xf8] sm:$0xff] %v4744
        $region88: #{tpu_custom_call.1} parent=55 // pred_fallthru
          _
        %s4813 = sand.u32 %s250, 1
        %s4814 = scalar_lea.sflag [#allocation5], %s4813
        %s4815 = sand.u32 %s250, 1
        %s4816 = smul.addr %s4815, 256
        %s4817 = scalar_lea.vmem [#allocation14], %s4816
        // Predicated region
        $region89: #{tpu_custom_call.1} parent=55 // pred_check
          %p4818 = pneg %p260
        $region90: #{tpu_custom_call.1} parent=55 // pred_check_branch
          %4820 = sbr.rel (%p4818) target = $region92
        $region91: #{tpu_custom_call.1} parent=55 // pred_region
          %s4822 = ssub.s32 4096, 4096
          %4823 = vsyncadd %s4814, %s4822
          %s4824 = smul.addr %s35, 32
          %s4825 = smul.addr %s4824, 128
          %s4826 = scalar_lea.hbm %s9, %s4825
          %s4827 = sshll.u32 %s4817, 4
          %s4828 = int_to_ptr.vmem [resolvable:$true] %s4827
          %4833 = dma.vmem_to_hbm [thread:$0]  %s4828, 4096, %s4826, %s4814, 256, 256, 16
        $region92: #{tpu_custom_call.1} parent=55 // pred_fallthru
          _
      $region56: #{tpu_custom_call.1} parent=5 // pred_fallthru
        _
      %p4834 = scmp.le.s32.totalorder 2, %s26
      // Predicated region
      $region93: #{tpu_custom_call.1} parent=5 // pred_check
        %p4835 = pneg %p4834
      $region94: #{tpu_custom_call.1} parent=5 // pred_check_branch
        %4837 = sbr.rel (%p4835) target = $region96
      $region95: #{tpu_custom_call.1} parent=5 // pred_region
        %s4838 = ssub.s32 %s26, 2
        // Predicated region
        $region97: #{tpu_custom_call.1} parent=95 // pred_check
          %p4839 = pneg %p266
        $region98: #{tpu_custom_call.1} parent=95 // pred_check_branch
          %4841 = sbr.rel (%p4839) target = $region100
        $region99: #{tpu_custom_call.1} parent=95 // pred_region
          %s4842 = sand.u32 %s251, 1
          %s4843 = scalar_lea.sflag [#allocation5], %s4842
          %s4844 = sand.u32 %s251, 1
          %s4845 = smul.addr %s4844, 256
          %s4846 = scalar_lea.vmem [#allocation14], %s4845
          %4847 = dma.done %s4843, 4096
        $region100: #{tpu_custom_call.1} parent=95 // pred_fallthru
          _
      $region96: #{tpu_custom_call.1} parent=5 // pred_fallthru
        _
    $region6: #{tpu_custom_call.1} parent=1 // loop_footer
      %s30 = sadd.s32 1, %s26
    $region7: #{tpu_custom_call.1} parent=1 // loop_footer_branch
      %25 = sbr.rel target = $region3
    $region8: #{tpu_custom_call.1} parent=1 // loop_exit
      _
    %4848 = vsyncpa [#allocation4], 1
    %s4849 = scalar_lea.sflag [#allocation4], 1
    %4850 = vsyncpa %s4849, 1
    %4851 = vsyncpa [#allocation7], 1
    %s4852 = scalar_lea.sflag [#allocation7], 1
    %4853 = vsyncpa %s4852, 1
    %4854 = vsyncpa [#allocation10], 1
    %4855 = vsyncpa [#allocation13], 1
    %4856 = vsyncpa [#allocation5], 1
    %s4857 = scalar_lea.sflag [#allocation5], 1
    %4858 = vsyncpa %s4857, 1

</llo_original>
